<compile_context>
chip_gen: v5e
topology: v5e:2x2
jax: 0.10.0
libtpu: 0.0.40
codegen_flags: <defaults>
</compile_context>

<pallas_src>
import functools

import jax
import jax.numpy as jnp
from jax.experimental import pallas as pl
from jax.experimental.pallas import tpu as pltpu

SELU_ALPHA = 1.6732632423543772
SELU_LAMBDA = 1.0507009873554805
BN_EPS = 1e-5

_CP = pltpu.CompilerParams(dimension_semantics=("arbitrary",))


def _spec(shape):
    return pl.BlockSpec(shape, lambda i: (0, 0))


# ----------------------------- Pallas kernels ------------------------------

def _epilogue_act(y, act):
    if act == "relu":
        return jnp.maximum(y, 0.0)
    if act == "selu":
        # clamp exp arg so the unselected branch never produces inf
        return SELU_LAMBDA * jnp.where(
            y > 0, y, SELU_ALPHA * (jnp.exp(jnp.minimum(y, 0.0)) - 1.0))
    if act == "sigmoid":
        return pl.reciprocal(1.0 + jnp.exp(-y), approx=True)
    return y


@functools.lru_cache(maxsize=None)
def _fused_matmul_kernel(act, has_residual):
    """o = act(A @ B + shift) [+ residual]; bf16 operands, f32 accumulation."""
    def kernel(a_ref, b_ref, t_ref, *rest):
        if has_residual:
            r_ref, o_ref = rest
        else:
            (o_ref,) = rest
        y = jnp.dot(a_ref[...], b_ref[...], preferred_element_type=jnp.float32)
        y = _epilogue_act(y + t_ref[...], act)
        if has_residual:
            y = y + r_ref[...]
        o_ref[...] = y
    return kernel


def _pool_conv_kernel(ae_ref, ao_ref, b_ref, t_ref, o_ref):
    """Conv1x1 + MaxPool2d((1,2),(1,2)): two matmuls + pairwise max + bias."""
    ye = jnp.dot(ae_ref[...], b_ref[...], preferred_element_type=jnp.float32)
    yo = jnp.dot(ao_ref[...], b_ref[...], preferred_element_type=jnp.float32)
    o_ref[...] = jnp.maximum(ye, yo) + t_ref[...]


def _convt_gate_kernel(a_ref, b_ref, t_ref, g_ref, y_ref, gated_ref):
    """Merged-column ConvTranspose + fused sigmoid gating (HGlayer)."""
    y = jnp.dot(a_ref[...], b_ref[...], preferred_element_type=jnp.float32)
    y = y + t_ref[...]
    y_ref[...] = y
    sig = pl.reciprocal(1.0 + jnp.exp(-y), approx=True)   # EUP reciprocal
    gated_ref[...] = sig * g_ref[...]


# --------------------------- Pallas call wrappers ---------------------------

def fused_matmul(A, B, shift, act="none", residual=None):
    M, K = A.shape
    Nc = B.shape[1]
    ins = [A.astype(jnp.bfloat16), B.astype(jnp.bfloat16),
           jnp.asarray(shift, jnp.float32).reshape(1, Nc)]
    specs = [_spec((M, K)), _spec((K, Nc)), _spec((1, Nc))]
    if residual is not None:
        ins.append(residual.astype(jnp.float32))
        specs.append(_spec((M, Nc)))
    return pl.pallas_call(
        _fused_matmul_kernel(act, residual is not None),
        out_shape=jax.ShapeDtypeStruct((M, Nc), jnp.float32),
        grid=(1,),
        in_specs=specs,
        out_specs=_spec((M, Nc)),
        compiler_params=_CP,
    )(*ins)


def pallas_pool_conv(ae, ao, B, bias):
    M, C = ae.shape
    Nc = B.shape[1]
    return pl.pallas_call(
        _pool_conv_kernel,
        out_shape=jax.ShapeDtypeStruct((M, Nc), jnp.float32),
        grid=(1,),
        in_specs=[_spec((M, C)), _spec((M, C)), _spec((C, Nc)), _spec((1, Nc))],
        out_specs=_spec((M, Nc)),
        compiler_params=_CP,
    )(ae.astype(jnp.bfloat16), ao.astype(jnp.bfloat16),
      B.astype(jnp.bfloat16), jnp.asarray(bias, jnp.float32).reshape(1, Nc))


def pallas_convt_gate(a, Bm, bias, gate):
    M, K = a.shape
    Nc = Bm.shape[1]
    return pl.pallas_call(
        _convt_gate_kernel,
        out_shape=(jax.ShapeDtypeStruct((M, Nc), jnp.float32),
                   jax.ShapeDtypeStruct((M, Nc), jnp.float32)),
        grid=(1,),
        in_specs=[_spec((M, K)), _spec((K, Nc)), _spec((1, Nc)), _spec((M, Nc))],
        out_specs=[_spec((M, Nc)), _spec((M, Nc))],
        compiler_params=_CP,
    )(a.astype(jnp.bfloat16), Bm.astype(jnp.bfloat16),
      jnp.asarray(bias, jnp.float32).reshape(1, Nc), gate.astype(jnp.float32))


# ----------------------------- JAX-level glue --------------------------------

def bn_affine(bn):
    scale = bn["gamma"] / jnp.sqrt(bn["var"] + BN_EPS)
    shift = bn["beta"] - bn["mean"] * scale
    return scale, shift


def bn_relu(x, bn):
    # pre-activation BN+ReLU prologue: plain jnp so XLA fuses it with the
    # padding / im2col gather that feeds the Pallas matmul input.
    s, t = bn_affine(bn)
    return jnp.maximum(x * s + t, 0.0)


def conv_w_matrix(w):
    # torch (Cout, Cin, Kh, Kw) -> (Kh*Kw*Cin, Cout), row order (kh, kw, ci)
    cout = w.shape[0]
    return jnp.transpose(w, (2, 3, 1, 0)).reshape(-1, cout)


def im2col(x, kh, kw, dh, dw, ph, pw):
    # NHWC, stride 1; returns (N*Ho*Wo, kh*kw*C), column order (kh, kw, c).
    # TODO(synk): im2col is XLA glue (K-times wider patch matrix); in-kernel
    # per-tap accumulation is left out because it needs lane-layout-changing
    # reshapes inside the kernel -- irrelevant at these tiny spatial sizes.
    N, H, W, C = x.shape
    xp = jnp.pad(x, ((0, 0), (ph, ph), (pw, pw), (0, 0)))
    Ho = H + 2 * ph - dh * (kh - 1)
    Wo = W + 2 * pw - dw * (kw - 1)
    taps = [xp[:, i * dh:i * dh + Ho, j * dw:j * dw + Wo, :]
            for i in range(kh) for j in range(kw)]
    A = jnp.concatenate(taps, axis=-1)
    return A.reshape(N * Ho * Wo, kh * kw * C)


# ----------------------------- NN building blocks ---------------------------

def acblock_apply(p, x, dil):
    # conv5x1(bn2+relu(x)) + conv1x3(bn3+relu(x)) -> ONE merged matmul
    N, H, W, C = x.shape
    d = 2 ** dil
    a2 = im2col(bn_relu(x, p["bn2"]), 5, 1, d, 1, 2 * d, 0)
    a3 = im2col(bn_relu(x, p["bn3"]), 1, 3, 1, d, 0, d)
    A = jnp.concatenate([a2, a3], axis=-1)
    B = jnp.concatenate([conv_w_matrix(p["conv2"]["w"]),
                         conv_w_matrix(p["conv3"]["w"])], axis=0)
    cout = p["conv2"]["w"].shape[0]
    out = fused_matmul(A, B, p["conv2"]["b"] + p["conv3"]["b"])
    return out.reshape(N, H, W, cout)


def dense_layer_apply(p, x, dil):
    # conv3x3_nobias(bn3+relu(ac2(ac1(x)))) + BN(conv_skip(x)) -> ONE matmul
    N, H, W, C = x.shape
    growth = p["conv3"]["w"].shape[0]
    y = acblock_apply(p["ac1"], x, dil)
    y = acblock_apply(p["ac2"], y, dil + 1)
    d2 = 2 ** (dil + 1)
    a_main = im2col(bn_relu(y, p["bn3"]), 3, 3, d2, d2, d2, d2)
    a_skip = x.reshape(N * H * W, C)
    s_sk, t_sk = bn_affine(p["skip_bn"])
    B = jnp.concatenate([conv_w_matrix(p["conv3"]["w"]),
                         conv_w_matrix(p["skip_conv"]["w"]) * s_sk], axis=0)
    shift = t_sk + p["skip_conv"]["b"] * s_sk
    # all convs here are shape-preserving -> torch replicate _pad is a no-op
    # TODO(synk): F.dropout(p=drop_rate) omitted (eval-mode identity).
    out = fused_matmul(jnp.concatenate([a_main, a_skip], axis=-1), B, shift)
    return out.reshape(N, H, W, growth)


def dense_block_apply(p, x, num_layers, extra=None):
    # conv1x1(bn+relu(cat)) + BN(conv_skip(x)) [+ extra residual] -> ONE matmul
    N, H, W, C = x.shape
    growth = p["c1_conv"]["w"].shape[0]
    feats = [x]
    h = x
    for i in range(num_layers):
        h = dense_layer_apply(p["layers"][i], h, i)
        feats.append(h)
    cat = jnp.concatenate(feats, axis=-1)
    a_main = bn_relu(cat, p["c1_bn"]).reshape(N * H * W, cat.shape[-1])
    a_skip = x.reshape(N * H * W, C)
    s_sk, t_sk = bn_affine(p["skip_bn"])
    B = jnp.concatenate([conv_w_matrix(p["c1_conv"]["w"]),
                         conv_w_matrix(p["skip_conv"]["w"]) * s_sk], axis=0)
    shift = p["c1_conv"]["b"] + t_sk + p["skip_conv"]["b"] * s_sk
    resid = None if extra is None else extra.reshape(N * H * W, growth)
    out = fused_matmul(jnp.concatenate([a_main, a_skip], axis=-1), B, shift,
                       residual=resid)
    return out.reshape(N, H, W, growth)


def pool_apply(p, x):
    # Conv1x1 + MaxPool2d((1,2),(1,2)) in one Pallas call
    N, H, W, C = x.shape
    cout = p["w"].shape[0]
    ae = x[:, :, 0::2, :].reshape(N * H * (W // 2), C)
    ao = x[:, :, 1::2, :].reshape(N * H * (W // 2), C)
    out = pallas_pool_conv(ae, ao, conv_w_matrix(p["w"]), p["b"])
    return out.reshape(N, H, W // 2, cout)


def conv_transpose_cols(p, s):
    # torch ConvTranspose2d weight (Cin, Cout, 1, s) -> (Cin, s*Cout),
    # column index = k*Cout + co, so output interleaves as w_in*s + k.
    w = p["w"]
    cin, cout = w.shape[0], w.shape[1]
    Bm = jnp.transpose(w[:, :, 0, :], (0, 2, 1)).reshape(cin, s * cout)
    bias = jnp.tile(p["b"], s)
    return Bm, bias, cout


def conv_transpose_up(x, p, s):
    N, H, W, C = x.shape
    Bm, bias, cout = conv_transpose_cols(p, s)
    y = fused_matmul(x.reshape(N * H * W, C), Bm, bias)
    return y.reshape(N, H, W, s, cout).reshape(N, H, W * s, cout)


def hglayer_apply(p, x, x_sup, rate=2):
    Ns, Hs, Ws, Cs = x_sup.shape
    # channel_down1: 1x1 conv + SELU (fused epilogue)
    y1 = fused_matmul(x_sup.reshape(Ns * Hs * Ws, Cs),
                      conv_w_matrix(p["cd1_conv"]["w"]),
                      p["cd1_conv"]["b"], act="selu")
    # ConvTranspose(1,rate) with merged columns + fused sigmoid gating of x
    Bm, bias, cout = conv_transpose_cols(p["up"], rate)
    N, H, Wg, C = x.shape                       # Wg == Ws*rate, C == cout
    gate = x.reshape(N, H, Ws, rate, C).reshape(Ns * Hs * Ws, rate * C)
    y2d, gated2d = pallas_convt_gate(y1, Bm, bias, gate)
    y_sup = y2d.reshape(N, H, Ws, rate, cout).reshape(N, H, Wg, cout)
    x_guid = gated2d.reshape(N, H, Ws, rate, cout).reshape(N, H, Wg, cout)
    cat = jnp.concatenate([x_guid, y_sup], axis=-1)
    out = fused_matmul(cat.reshape(N * H * Wg, 2 * cout),
                       conv_w_matrix(p["cd_conv"]["w"]),
                       p["cd_conv"]["b"], act="selu")
    return out.reshape(N, H, Wg, p["cd_conv"]["w"].shape[0])


def forward(params, x_nchw, kl):
    x = jnp.transpose(x_nchw, (0, 2, 3, 1)).astype(jnp.float32)     # -> NHWC
    x1 = dense_block_apply(params["En1"], x, kl[0][1])
    x_1 = pool_apply(params["pool1"], x1)
    x2 = dense_block_apply(params["En2"], x_1, kl[1][1])
    x_2 = pool_apply(params["pool2"], x2)
    x3 = dense_block_apply(params["En3"], x_2, kl[2][1])
    x_3 = pool_apply(params["pool3"], x3)
    xy_ = dense_block_apply(params["Enter"], x_3, kl[3][1])
    hg1 = hglayer_apply(params["hg1"], x_2, xy_)
    hg2 = hglayer_apply(params["hg2"], x_1, hg1)
    y3 = conv_transpose_up(xy_, params["up3"], 2)
    y_3 = dense_block_apply(params["De3"], y3, kl[-3][1], extra=hg1)  # +Hg1 fused
    y2 = conv_transpose_up(y_3, params["up2"], 2)
    y_2 = dense_block_apply(params["De2"], y2, kl[-2][1], extra=hg2)  # +Hg2 fused
    y1 = conv_transpose_up(y_2, params["up1"], 2)
    y_1 = dense_block_apply(params["De1"], y1, kl[-1][1])
    return jnp.transpose(y_1, (0, 3, 1, 2))                          # -> NCHW


# ------------------------------ Param init ----------------------------------

class KeyGen:
    def __init__(self, seed):
        self._key = jax.random.PRNGKey(seed)
        self._i = 0

    def __call__(self):
        self._i += 1
        return jax.random.fold_in(self._key, self._i)


def init_conv(kg, cin, cout, kh, kw, bias=True):
    fan_in = float(cin * kh * kw)
    w = jax.random.normal(kg(), (cout, cin, kh, kw), jnp.float32) / (fan_in ** 0.5)
    b = 0.01 * jax.random.normal(kg(), (cout,), jnp.float32) if bias else None
    return {"w": w, "b": b}


def init_conv_t(kg, cin, cout, s):
    w = jax.random.normal(kg(), (cin, cout, 1, s), jnp.float32) / (float(cin) ** 0.5)
    b = 0.01 * jax.random.normal(kg(), (cout,), jnp.float32)
    return {"w": w, "b": b}


def init_bn(kg, c):
    return {"gamma": 1.0 + 0.05 * jax.random.normal(kg(), (c,), jnp.float32),
            "beta": 0.05 * jax.random.normal(kg(), (c,), jnp.float32),
            "mean": 0.05 * jax.random.normal(kg(), (c,), jnp.float32),
            "var": 1.0 + 0.05 * jnp.abs(jax.random.normal(kg(), (c,), jnp.float32))}


def init_acblock(kg, cin, cout):
    return {"bn2": init_bn(kg, cin),
            "conv2": init_conv(kg, cin, cout, 5, 1),
            "bn3": init_bn(kg, cin),
            "conv3": init_conv(kg, cin, cout, 1, 3)}


def init_dense_layer(kg, cin, growth):
    return {"ac1": init_acblock(kg, cin, growth),
            "ac2": init_acblock(kg, growth, growth),
            "bn3": init_bn(kg, growth),
            "conv3": init_conv(kg, growth, growth, 3, 3, bias=False),
            "skip_conv": init_conv(kg, cin, growth, 1, 1),
            "skip_bn": init_bn(kg, growth)}


def init_dense_block(kg, num_layers, cin, growth):
    layers = []
    nin = cin
    for _ in range(num_layers):
        layers.append(init_dense_layer(kg, nin, growth))
        nin = growth
    out_ch = cin + num_layers * growth
    return {"layers": layers,
            "c1_bn": init_bn(kg, out_ch),
            "c1_conv": init_conv(kg, out_ch, growth, 1, 1),
            "skip_conv": init_conv(kg, cin, growth, 1, 1),
            "skip_bn": init_bn(kg, growth)}


def init_hglayer(kg, cin, cout, rate):
    return {"cd1_conv": init_conv(kg, cin, cout, 1, 1),
            "up": init_conv_t(kg, 16, 16, rate),   # torch hard-codes 16 channels
            "cd_conv": init_conv(kg, cout * 2, cout, 1, 1)}


def init_model(seed, kl, first_channel=32):
    kg = KeyGen(seed)
    p = {}
    p["En1"] = init_dense_block(kg, kl[0][1], first_channel, kl[0][0])
    p["pool1"] = init_conv(kg, kl[0][0], kl[0][0], 1, 1)
    p["En2"] = init_dense_block(kg, kl[1][1], kl[0][0], kl[1][0])
    p["pool2"] = init_conv(kg, kl[1][0], kl[1][0], 1, 1)
    p["En3"] = init_dense_block(kg, kl[2][1], kl[1][0], kl[2][0])
    p["pool3"] = init_conv(kg, kl[2][0], kl[2][0], 1, 1)
    p["Enter"] = init_dense_block(kg, kl[3][1], kl[2][0], kl[3][0])
    p["up3"] = init_conv_t(kg, kl[3][0], kl[3][0], 2)
    p["De3"] = init_dense_block(kg, kl[-3][1], kl[3][0], kl[-3][0])
    p["up2"] = init_conv_t(kg, kl[-3][0], kl[-3][0], 2)
    p["De2"] = init_dense_block(kg, kl[-2][1], kl[-3][0], kl[-2][0])
    p["up1"] = init_conv_t(kg, kl[-2][0], kl[-2][0], 2)
    p["De1"] = init_dense_block(kg, kl[-1][1], kl[-2][0], kl[-1][0])
    p["hg1"] = init_hglayer(kg, kl[3][0], kl[4][0], 2)
    p["hg2"] = init_hglayer(kg, kl[4][0], kl[5][0], 2)
    return p


# ---------------------------------- main -------------------------------------

if __name__ == "__main__":
    KL = tuple([(16, 2)] * 7)          # (growth_rate, num_layers) per block
    N, C, H, W = 2, 32, 4, 8           # W must be divisible by 8 (3x pool /2)

    params = init_model(0, KL)
    x = jax.random.normal(jax.random.PRNGKey(0), (N, C, H, W), jnp.float32)

    fwd = jax.jit(functools.partial(forward, kl=KL))
    out = jax.block_until_ready(fwd(params, x))

    assert out.shape == (N, KL[-1][0], H, W), out.shape
    assert bool(jnp.all(jnp.isfinite(out)))
    print("KERNEL_OK")
</pallas_src>

<mosaic_0001>
module attributes {stable_mosaic.version = 11 : i64} {
  func.func @kernel(%arg0: i32, %arg1: memref<64x256xbf16, #tpu.memory_space<vmem>>, %arg2: memref<256x16xbf16, #tpu.memory_space<vmem>>, %arg3: memref<1x16xf32, #tpu.memory_space<vmem>>, %arg4: memref<64x16xf32, #tpu.memory_space<vmem>>) attributes {dimension_semantics = [#tpu.dimension_semantics<arbitrary>], iteration_bounds = array<i64: 1>, scalar_prefetch = 0 : i64, scratch_operands = 0 : i64, tpu.core_type = #tpu.core_type<tc>, window_params = [{pipeline_mode = #tpu.pipeline_mode<synchronous>, transform_indices = @transform_0, window_bounds = array<i64: 64, 256>}, {pipeline_mode = #tpu.pipeline_mode<synchronous>, transform_indices = @transform_1, window_bounds = array<i64: 256, 16>}, {pipeline_mode = #tpu.pipeline_mode<synchronous>, transform_indices = @transform_2, window_bounds = array<i64: 1, 16>}, {pipeline_mode = #tpu.pipeline_mode<synchronous>, transform_indices = @transform_3, window_bounds = array<i64: 64, 16>}]} {
    %c0 = arith.constant 0 : index
    %c0_0 = arith.constant 0 : index
    %0 = vector.load %arg1[%c0, %c0_0] : memref<64x256xbf16, #tpu.memory_space<vmem>>, vector<64x256xbf16>
    %c0_1 = arith.constant 0 : index
    %c0_2 = arith.constant 0 : index
    %1 = vector.load %arg2[%c0_1, %c0_2] : memref<256x16xbf16, #tpu.memory_space<vmem>>, vector<256x16xbf16>
    %cst = arith.constant dense<0.000000e+00> : vector<64x16xf32>
    %2 = tpu.matmul %0, %1, %cst {dimension_numbers = #tpu.dot_dimension_numbers<[1], [0], [0], [1], [0, 0, 1, 1], [], []>} : vector<64x256xbf16>, vector<256x16xbf16>, vector<64x16xf32> -> vector<64x16xf32>
    %c0_3 = arith.constant 0 : index
    %c0_4 = arith.constant 0 : index
    %3 = vector.load %arg3[%c0_3, %c0_4] : memref<1x16xf32, #tpu.memory_space<vmem>>, vector<1x16xf32>
    %4 = vector.broadcast %3 : vector<1x16xf32> to vector<64x16xf32>
    %5 = arith.addf %2, %4 : vector<64x16xf32>
    %c0_5 = arith.constant 0 : index
    %c0_6 = arith.constant 0 : index
    %6 = vector.load %arg4[%c0_5, %c0_6] : memref<64x16xf32, #tpu.memory_space<vmem>>, vector<64x16xf32>
    tpu.vector_store %arg4[%c0_5, %c0_6], %5 {strides = array<i32>} : memref<64x16xf32, #tpu.memory_space<vmem>>, vector<64x16xf32>,
    return
  }
  func.func @transform_0(%arg0: i32) -> (i32, i32) {
    %c0_i32 = arith.constant 0 : i32
    %c0_i32_0 = arith.constant 0 : i32
    %c0_i32_1 = arith.constant 0 : i32
    return %c0_i32, %c0_i32_0 : i32, i32
  }
  func.func @transform_1(%arg0: i32) -> (i32, i32) {
    %c0_i32 = arith.constant 0 : i32
    %c0_i32_0 = arith.constant 0 : i32
    %c0_i32_1 = arith.constant 0 : i32
    return %c0_i32, %c0_i32_0 : i32, i32
  }
  func.func @transform_2(%arg0: i32) -> (i32, i32) {
    %c0_i32 = arith.constant 0 : i32
    %c0_i32_0 = arith.constant 0 : i32
    %c0_i32_1 = arith.constant 0 : i32
    return %c0_i32, %c0_i32_0 : i32, i32
  }
  func.func @transform_3(%arg0: i32) -> (i32, i32) {
    %c0_i32 = arith.constant 0 : i32
    %c0_i32_0 = arith.constant 0 : i32
    %c0_i32_1 = arith.constant 0 : i32
    return %c0_i32, %c0_i32_0 : i32, i32
  }
}

module attributes {stable_mosaic.version = 11 : i64} {
  func.func @kernel(%arg0: i32, %arg1: memref<64x128xbf16, #tpu.memory_space<vmem>>, %arg2: memref<128x16xbf16, #tpu.memory_space<vmem>>, %arg3: memref<1x16xf32, #tpu.memory_space<vmem>>, %arg4: memref<64x16xf32, #tpu.memory_space<vmem>>) attributes {dimension_semantics = [#tpu.dimension_semantics<arbitrary>], iteration_bounds = array<i64: 1>, scalar_prefetch = 0 : i64, scratch_operands = 0 : i64, tpu.core_type = #tpu.core_type<tc>, window_params = [{pipeline_mode = #tpu.pipeline_mode<synchronous>, transform_indices = @transform_0, window_bounds = array<i64: 64, 128>}, {pipeline_mode = #tpu.pipeline_mode<synchronous>, transform_indices = @transform_1, window_bounds = array<i64: 128, 16>}, {pipeline_mode = #tpu.pipeline_mode<synchronous>, transform_indices = @transform_2, window_bounds = array<i64: 1, 16>}, {pipeline_mode = #tpu.pipeline_mode<synchronous>, transform_indices = @transform_3, window_bounds = array<i64: 64, 16>}]} {
    %c0 = arith.constant 0 : index
    %c0_0 = arith.constant 0 : index
    %0 = vector.load %arg1[%c0, %c0_0] : memref<64x128xbf16, #tpu.memory_space<vmem>>, vector<64x128xbf16>
    %c0_1 = arith.constant 0 : index
    %c0_2 = arith.constant 0 : index
    %1 = vector.load %arg2[%c0_1, %c0_2] : memref<128x16xbf16, #tpu.memory_space<vmem>>, vector<128x16xbf16>
    %cst = arith.constant dense<0.000000e+00> : vector<64x16xf32>
    %2 = tpu.matmul %0, %1, %cst {dimension_numbers = #tpu.dot_dimension_numbers<[1], [0], [0], [1], [0, 0, 1, 1], [], []>} : vector<64x128xbf16>, vector<128x16xbf16>, vector<64x16xf32> -> vector<64x16xf32>
    %c0_3 = arith.constant 0 : index
    %c0_4 = arith.constant 0 : index
    %3 = vector.load %arg3[%c0_3, %c0_4] : memref<1x16xf32, #tpu.memory_space<vmem>>, vector<1x16xf32>
    %4 = vector.broadcast %3 : vector<1x16xf32> to vector<64x16xf32>
    %5 = arith.addf %2, %4 : vector<64x16xf32>
    %c0_5 = arith.constant 0 : index
    %c0_6 = arith.constant 0 : index
    %6 = vector.load %arg4[%c0_5, %c0_6] : memref<64x16xf32, #tpu.memory_space<vmem>>, vector<64x16xf32>
    tpu.vector_store %arg4[%c0_5, %c0_6], %5 {strides = array<i32>} : memref<64x16xf32, #tpu.memory_space<vmem>>, vector<64x16xf32>,
    return
  }
  func.func @transform_0(%arg0: i32) -> (i32, i32) {
    %c0_i32 = arith.constant 0 : i32
    %c0_i32_0 = arith.constant 0 : i32
    %c0_i32_1 = arith.constant 0 : i32
    return %c0_i32, %c0_i32_0 : i32, i32
  }
  func.func @transform_1(%arg0: i32) -> (i32, i32) {
    %c0_i32 = arith.constant 0 : i32
    %c0_i32_0 = arith.constant 0 : i32
    %c0_i32_1 = arith.constant 0 : i32
    return %c0_i32, %c0_i32_0 : i32, i32
  }
  func.func @transform_2(%arg0: i32) -> (i32, i32) {
    %c0_i32 = arith.constant 0 : i32
    %c0_i32_0 = arith.constant 0 : i32
    %c0_i32_1 = arith.constant 0 : i32
    return %c0_i32, %c0_i32_0 : i32, i32
  }
  func.func @transform_3(%arg0: i32) -> (i32, i32) {
    %c0_i32 = arith.constant 0 : i32
    %c0_i32_0 = arith.constant 0 : i32
    %c0_i32_1 = arith.constant 0 : i32
    return %c0_i32, %c0_i32_0 : i32, i32
  }
}

module attributes {stable_mosaic.version = 11 : i64} {
  func.func @kernel(%arg0: i32, %arg1: memref<64x176xbf16, #tpu.memory_space<vmem>>, %arg2: memref<176x16xbf16, #tpu.memory_space<vmem>>, %arg3: memref<1x16xf32, #tpu.memory_space<vmem>>, %arg4: memref<64x16xf32, #tpu.memory_space<vmem>>) attributes {dimension_semantics = [#tpu.dimension_semantics<arbitrary>], iteration_bounds = array<i64: 1>, scalar_prefetch = 0 : i64, scratch_operands = 0 : i64, tpu.core_type = #tpu.core_type<tc>, window_params = [{pipeline_mode = #tpu.pipeline_mode<synchronous>, transform_indices = @transform_0, window_bounds = array<i64: 64, 176>}, {pipeline_mode = #tpu.pipeline_mode<synchronous>, transform_indices = @transform_1, window_bounds = array<i64: 176, 16>}, {pipeline_mode = #tpu.pipeline_mode<synchronous>, transform_indices = @transform_2, window_bounds = array<i64: 1, 16>}, {pipeline_mode = #tpu.pipeline_mode<synchronous>, transform_indices = @transform_3, window_bounds = array<i64: 64, 16>}]} {
    %c0 = arith.constant 0 : index
    %c0_0 = arith.constant 0 : index
    %0 = vector.load %arg1[%c0, %c0_0] : memref<64x176xbf16, #tpu.memory_space<vmem>>, vector<64x176xbf16>
    %c0_1 = arith.constant 0 : index
    %c0_2 = arith.constant 0 : index
    %1 = vector.load %arg2[%c0_1, %c0_2] : memref<176x16xbf16, #tpu.memory_space<vmem>>, vector<176x16xbf16>
    %cst = arith.constant dense<0.000000e+00> : vector<64x16xf32>
    %2 = tpu.matmul %0, %1, %cst {dimension_numbers = #tpu.dot_dimension_numbers<[1], [0], [0], [1], [0, 0, 1, 1], [], []>} : vector<64x176xbf16>, vector<176x16xbf16>, vector<64x16xf32> -> vector<64x16xf32>
    %c0_3 = arith.constant 0 : index
    %c0_4 = arith.constant 0 : index
    %3 = vector.load %arg3[%c0_3, %c0_4] : memref<1x16xf32, #tpu.memory_space<vmem>>, vector<1x16xf32>
    %4 = vector.broadcast %3 : vector<1x16xf32> to vector<64x16xf32>
    %5 = arith.addf %2, %4 : vector<64x16xf32>
    %c0_5 = arith.constant 0 : index
    %c0_6 = arith.constant 0 : index
    %6 = vector.load %arg4[%c0_5, %c0_6] : memref<64x16xf32, #tpu.memory_space<vmem>>, vector<64x16xf32>
    tpu.vector_store %arg4[%c0_5, %c0_6], %5 {strides = array<i32>} : memref<64x16xf32, #tpu.memory_space<vmem>>, vector<64x16xf32>,
    return
  }
  func.func @transform_0(%arg0: i32) -> (i32, i32) {
    %c0_i32 = arith.constant 0 : i32
    %c0_i32_0 = arith.constant 0 : i32
    %c0_i32_1 = arith.constant 0 : i32
    return %c0_i32, %c0_i32_0 : i32, i32
  }
  func.func @transform_1(%arg0: i32) -> (i32, i32) {
    %c0_i32 = arith.constant 0 : i32
    %c0_i32_0 = arith.constant 0 : i32
    %c0_i32_1 = arith.constant 0 : i32
    return %c0_i32, %c0_i32_0 : i32, i32
  }
  func.func @transform_2(%arg0: i32) -> (i32, i32) {
    %c0_i32 = arith.constant 0 : i32
    %c0_i32_0 = arith.constant 0 : i32
    %c0_i32_1 = arith.constant 0 : i32
    return %c0_i32, %c0_i32_0 : i32, i32
  }
  func.func @transform_3(%arg0: i32) -> (i32, i32) {
    %c0_i32 = arith.constant 0 : i32
    %c0_i32_0 = arith.constant 0 : i32
    %c0_i32_1 = arith.constant 0 : i32
    return %c0_i32, %c0_i32_0 : i32, i32
  }
}

module attributes {stable_mosaic.version = 11 : i64} {
  func.func @kernel(%arg0: i32, %arg1: memref<64x160xbf16, #tpu.memory_space<vmem>>, %arg2: memref<160x16xbf16, #tpu.memory_space<vmem>>, %arg3: memref<1x16xf32, #tpu.memory_space<vmem>>, %arg4: memref<64x16xf32, #tpu.memory_space<vmem>>) attributes {dimension_semantics = [#tpu.dimension_semantics<arbitrary>], iteration_bounds = array<i64: 1>, scalar_prefetch = 0 : i64, scratch_operands = 0 : i64, tpu.core_type = #tpu.core_type<tc>, window_params = [{pipeline_mode = #tpu.pipeline_mode<synchronous>, transform_indices = @transform_0, window_bounds = array<i64: 64, 160>}, {pipeline_mode = #tpu.pipeline_mode<synchronous>, transform_indices = @transform_1, window_bounds = array<i64: 160, 16>}, {pipeline_mode = #tpu.pipeline_mode<synchronous>, transform_indices = @transform_2, window_bounds = array<i64: 1, 16>}, {pipeline_mode = #tpu.pipeline_mode<synchronous>, transform_indices = @transform_3, window_bounds = array<i64: 64, 16>}]} {
    %c0 = arith.constant 0 : index
    %c0_0 = arith.constant 0 : index
    %0 = vector.load %arg1[%c0, %c0_0] : memref<64x160xbf16, #tpu.memory_space<vmem>>, vector<64x160xbf16>
    %c0_1 = arith.constant 0 : index
    %c0_2 = arith.constant 0 : index
    %1 = vector.load %arg2[%c0_1, %c0_2] : memref<160x16xbf16, #tpu.memory_space<vmem>>, vector<160x16xbf16>
    %cst = arith.constant dense<0.000000e+00> : vector<64x16xf32>
    %2 = tpu.matmul %0, %1, %cst {dimension_numbers = #tpu.dot_dimension_numbers<[1], [0], [0], [1], [0, 0, 1, 1], [], []>} : vector<64x160xbf16>, vector<160x16xbf16>, vector<64x16xf32> -> vector<64x16xf32>
    %c0_3 = arith.constant 0 : index
    %c0_4 = arith.constant 0 : index
    %3 = vector.load %arg3[%c0_3, %c0_4] : memref<1x16xf32, #tpu.memory_space<vmem>>, vector<1x16xf32>
    %4 = vector.broadcast %3 : vector<1x16xf32> to vector<64x16xf32>
    %5 = arith.addf %2, %4 : vector<64x16xf32>
    %c0_5 = arith.constant 0 : index
    %c0_6 = arith.constant 0 : index
    %6 = vector.load %arg4[%c0_5, %c0_6] : memref<64x16xf32, #tpu.memory_space<vmem>>, vector<64x16xf32>
    tpu.vector_store %arg4[%c0_5, %c0_6], %5 {strides = array<i32>} : memref<64x16xf32, #tpu.memory_space<vmem>>, vector<64x16xf32>,
    return
  }
  func.func @transform_0(%arg0: i32) -> (i32, i32) {
    %c0_i32 = arith.constant 0 : i32
    %c0_i32_0 = arith.constant 0 : i32
    %c0_i32_1 = arith.constant 0 : i32
    return %c0_i32, %c0_i32_0 : i32, i32
  }
  func.func @transform_1(%arg0: i32) -> (i32, i32) {
    %c0_i32 = arith.constant 0 : i32
    %c0_i32_0 = arith.constant 0 : i32
    %c0_i32_1 = arith.constant 0 : i32
    return %c0_i32, %c0_i32_0 : i32, i32
  }
  func.func @transform_2(%arg0: i32) -> (i32, i32) {
    %c0_i32 = arith.constant 0 : i32
    %c0_i32_0 = arith.constant 0 : i32
    %c0_i32_1 = arith.constant 0 : i32
    return %c0_i32, %c0_i32_0 : i32, i32
  }
  func.func @transform_3(%arg0: i32) -> (i32, i32) {
    %c0_i32 = arith.constant 0 : i32
    %c0_i32_0 = arith.constant 0 : i32
    %c0_i32_1 = arith.constant 0 : i32
    return %c0_i32, %c0_i32_0 : i32, i32
  }
}

module attributes {stable_mosaic.version = 11 : i64} {
  func.func @kernel(%arg0: i32, %arg1: memref<64x96xbf16, #tpu.memory_space<vmem>>, %arg2: memref<96x16xbf16, #tpu.memory_space<vmem>>, %arg3: memref<1x16xf32, #tpu.memory_space<vmem>>, %arg4: memref<64x16xf32, #tpu.memory_space<vmem>>) attributes {dimension_semantics = [#tpu.dimension_semantics<arbitrary>], iteration_bounds = array<i64: 1>, scalar_prefetch = 0 : i64, scratch_operands = 0 : i64, tpu.core_type = #tpu.core_type<tc>, window_params = [{pipeline_mode = #tpu.pipeline_mode<synchronous>, transform_indices = @transform_0, window_bounds = array<i64: 64, 96>}, {pipeline_mode = #tpu.pipeline_mode<synchronous>, transform_indices = @transform_1, window_bounds = array<i64: 96, 16>}, {pipeline_mode = #tpu.pipeline_mode<synchronous>, transform_indices = @transform_2, window_bounds = array<i64: 1, 16>}, {pipeline_mode = #tpu.pipeline_mode<synchronous>, transform_indices = @transform_3, window_bounds = array<i64: 64, 16>}]} {
    %c0 = arith.constant 0 : index
    %c0_0 = arith.constant 0 : index
    %0 = vector.load %arg1[%c0, %c0_0] : memref<64x96xbf16, #tpu.memory_space<vmem>>, vector<64x96xbf16>
    %c0_1 = arith.constant 0 : index
    %c0_2 = arith.constant 0 : index
    %1 = vector.load %arg2[%c0_1, %c0_2] : memref<96x16xbf16, #tpu.memory_space<vmem>>, vector<96x16xbf16>
    %cst = arith.constant dense<0.000000e+00> : vector<64x16xf32>
    %2 = tpu.matmul %0, %1, %cst {dimension_numbers = #tpu.dot_dimension_numbers<[1], [0], [0], [1], [0, 0, 1, 1], [], []>} : vector<64x96xbf16>, vector<96x16xbf16>, vector<64x16xf32> -> vector<64x16xf32>
    %c0_3 = arith.constant 0 : index
    %c0_4 = arith.constant 0 : index
    %3 = vector.load %arg3[%c0_3, %c0_4] : memref<1x16xf32, #tpu.memory_space<vmem>>, vector<1x16xf32>
    %4 = vector.broadcast %3 : vector<1x16xf32> to vector<64x16xf32>
    %5 = arith.addf %2, %4 : vector<64x16xf32>
    %c0_5 = arith.constant 0 : index
    %c0_6 = arith.constant 0 : index
    %6 = vector.load %arg4[%c0_5, %c0_6] : memref<64x16xf32, #tpu.memory_space<vmem>>, vector<64x16xf32>
    tpu.vector_store %arg4[%c0_5, %c0_6], %5 {strides = array<i32>} : memref<64x16xf32, #tpu.memory_space<vmem>>, vector<64x16xf32>,
    return
  }
  func.func @transform_0(%arg0: i32) -> (i32, i32) {
    %c0_i32 = arith.constant 0 : i32
    %c0_i32_0 = arith.constant 0 : i32
    %c0_i32_1 = arith.constant 0 : i32
    return %c0_i32, %c0_i32_0 : i32, i32
  }
  func.func @transform_1(%arg0: i32) -> (i32, i32) {
    %c0_i32 = arith.constant 0 : i32
    %c0_i32_0 = arith.constant 0 : i32
    %c0_i32_1 = arith.constant 0 : i32
    return %c0_i32, %c0_i32_0 : i32, i32
  }
  func.func @transform_2(%arg0: i32) -> (i32, i32) {
    %c0_i32 = arith.constant 0 : i32
    %c0_i32_0 = arith.constant 0 : i32
    %c0_i32_1 = arith.constant 0 : i32
    return %c0_i32, %c0_i32_0 : i32, i32
  }
  func.func @transform_3(%arg0: i32) -> (i32, i32) {
    %c0_i32 = arith.constant 0 : i32
    %c0_i32_0 = arith.constant 0 : i32
    %c0_i32_1 = arith.constant 0 : i32
    return %c0_i32, %c0_i32_0 : i32, i32
  }
}

module attributes {stable_mosaic.version = 11 : i64} {
  func.func @_pool_conv_kernel(%arg0: i32, %arg1: memref<32x16xbf16, #tpu.memory_space<vmem>>, %arg2: memref<32x16xbf16, #tpu.memory_space<vmem>>, %arg3: memref<16x16xbf16, #tpu.memory_space<vmem>>, %arg4: memref<1x16xf32, #tpu.memory_space<vmem>>, %arg5: memref<32x16xf32, #tpu.memory_space<vmem>>) attributes {dimension_semantics = [#tpu.dimension_semantics<arbitrary>], iteration_bounds = array<i64: 1>, scalar_prefetch = 0 : i64, scratch_operands = 0 : i64, tpu.core_type = #tpu.core_type<tc>, window_params = [{pipeline_mode = #tpu.pipeline_mode<synchronous>, transform_indices = @transform_0, window_bounds = array<i64: 32, 16>}, {pipeline_mode = #tpu.pipeline_mode<synchronous>, transform_indices = @transform_1, window_bounds = array<i64: 32, 16>}, {pipeline_mode = #tpu.pipeline_mode<synchronous>, transform_indices = @transform_2, window_bounds = array<i64: 16, 16>}, {pipeline_mode = #tpu.pipeline_mode<synchronous>, transform_indices = @transform_3, window_bounds = array<i64: 1, 16>}, {pipeline_mode = #tpu.pipeline_mode<synchronous>, transform_indices = @transform_4, window_bounds = array<i64: 32, 16>}]} {
    %c0 = arith.constant 0 : index
    %c0_0 = arith.constant 0 : index
    %0 = vector.load %arg1[%c0, %c0_0] : memref<32x16xbf16, #tpu.memory_space<vmem>>, vector<32x16xbf16>
    %c0_1 = arith.constant 0 : index
    %c0_2 = arith.constant 0 : index
    %1 = vector.load %arg3[%c0_1, %c0_2] : memref<16x16xbf16, #tpu.memory_space<vmem>>, vector<16x16xbf16>
    %cst = arith.constant dense<0.000000e+00> : vector<32x16xf32>
    %2 = tpu.matmul %0, %1, %cst {dimension_numbers = #tpu.dot_dimension_numbers<[1], [0], [0], [1], [0, 0, 1, 1], [], []>} : vector<32x16xbf16>, vector<16x16xbf16>, vector<32x16xf32> -> vector<32x16xf32>
    %c0_3 = arith.constant 0 : index
    %c0_4 = arith.constant 0 : index
    %3 = vector.load %arg2[%c0_3, %c0_4] : memref<32x16xbf16, #tpu.memory_space<vmem>>, vector<32x16xbf16>
    %c0_5 = arith.constant 0 : index
    %c0_6 = arith.constant 0 : index
    %4 = vector.load %arg3[%c0_5, %c0_6] : memref<16x16xbf16, #tpu.memory_space<vmem>>, vector<16x16xbf16>
    %cst_7 = arith.constant dense<0.000000e+00> : vector<32x16xf32>
    %5 = tpu.matmul %3, %4, %cst_7 {dimension_numbers = #tpu.dot_dimension_numbers<[1], [0], [0], [1], [0, 0, 1, 1], [], []>} : vector<32x16xbf16>, vector<16x16xbf16>, vector<32x16xf32> -> vector<32x16xf32>
    %6 = arith.maximumf %2, %5 : vector<32x16xf32>
    %c0_8 = arith.constant 0 : index
    %c0_9 = arith.constant 0 : index
    %7 = vector.load %arg4[%c0_8, %c0_9] : memref<1x16xf32, #tpu.memory_space<vmem>>, vector<1x16xf32>
    %8 = vector.broadcast %7 : vector<1x16xf32> to vector<32x16xf32>
    %9 = arith.addf %6, %8 : vector<32x16xf32>
    %c0_10 = arith.constant 0 : index
    %c0_11 = arith.constant 0 : index
    %10 = vector.load %arg5[%c0_10, %c0_11] : memref<32x16xf32, #tpu.memory_space<vmem>>, vector<32x16xf32>
    tpu.vector_store %arg5[%c0_10, %c0_11], %9 {strides = array<i32>} : memref<32x16xf32, #tpu.memory_space<vmem>>, vector<32x16xf32>,
    return
  }
  func.func @transform_0(%arg0: i32) -> (i32, i32) {
    %c0_i32 = arith.constant 0 : i32
    %c0_i32_0 = arith.constant 0 : i32
    %c0_i32_1 = arith.constant 0 : i32
    return %c0_i32, %c0_i32_0 : i32, i32
  }
  func.func @transform_1(%arg0: i32) -> (i32, i32) {
    %c0_i32 = arith.constant 0 : i32
    %c0_i32_0 = arith.constant 0 : i32
    %c0_i32_1 = arith.constant 0 : i32
    return %c0_i32, %c0_i32_0 : i32, i32
  }
  func.func @transform_2(%arg0: i32) -> (i32, i32) {
    %c0_i32 = arith.constant 0 : i32
    %c0_i32_0 = arith.constant 0 : i32
    %c0_i32_1 = arith.constant 0 : i32
    return %c0_i32, %c0_i32_0 : i32, i32
  }
  func.func @transform_3(%arg0: i32) -> (i32, i32) {
    %c0_i32 = arith.constant 0 : i32
    %c0_i32_0 = arith.constant 0 : i32
    %c0_i32_1 = arith.constant 0 : i32
    return %c0_i32, %c0_i32_0 : i32, i32
  }
  func.func @transform_4(%arg0: i32) -> (i32, i32) {
    %c0_i32 = arith.constant 0 : i32
    %c0_i32_0 = arith.constant 0 : i32
    %c0_i32_1 = arith.constant 0 : i32
    return %c0_i32, %c0_i32_0 : i32, i32
  }
}

module attributes {stable_mosaic.version = 11 : i64} {
  func.func @kernel(%arg0: i32, %arg1: memref<32x128xbf16, #tpu.memory_space<vmem>>, %arg2: memref<128x16xbf16, #tpu.memory_space<vmem>>, %arg3: memref<1x16xf32, #tpu.memory_space<vmem>>, %arg4: memref<32x16xf32, #tpu.memory_space<vmem>>) attributes {dimension_semantics = [#tpu.dimension_semantics<arbitrary>], iteration_bounds = array<i64: 1>, scalar_prefetch = 0 : i64, scratch_operands = 0 : i64, tpu.core_type = #tpu.core_type<tc>, window_params = [{pipeline_mode = #tpu.pipeline_mode<synchronous>, transform_indices = @transform_0, window_bounds = array<i64: 32, 128>}, {pipeline_mode = #tpu.pipeline_mode<synchronous>, transform_indices = @transform_1, window_bounds = array<i64: 128, 16>}, {pipeline_mode = #tpu.pipeline_mode<synchronous>, transform_indices = @transform_2, window_bounds = array<i64: 1, 16>}, {pipeline_mode = #tpu.pipeline_mode<synchronous>, transform_indices = @transform_3, window_bounds = array<i64: 32, 16>}]} {
    %c0 = arith.constant 0 : index
    %c0_0 = arith.constant 0 : index
    %0 = vector.load %arg1[%c0, %c0_0] : memref<32x128xbf16, #tpu.memory_space<vmem>>, vector<32x128xbf16>
    %c0_1 = arith.constant 0 : index
    %c0_2 = arith.constant 0 : index
    %1 = vector.load %arg2[%c0_1, %c0_2] : memref<128x16xbf16, #tpu.memory_space<vmem>>, vector<128x16xbf16>
    %cst = arith.constant dense<0.000000e+00> : vector<32x16xf32>
    %2 = tpu.matmul %0, %1, %cst {dimension_numbers = #tpu.dot_dimension_numbers<[1], [0], [0], [1], [0, 0, 1, 1], [], []>} : vector<32x128xbf16>, vector<128x16xbf16>, vector<32x16xf32> -> vector<32x16xf32>
    %c0_3 = arith.constant 0 : index
    %c0_4 = arith.constant 0 : index
    %3 = vector.load %arg3[%c0_3, %c0_4] : memref<1x16xf32, #tpu.memory_space<vmem>>, vector<1x16xf32>
    %4 = vector.broadcast %3 : vector<1x16xf32> to vector<32x16xf32>
    %5 = arith.addf %2, %4 : vector<32x16xf32>
    %c0_5 = arith.constant 0 : index
    %c0_6 = arith.constant 0 : index
    %6 = vector.load %arg4[%c0_5, %c0_6] : memref<32x16xf32, #tpu.memory_space<vmem>>, vector<32x16xf32>
    tpu.vector_store %arg4[%c0_5, %c0_6], %5 {strides = array<i32>} : memref<32x16xf32, #tpu.memory_space<vmem>>, vector<32x16xf32>,
    return
  }
  func.func @transform_0(%arg0: i32) -> (i32, i32) {
    %c0_i32 = arith.constant 0 : i32
    %c0_i32_0 = arith.constant 0 : i32
    %c0_i32_1 = arith.constant 0 : i32
    return %c0_i32, %c0_i32_0 : i32, i32
  }
  func.func @transform_1(%arg0: i32) -> (i32, i32) {
    %c0_i32 = arith.constant 0 : i32
    %c0_i32_0 = arith.constant 0 : i32
    %c0_i32_1 = arith.constant 0 : i32
    return %c0_i32, %c0_i32_0 : i32, i32
  }
  func.func @transform_2(%arg0: i32) -> (i32, i32) {
    %c0_i32 = arith.constant 0 : i32
    %c0_i32_0 = arith.constant 0 : i32
    %c0_i32_1 = arith.constant 0 : i32
    return %c0_i32, %c0_i32_0 : i32, i32
  }
  func.func @transform_3(%arg0: i32) -> (i32, i32) {
    %c0_i32 = arith.constant 0 : i32
    %c0_i32_0 = arith.constant 0 : i32
    %c0_i32_1 = arith.constant 0 : i32
    return %c0_i32, %c0_i32_0 : i32, i32
  }
}

module attributes {stable_mosaic.version = 11 : i64} {
  func.func @kernel(%arg0: i32, %arg1: memref<32x160xbf16, #tpu.memory_space<vmem>>, %arg2: memref<160x16xbf16, #tpu.memory_space<vmem>>, %arg3: memref<1x16xf32, #tpu.memory_space<vmem>>, %arg4: memref<32x16xf32, #tpu.memory_space<vmem>>) attributes {dimension_semantics = [#tpu.dimension_semantics<arbitrary>], iteration_bounds = array<i64: 1>, scalar_prefetch = 0 : i64, scratch_operands = 0 : i64, tpu.core_type = #tpu.core_type<tc>, window_params = [{pipeline_mode = #tpu.pipeline_mode<synchronous>, transform_indices = @transform_0, window_bounds = array<i64: 32, 160>}, {pipeline_mode = #tpu.pipeline_mode<synchronous>, transform_indices = @transform_1, window_bounds = array<i64: 160, 16>}, {pipeline_mode = #tpu.pipeline_mode<synchronous>, transform_indices = @transform_2, window_bounds = array<i64: 1, 16>}, {pipeline_mode = #tpu.pipeline_mode<synchronous>, transform_indices = @transform_3, window_bounds = array<i64: 32, 16>}]} {
    %c0 = arith.constant 0 : index
    %c0_0 = arith.constant 0 : index
    %0 = vector.load %arg1[%c0, %c0_0] : memref<32x160xbf16, #tpu.memory_space<vmem>>, vector<32x160xbf16>
    %c0_1 = arith.constant 0 : index
    %c0_2 = arith.constant 0 : index
    %1 = vector.load %arg2[%c0_1, %c0_2] : memref<160x16xbf16, #tpu.memory_space<vmem>>, vector<160x16xbf16>
    %cst = arith.constant dense<0.000000e+00> : vector<32x16xf32>
    %2 = tpu.matmul %0, %1, %cst {dimension_numbers = #tpu.dot_dimension_numbers<[1], [0], [0], [1], [0, 0, 1, 1], [], []>} : vector<32x160xbf16>, vector<160x16xbf16>, vector<32x16xf32> -> vector<32x16xf32>
    %c0_3 = arith.constant 0 : index
    %c0_4 = arith.constant 0 : index
    %3 = vector.load %arg3[%c0_3, %c0_4] : memref<1x16xf32, #tpu.memory_space<vmem>>, vector<1x16xf32>
    %4 = vector.broadcast %3 : vector<1x16xf32> to vector<32x16xf32>
    %5 = arith.addf %2, %4 : vector<32x16xf32>
    %c0_5 = arith.constant 0 : index
    %c0_6 = arith.constant 0 : index
    %6 = vector.load %arg4[%c0_5, %c0_6] : memref<32x16xf32, #tpu.memory_space<vmem>>, vector<32x16xf32>
    tpu.vector_store %arg4[%c0_5, %c0_6], %5 {strides = array<i32>} : memref<32x16xf32, #tpu.memory_space<vmem>>, vector<32x16xf32>,
    return
  }
  func.func @transform_0(%arg0: i32) -> (i32, i32) {
    %c0_i32 = arith.constant 0 : i32
    %c0_i32_0 = arith.constant 0 : i32
    %c0_i32_1 = arith.constant 0 : i32
    return %c0_i32, %c0_i32_0 : i32, i32
  }
  func.func @transform_1(%arg0: i32) -> (i32, i32) {
    %c0_i32 = arith.constant 0 : i32
    %c0_i32_0 = arith.constant 0 : i32
    %c0_i32_1 = arith.constant 0 : i32
    return %c0_i32, %c0_i32_0 : i32, i32
  }
  func.func @transform_2(%arg0: i32) -> (i32, i32) {
    %c0_i32 = arith.constant 0 : i32
    %c0_i32_0 = arith.constant 0 : i32
    %c0_i32_1 = arith.constant 0 : i32
    return %c0_i32, %c0_i32_0 : i32, i32
  }
  func.func @transform_3(%arg0: i32) -> (i32, i32) {
    %c0_i32 = arith.constant 0 : i32
    %c0_i32_0 = arith.constant 0 : i32
    %c0_i32_1 = arith.constant 0 : i32
    return %c0_i32, %c0_i32_0 : i32, i32
  }
}

module attributes {stable_mosaic.version = 11 : i64} {
  func.func @kernel(%arg0: i32, %arg1: memref<32x64xbf16, #tpu.memory_space<vmem>>, %arg2: memref<64x16xbf16, #tpu.memory_space<vmem>>, %arg3: memref<1x16xf32, #tpu.memory_space<vmem>>, %arg4: memref<32x16xf32, #tpu.memory_space<vmem>>) attributes {dimension_semantics = [#tpu.dimension_semantics<arbitrary>], iteration_bounds = array<i64: 1>, scalar_prefetch = 0 : i64, scratch_operands = 0 : i64, tpu.core_type = #tpu.core_type<tc>, window_params = [{pipeline_mode = #tpu.pipeline_mode<synchronous>, transform_indices = @transform_0, window_bounds = array<i64: 32, 64>}, {pipeline_mode = #tpu.pipeline_mode<synchronous>, transform_indices = @transform_1, window_bounds = array<i64: 64, 16>}, {pipeline_mode = #tpu.pipeline_mode<synchronous>, transform_indices = @transform_2, window_bounds = array<i64: 1, 16>}, {pipeline_mode = #tpu.pipeline_mode<synchronous>, transform_indices = @transform_3, window_bounds = array<i64: 32, 16>}]} {
    %c0 = arith.constant 0 : index
    %c0_0 = arith.constant 0 : index
    %0 = vector.load %arg1[%c0, %c0_0] : memref<32x64xbf16, #tpu.memory_space<vmem>>, vector<32x64xbf16>
    %c0_1 = arith.constant 0 : index
    %c0_2 = arith.constant 0 : index
    %1 = vector.load %arg2[%c0_1, %c0_2] : memref<64x16xbf16, #tpu.memory_space<vmem>>, vector<64x16xbf16>
    %cst = arith.constant dense<0.000000e+00> : vector<32x16xf32>
    %2 = tpu.matmul %0, %1, %cst {dimension_numbers = #tpu.dot_dimension_numbers<[1], [0], [0], [1], [0, 0, 1, 1], [], []>} : vector<32x64xbf16>, vector<64x16xbf16>, vector<32x16xf32> -> vector<32x16xf32>
    %c0_3 = arith.constant 0 : index
    %c0_4 = arith.constant 0 : index
    %3 = vector.load %arg3[%c0_3, %c0_4] : memref<1x16xf32, #tpu.memory_space<vmem>>, vector<1x16xf32>
    %4 = vector.broadcast %3 : vector<1x16xf32> to vector<32x16xf32>
    %5 = arith.addf %2, %4 : vector<32x16xf32>
    %c0_5 = arith.constant 0 : index
    %c0_6 = arith.constant 0 : index
    %6 = vector.load %arg4[%c0_5, %c0_6] : memref<32x16xf32, #tpu.memory_space<vmem>>, vector<32x16xf32>
    tpu.vector_store %arg4[%c0_5, %c0_6], %5 {strides = array<i32>} : memref<32x16xf32, #tpu.memory_space<vmem>>, vector<32x16xf32>,
    return
  }
  func.func @transform_0(%arg0: i32) -> (i32, i32) {
    %c0_i32 = arith.constant 0 : i32
    %c0_i32_0 = arith.constant 0 : i32
    %c0_i32_1 = arith.constant 0 : i32
    return %c0_i32, %c0_i32_0 : i32, i32
  }
  func.func @transform_1(%arg0: i32) -> (i32, i32) {
    %c0_i32 = arith.constant 0 : i32
    %c0_i32_0 = arith.constant 0 : i32
    %c0_i32_1 = arith.constant 0 : i32
    return %c0_i32, %c0_i32_0 : i32, i32
  }
  func.func @transform_2(%arg0: i32) -> (i32, i32) {
    %c0_i32 = arith.constant 0 : i32
    %c0_i32_0 = arith.constant 0 : i32
    %c0_i32_1 = arith.constant 0 : i32
    return %c0_i32, %c0_i32_0 : i32, i32
  }
  func.func @transform_3(%arg0: i32) -> (i32, i32) {
    %c0_i32 = arith.constant 0 : i32
    %c0_i32_0 = arith.constant 0 : i32
    %c0_i32_1 = arith.constant 0 : i32
    return %c0_i32, %c0_i32_0 : i32, i32
  }
}

module attributes {stable_mosaic.version = 11 : i64} {
  func.func @_pool_conv_kernel(%arg0: i32, %arg1: memref<16x16xbf16, #tpu.memory_space<vmem>>, %arg2: memref<16x16xbf16, #tpu.memory_space<vmem>>, %arg3: memref<16x16xbf16, #tpu.memory_space<vmem>>, %arg4: memref<1x16xf32, #tpu.memory_space<vmem>>, %arg5: memref<16x16xf32, #tpu.memory_space<vmem>>) attributes {dimension_semantics = [#tpu.dimension_semantics<arbitrary>], iteration_bounds = array<i64: 1>, scalar_prefetch = 0 : i64, scratch_operands = 0 : i64, tpu.core_type = #tpu.core_type<tc>, window_params = [{pipeline_mode = #tpu.pipeline_mode<synchronous>, transform_indices = @transform_0, window_bounds = array<i64: 16, 16>}, {pipeline_mode = #tpu.pipeline_mode<synchronous>, transform_indices = @transform_1, window_bounds = array<i64: 16, 16>}, {pipeline_mode = #tpu.pipeline_mode<synchronous>, transform_indices = @transform_2, window_bounds = array<i64: 16, 16>}, {pipeline_mode = #tpu.pipeline_mode<synchronous>, transform_indices = @transform_3, window_bounds = array<i64: 1, 16>}, {pipeline_mode = #tpu.pipeline_mode<synchronous>, transform_indices = @transform_4, window_bounds = array<i64: 16, 16>}]} {
    %c0 = arith.constant 0 : index
    %c0_0 = arith.constant 0 : index
    %0 = vector.load %arg1[%c0, %c0_0] : memref<16x16xbf16, #tpu.memory_space<vmem>>, vector<16x16xbf16>
    %c0_1 = arith.constant 0 : index
    %c0_2 = arith.constant 0 : index
    %1 = vector.load %arg3[%c0_1, %c0_2] : memref<16x16xbf16, #tpu.memory_space<vmem>>, vector<16x16xbf16>
    %cst = arith.constant dense<0.000000e+00> : vector<16x16xf32>
    %2 = tpu.matmul %0, %1, %cst {dimension_numbers = #tpu.dot_dimension_numbers<[1], [0], [0], [1], [0, 0, 1, 1], [], []>} : vector<16x16xbf16>, vector<16x16xbf16>, vector<16x16xf32> -> vector<16x16xf32>
    %c0_3 = arith.constant 0 : index
    %c0_4 = arith.constant 0 : index
    %3 = vector.load %arg2[%c0_3, %c0_4] : memref<16x16xbf16, #tpu.memory_space<vmem>>, vector<16x16xbf16>
    %c0_5 = arith.constant 0 : index
    %c0_6 = arith.constant 0 : index
    %4 = vector.load %arg3[%c0_5, %c0_6] : memref<16x16xbf16, #tpu.memory_space<vmem>>, vector<16x16xbf16>
    %cst_7 = arith.constant dense<0.000000e+00> : vector<16x16xf32>
    %5 = tpu.matmul %3, %4, %cst_7 {dimension_numbers = #tpu.dot_dimension_numbers<[1], [0], [0], [1], [0, 0, 1, 1], [], []>} : vector<16x16xbf16>, vector<16x16xbf16>, vector<16x16xf32> -> vector<16x16xf32>
    %6 = arith.maximumf %2, %5 : vector<16x16xf32>
    %c0_8 = arith.constant 0 : index
    %c0_9 = arith.constant 0 : index
    %7 = vector.load %arg4[%c0_8, %c0_9] : memref<1x16xf32, #tpu.memory_space<vmem>>, vector<1x16xf32>
    %8 = vector.broadcast %7 : vector<1x16xf32> to vector<16x16xf32>
    %9 = arith.addf %6, %8 : vector<16x16xf32>
    %c0_10 = arith.constant 0 : index
    %c0_11 = arith.constant 0 : index
    %10 = vector.load %arg5[%c0_10, %c0_11] : memref<16x16xf32, #tpu.memory_space<vmem>>, vector<16x16xf32>
    tpu.vector_store %arg5[%c0_10, %c0_11], %9 {strides = array<i32>} : memref<16x16xf32, #tpu.memory_space<vmem>>, vector<16x16xf32>,
    return
  }
  func.func @transform_0(%arg0: i32) -> (i32, i32) {
    %c0_i32 = arith.constant 0 : i32
    %c0_i32_0 = arith.constant 0 : i32
    %c0_i32_1 = arith.constant 0 : i32
    return %c0_i32, %c0_i32_0 : i32, i32
  }
  func.func @transform_1(%arg0: i32) -> (i32, i32) {
    %c0_i32 = arith.constant 0 : i32
    %c0_i32_0 = arith.constant 0 : i32
    %c0_i32_1 = arith.constant 0 : i32
    return %c0_i32, %c0_i32_0 : i32, i32
  }
  func.func @transform_2(%arg0: i32) -> (i32, i32) {
    %c0_i32 = arith.constant 0 : i32
    %c0_i32_0 = arith.constant 0 : i32
    %c0_i32_1 = arith.constant 0 : i32
    return %c0_i32, %c0_i32_0 : i32, i32
  }
  func.func @transform_3(%arg0: i32) -> (i32, i32) {
    %c0_i32 = arith.constant 0 : i32
    %c0_i32_0 = arith.constant 0 : i32
    %c0_i32_1 = arith.constant 0 : i32
    return %c0_i32, %c0_i32_0 : i32, i32
  }
  func.func @transform_4(%arg0: i32) -> (i32, i32) {
    %c0_i32 = arith.constant 0 : i32
    %c0_i32_0 = arith.constant 0 : i32
    %c0_i32_1 = arith.constant 0 : i32
    return %c0_i32, %c0_i32_0 : i32, i32
  }
}

module attributes {stable_mosaic.version = 11 : i64} {
  func.func @kernel(%arg0: i32, %arg1: memref<16x128xbf16, #tpu.memory_space<vmem>>, %arg2: memref<128x16xbf16, #tpu.memory_space<vmem>>, %arg3: memref<1x16xf32, #tpu.memory_space<vmem>>, %arg4: memref<16x16xf32, #tpu.memory_space<vmem>>) attributes {dimension_semantics = [#tpu.dimension_semantics<arbitrary>], iteration_bounds = array<i64: 1>, scalar_prefetch = 0 : i64, scratch_operands = 0 : i64, tpu.core_type = #tpu.core_type<tc>, window_params = [{pipeline_mode = #tpu.pipeline_mode<synchronous>, transform_indices = @transform_0, window_bounds = array<i64: 16, 128>}, {pipeline_mode = #tpu.pipeline_mode<synchronous>, transform_indices = @transform_1, window_bounds = array<i64: 128, 16>}, {pipeline_mode = #tpu.pipeline_mode<synchronous>, transform_indices = @transform_2, window_bounds = array<i64: 1, 16>}, {pipeline_mode = #tpu.pipeline_mode<synchronous>, transform_indices = @transform_3, window_bounds = array<i64: 16, 16>}]} {
    %c0 = arith.constant 0 : index
    %c0_0 = arith.constant 0 : index
    %0 = vector.load %arg1[%c0, %c0_0] : memref<16x128xbf16, #tpu.memory_space<vmem>>, vector<16x128xbf16>
    %c0_1 = arith.constant 0 : index
    %c0_2 = arith.constant 0 : index
    %1 = vector.load %arg2[%c0_1, %c0_2] : memref<128x16xbf16, #tpu.memory_space<vmem>>, vector<128x16xbf16>
    %cst = arith.constant dense<0.000000e+00> : vector<16x16xf32>
    %2 = tpu.matmul %0, %1, %cst {dimension_numbers = #tpu.dot_dimension_numbers<[1], [0], [0], [1], [0, 0, 1, 1], [], []>} : vector<16x128xbf16>, vector<128x16xbf16>, vector<16x16xf32> -> vector<16x16xf32>
    %c0_3 = arith.constant 0 : index
    %c0_4 = arith.constant 0 : index
    %3 = vector.load %arg3[%c0_3, %c0_4] : memref<1x16xf32, #tpu.memory_space<vmem>>, vector<1x16xf32>
    %4 = vector.broadcast %3 : vector<1x16xf32> to vector<16x16xf32>
    %5 = arith.addf %2, %4 : vector<16x16xf32>
    %c0_5 = arith.constant 0 : index
    %c0_6 = arith.constant 0 : index
    %6 = vector.load %arg4[%c0_5, %c0_6] : memref<16x16xf32, #tpu.memory_space<vmem>>, vector<16x16xf32>
    tpu.vector_store %arg4[%c0_5, %c0_6], %5 {strides = array<i32>} : memref<16x16xf32, #tpu.memory_space<vmem>>, vector<16x16xf32>,
    return
  }
  func.func @transform_0(%arg0: i32) -> (i32, i32) {
    %c0_i32 = arith.constant 0 : i32
    %c0_i32_0 = arith.constant 0 : i32
    %c0_i32_1 = arith.constant 0 : i32
    return %c0_i32, %c0_i32_0 : i32, i32
  }
  func.func @transform_1(%arg0: i32) -> (i32, i32) {
    %c0_i32 = arith.constant 0 : i32
    %c0_i32_0 = arith.constant 0 : i32
    %c0_i32_1 = arith.constant 0 : i32
    return %c0_i32, %c0_i32_0 : i32, i32
  }
  func.func @transform_2(%arg0: i32) -> (i32, i32) {
    %c0_i32 = arith.constant 0 : i32
    %c0_i32_0 = arith.constant 0 : i32
    %c0_i32_1 = arith.constant 0 : i32
    return %c0_i32, %c0_i32_0 : i32, i32
  }
  func.func @transform_3(%arg0: i32) -> (i32, i32) {
    %c0_i32 = arith.constant 0 : i32
    %c0_i32_0 = arith.constant 0 : i32
    %c0_i32_1 = arith.constant 0 : i32
    return %c0_i32, %c0_i32_0 : i32, i32
  }
}

module attributes {stable_mosaic.version = 11 : i64} {
  func.func @kernel(%arg0: i32, %arg1: memref<16x160xbf16, #tpu.memory_space<vmem>>, %arg2: memref<160x16xbf16, #tpu.memory_space<vmem>>, %arg3: memref<1x16xf32, #tpu.memory_space<vmem>>, %arg4: memref<16x16xf32, #tpu.memory_space<vmem>>) attributes {dimension_semantics = [#tpu.dimension_semantics<arbitrary>], iteration_bounds = array<i64: 1>, scalar_prefetch = 0 : i64, scratch_operands = 0 : i64, tpu.core_type = #tpu.core_type<tc>, window_params = [{pipeline_mode = #tpu.pipeline_mode<synchronous>, transform_indices = @transform_0, window_bounds = array<i64: 16, 160>}, {pipeline_mode = #tpu.pipeline_mode<synchronous>, transform_indices = @transform_1, window_bounds = array<i64: 160, 16>}, {pipeline_mode = #tpu.pipeline_mode<synchronous>, transform_indices = @transform_2, window_bounds = array<i64: 1, 16>}, {pipeline_mode = #tpu.pipeline_mode<synchronous>, transform_indices = @transform_3, window_bounds = array<i64: 16, 16>}]} {
    %c0 = arith.constant 0 : index
    %c0_0 = arith.constant 0 : index
    %0 = vector.load %arg1[%c0, %c0_0] : memref<16x160xbf16, #tpu.memory_space<vmem>>, vector<16x160xbf16>
    %c0_1 = arith.constant 0 : index
    %c0_2 = arith.constant 0 : index
    %1 = vector.load %arg2[%c0_1, %c0_2] : memref<160x16xbf16, #tpu.memory_space<vmem>>, vector<160x16xbf16>
    %cst = arith.constant dense<0.000000e+00> : vector<16x16xf32>
    %2 = tpu.matmul %0, %1, %cst {dimension_numbers = #tpu.dot_dimension_numbers<[1], [0], [0], [1], [0, 0, 1, 1], [], []>} : vector<16x160xbf16>, vector<160x16xbf16>, vector<16x16xf32> -> vector<16x16xf32>
    %c0_3 = arith.constant 0 : index
    %c0_4 = arith.constant 0 : index
    %3 = vector.load %arg3[%c0_3, %c0_4] : memref<1x16xf32, #tpu.memory_space<vmem>>, vector<1x16xf32>
    %4 = vector.broadcast %3 : vector<1x16xf32> to vector<16x16xf32>
    %5 = arith.addf %2, %4 : vector<16x16xf32>
    %c0_5 = arith.constant 0 : index
    %c0_6 = arith.constant 0 : index
    %6 = vector.load %arg4[%c0_5, %c0_6] : memref<16x16xf32, #tpu.memory_space<vmem>>, vector<16x16xf32>
    tpu.vector_store %arg4[%c0_5, %c0_6], %5 {strides = array<i32>} : memref<16x16xf32, #tpu.memory_space<vmem>>, vector<16x16xf32>,
    return
  }
  func.func @transform_0(%arg0: i32) -> (i32, i32) {
    %c0_i32 = arith.constant 0 : i32
    %c0_i32_0 = arith.constant 0 : i32
    %c0_i32_1 = arith.constant 0 : i32
    return %c0_i32, %c0_i32_0 : i32, i32
  }
  func.func @transform_1(%arg0: i32) -> (i32, i32) {
    %c0_i32 = arith.constant 0 : i32
    %c0_i32_0 = arith.constant 0 : i32
    %c0_i32_1 = arith.constant 0 : i32
    return %c0_i32, %c0_i32_0 : i32, i32
  }
  func.func @transform_2(%arg0: i32) -> (i32, i32) {
    %c0_i32 = arith.constant 0 : i32
    %c0_i32_0 = arith.constant 0 : i32
    %c0_i32_1 = arith.constant 0 : i32
    return %c0_i32, %c0_i32_0 : i32, i32
  }
  func.func @transform_3(%arg0: i32) -> (i32, i32) {
    %c0_i32 = arith.constant 0 : i32
    %c0_i32_0 = arith.constant 0 : i32
    %c0_i32_1 = arith.constant 0 : i32
    return %c0_i32, %c0_i32_0 : i32, i32
  }
}

module attributes {stable_mosaic.version = 11 : i64} {
  func.func @kernel(%arg0: i32, %arg1: memref<16x64xbf16, #tpu.memory_space<vmem>>, %arg2: memref<64x16xbf16, #tpu.memory_space<vmem>>, %arg3: memref<1x16xf32, #tpu.memory_space<vmem>>, %arg4: memref<16x16xf32, #tpu.memory_space<vmem>>) attributes {dimension_semantics = [#tpu.dimension_semantics<arbitrary>], iteration_bounds = array<i64: 1>, scalar_prefetch = 0 : i64, scratch_operands = 0 : i64, tpu.core_type = #tpu.core_type<tc>, window_params = [{pipeline_mode = #tpu.pipeline_mode<synchronous>, transform_indices = @transform_0, window_bounds = array<i64: 16, 64>}, {pipeline_mode = #tpu.pipeline_mode<synchronous>, transform_indices = @transform_1, window_bounds = array<i64: 64, 16>}, {pipeline_mode = #tpu.pipeline_mode<synchronous>, transform_indices = @transform_2, window_bounds = array<i64: 1, 16>}, {pipeline_mode = #tpu.pipeline_mode<synchronous>, transform_indices = @transform_3, window_bounds = array<i64: 16, 16>}]} {
    %c0 = arith.constant 0 : index
    %c0_0 = arith.constant 0 : index
    %0 = vector.load %arg1[%c0, %c0_0] : memref<16x64xbf16, #tpu.memory_space<vmem>>, vector<16x64xbf16>
    %c0_1 = arith.constant 0 : index
    %c0_2 = arith.constant 0 : index
    %1 = vector.load %arg2[%c0_1, %c0_2] : memref<64x16xbf16, #tpu.memory_space<vmem>>, vector<64x16xbf16>
    %cst = arith.constant dense<0.000000e+00> : vector<16x16xf32>
    %2 = tpu.matmul %0, %1, %cst {dimension_numbers = #tpu.dot_dimension_numbers<[1], [0], [0], [1], [0, 0, 1, 1], [], []>} : vector<16x64xbf16>, vector<64x16xbf16>, vector<16x16xf32> -> vector<16x16xf32>
    %c0_3 = arith.constant 0 : index
    %c0_4 = arith.constant 0 : index
    %3 = vector.load %arg3[%c0_3, %c0_4] : memref<1x16xf32, #tpu.memory_space<vmem>>, vector<1x16xf32>
    %4 = vector.broadcast %3 : vector<1x16xf32> to vector<16x16xf32>
    %5 = arith.addf %2, %4 : vector<16x16xf32>
    %c0_5 = arith.constant 0 : index
    %c0_6 = arith.constant 0 : index
    %6 = vector.load %arg4[%c0_5, %c0_6] : memref<16x16xf32, #tpu.memory_space<vmem>>, vector<16x16xf32>
    tpu.vector_store %arg4[%c0_5, %c0_6], %5 {strides = array<i32>} : memref<16x16xf32, #tpu.memory_space<vmem>>, vector<16x16xf32>,
    return
  }
  func.func @transform_0(%arg0: i32) -> (i32, i32) {
    %c0_i32 = arith.constant 0 : i32
    %c0_i32_0 = arith.constant 0 : i32
    %c0_i32_1 = arith.constant 0 : i32
    return %c0_i32, %c0_i32_0 : i32, i32
  }
  func.func @transform_1(%arg0: i32) -> (i32, i32) {
    %c0_i32 = arith.constant 0 : i32
    %c0_i32_0 = arith.constant 0 : i32
    %c0_i32_1 = arith.constant 0 : i32
    return %c0_i32, %c0_i32_0 : i32, i32
  }
  func.func @transform_2(%arg0: i32) -> (i32, i32) {
    %c0_i32 = arith.constant 0 : i32
    %c0_i32_0 = arith.constant 0 : i32
    %c0_i32_1 = arith.constant 0 : i32
    return %c0_i32, %c0_i32_0 : i32, i32
  }
  func.func @transform_3(%arg0: i32) -> (i32, i32) {
    %c0_i32 = arith.constant 0 : i32
    %c0_i32_0 = arith.constant 0 : i32
    %c0_i32_1 = arith.constant 0 : i32
    return %c0_i32, %c0_i32_0 : i32, i32
  }
}

module attributes {stable_mosaic.version = 11 : i64} {
  func.func @_pool_conv_kernel(%arg0: i32, %arg1: memref<8x16xbf16, #tpu.memory_space<vmem>>, %arg2: memref<8x16xbf16, #tpu.memory_space<vmem>>, %arg3: memref<16x16xbf16, #tpu.memory_space<vmem>>, %arg4: memref<1x16xf32, #tpu.memory_space<vmem>>, %arg5: memref<8x16xf32, #tpu.memory_space<vmem>>) attributes {dimension_semantics = [#tpu.dimension_semantics<arbitrary>], iteration_bounds = array<i64: 1>, scalar_prefetch = 0 : i64, scratch_operands = 0 : i64, tpu.core_type = #tpu.core_type<tc>, window_params = [{pipeline_mode = #tpu.pipeline_mode<synchronous>, transform_indices = @transform_0, window_bounds = array<i64: 8, 16>}, {pipeline_mode = #tpu.pipeline_mode<synchronous>, transform_indices = @transform_1, window_bounds = array<i64: 8, 16>}, {pipeline_mode = #tpu.pipeline_mode<synchronous>, transform_indices = @transform_2, window_bounds = array<i64: 16, 16>}, {pipeline_mode = #tpu.pipeline_mode<synchronous>, transform_indices = @transform_3, window_bounds = array<i64: 1, 16>}, {pipeline_mode = #tpu.pipeline_mode<synchronous>, transform_indices = @transform_4, window_bounds = array<i64: 8, 16>}]} {
    %c0 = arith.constant 0 : index
    %c0_0 = arith.constant 0 : index
    %0 = vector.load %arg1[%c0, %c0_0] : memref<8x16xbf16, #tpu.memory_space<vmem>>, vector<8x16xbf16>
    %c0_1 = arith.constant 0 : index
    %c0_2 = arith.constant 0 : index
    %1 = vector.load %arg3[%c0_1, %c0_2] : memref<16x16xbf16, #tpu.memory_space<vmem>>, vector<16x16xbf16>
    %cst = arith.constant dense<0.000000e+00> : vector<8x16xf32>
    %2 = tpu.matmul %0, %1, %cst {dimension_numbers = #tpu.dot_dimension_numbers<[1], [0], [0], [1], [0, 0, 1, 1], [], []>} : vector<8x16xbf16>, vector<16x16xbf16>, vector<8x16xf32> -> vector<8x16xf32>
    %c0_3 = arith.constant 0 : index
    %c0_4 = arith.constant 0 : index
    %3 = vector.load %arg2[%c0_3, %c0_4] : memref<8x16xbf16, #tpu.memory_space<vmem>>, vector<8x16xbf16>
    %c0_5 = arith.constant 0 : index
    %c0_6 = arith.constant 0 : index
    %4 = vector.load %arg3[%c0_5, %c0_6] : memref<16x16xbf16, #tpu.memory_space<vmem>>, vector<16x16xbf16>
    %cst_7 = arith.constant dense<0.000000e+00> : vector<8x16xf32>
    %5 = tpu.matmul %3, %4, %cst_7 {dimension_numbers = #tpu.dot_dimension_numbers<[1], [0], [0], [1], [0, 0, 1, 1], [], []>} : vector<8x16xbf16>, vector<16x16xbf16>, vector<8x16xf32> -> vector<8x16xf32>
    %6 = arith.maximumf %2, %5 : vector<8x16xf32>
    %c0_8 = arith.constant 0 : index
    %c0_9 = arith.constant 0 : index
    %7 = vector.load %arg4[%c0_8, %c0_9] : memref<1x16xf32, #tpu.memory_space<vmem>>, vector<1x16xf32>
    %8 = vector.broadcast %7 : vector<1x16xf32> to vector<8x16xf32>
    %9 = arith.addf %6, %8 : vector<8x16xf32>
    %c0_10 = arith.constant 0 : index
    %c0_11 = arith.constant 0 : index
    %10 = vector.load %arg5[%c0_10, %c0_11] : memref<8x16xf32, #tpu.memory_space<vmem>>, vector<8x16xf32>
    tpu.vector_store %arg5[%c0_10, %c0_11], %9 {strides = array<i32>} : memref<8x16xf32, #tpu.memory_space<vmem>>, vector<8x16xf32>,
    return
  }
  func.func @transform_0(%arg0: i32) -> (i32, i32) {
    %c0_i32 = arith.constant 0 : i32
    %c0_i32_0 = arith.constant 0 : i32
    %c0_i32_1 = arith.constant 0 : i32
    return %c0_i32, %c0_i32_0 : i32, i32
  }
  func.func @transform_1(%arg0: i32) -> (i32, i32) {
    %c0_i32 = arith.constant 0 : i32
    %c0_i32_0 = arith.constant 0 : i32
    %c0_i32_1 = arith.constant 0 : i32
    return %c0_i32, %c0_i32_0 : i32, i32
  }
  func.func @transform_2(%arg0: i32) -> (i32, i32) {
    %c0_i32 = arith.constant 0 : i32
    %c0_i32_0 = arith.constant 0 : i32
    %c0_i32_1 = arith.constant 0 : i32
    return %c0_i32, %c0_i32_0 : i32, i32
  }
  func.func @transform_3(%arg0: i32) -> (i32, i32) {
    %c0_i32 = arith.constant 0 : i32
    %c0_i32_0 = arith.constant 0 : i32
    %c0_i32_1 = arith.constant 0 : i32
    return %c0_i32, %c0_i32_0 : i32, i32
  }
  func.func @transform_4(%arg0: i32) -> (i32, i32) {
    %c0_i32 = arith.constant 0 : i32
    %c0_i32_0 = arith.constant 0 : i32
    %c0_i32_1 = arith.constant 0 : i32
    return %c0_i32, %c0_i32_0 : i32, i32
  }
}

module attributes {stable_mosaic.version = 11 : i64} {
  func.func @kernel(%arg0: i32, %arg1: memref<8x128xbf16, #tpu.memory_space<vmem>>, %arg2: memref<128x16xbf16, #tpu.memory_space<vmem>>, %arg3: memref<1x16xf32, #tpu.memory_space<vmem>>, %arg4: memref<8x16xf32, #tpu.memory_space<vmem>>) attributes {dimension_semantics = [#tpu.dimension_semantics<arbitrary>], iteration_bounds = array<i64: 1>, scalar_prefetch = 0 : i64, scratch_operands = 0 : i64, tpu.core_type = #tpu.core_type<tc>, window_params = [{pipeline_mode = #tpu.pipeline_mode<synchronous>, transform_indices = @transform_0, window_bounds = array<i64: 8, 128>}, {pipeline_mode = #tpu.pipeline_mode<synchronous>, transform_indices = @transform_1, window_bounds = array<i64: 128, 16>}, {pipeline_mode = #tpu.pipeline_mode<synchronous>, transform_indices = @transform_2, window_bounds = array<i64: 1, 16>}, {pipeline_mode = #tpu.pipeline_mode<synchronous>, transform_indices = @transform_3, window_bounds = array<i64: 8, 16>}]} {
    %c0 = arith.constant 0 : index
    %c0_0 = arith.constant 0 : index
    %0 = vector.load %arg1[%c0, %c0_0] : memref<8x128xbf16, #tpu.memory_space<vmem>>, vector<8x128xbf16>
    %c0_1 = arith.constant 0 : index
    %c0_2 = arith.constant 0 : index
    %1 = vector.load %arg2[%c0_1, %c0_2] : memref<128x16xbf16, #tpu.memory_space<vmem>>, vector<128x16xbf16>
    %cst = arith.constant dense<0.000000e+00> : vector<8x16xf32>
    %2 = tpu.matmul %0, %1, %cst {dimension_numbers = #tpu.dot_dimension_numbers<[1], [0], [0], [1], [0, 0, 1, 1], [], []>} : vector<8x128xbf16>, vector<128x16xbf16>, vector<8x16xf32> -> vector<8x16xf32>
    %c0_3 = arith.constant 0 : index
    %c0_4 = arith.constant 0 : index
    %3 = vector.load %arg3[%c0_3, %c0_4] : memref<1x16xf32, #tpu.memory_space<vmem>>, vector<1x16xf32>
    %4 = vector.broadcast %3 : vector<1x16xf32> to vector<8x16xf32>
    %5 = arith.addf %2, %4 : vector<8x16xf32>
    %c0_5 = arith.constant 0 : index
    %c0_6 = arith.constant 0 : index
    %6 = vector.load %arg4[%c0_5, %c0_6] : memref<8x16xf32, #tpu.memory_space<vmem>>, vector<8x16xf32>
    tpu.vector_store %arg4[%c0_5, %c0_6], %5 {strides = array<i32>} : memref<8x16xf32, #tpu.memory_space<vmem>>, vector<8x16xf32>,
    return
  }
  func.func @transform_0(%arg0: i32) -> (i32, i32) {
    %c0_i32 = arith.constant 0 : i32
    %c0_i32_0 = arith.constant 0 : i32
    %c0_i32_1 = arith.constant 0 : i32
    return %c0_i32, %c0_i32_0 : i32, i32
  }
  func.func @transform_1(%arg0: i32) -> (i32, i32) {
    %c0_i32 = arith.constant 0 : i32
    %c0_i32_0 = arith.constant 0 : i32
    %c0_i32_1 = arith.constant 0 : i32
    return %c0_i32, %c0_i32_0 : i32, i32
  }
  func.func @transform_2(%arg0: i32) -> (i32, i32) {
    %c0_i32 = arith.constant 0 : i32
    %c0_i32_0 = arith.constant 0 : i32
    %c0_i32_1 = arith.constant 0 : i32
    return %c0_i32, %c0_i32_0 : i32, i32
  }
  func.func @transform_3(%arg0: i32) -> (i32, i32) {
    %c0_i32 = arith.constant 0 : i32
    %c0_i32_0 = arith.constant 0 : i32
    %c0_i32_1 = arith.constant 0 : i32
    return %c0_i32, %c0_i32_0 : i32, i32
  }
}

module attributes {stable_mosaic.version = 11 : i64} {
  func.func @kernel(%arg0: i32, %arg1: memref<8x160xbf16, #tpu.memory_space<vmem>>, %arg2: memref<160x16xbf16, #tpu.memory_space<vmem>>, %arg3: memref<1x16xf32, #tpu.memory_space<vmem>>, %arg4: memref<8x16xf32, #tpu.memory_space<vmem>>) attributes {dimension_semantics = [#tpu.dimension_semantics<arbitrary>], iteration_bounds = array<i64: 1>, scalar_prefetch = 0 : i64, scratch_operands = 0 : i64, tpu.core_type = #tpu.core_type<tc>, window_params = [{pipeline_mode = #tpu.pipeline_mode<synchronous>, transform_indices = @transform_0, window_bounds = array<i64: 8, 160>}, {pipeline_mode = #tpu.pipeline_mode<synchronous>, transform_indices = @transform_1, window_bounds = array<i64: 160, 16>}, {pipeline_mode = #tpu.pipeline_mode<synchronous>, transform_indices = @transform_2, window_bounds = array<i64: 1, 16>}, {pipeline_mode = #tpu.pipeline_mode<synchronous>, transform_indices = @transform_3, window_bounds = array<i64: 8, 16>}]} {
    %c0 = arith.constant 0 : index
    %c0_0 = arith.constant 0 : index
    %0 = vector.load %arg1[%c0, %c0_0] : memref<8x160xbf16, #tpu.memory_space<vmem>>, vector<8x160xbf16>
    %c0_1 = arith.constant 0 : index
    %c0_2 = arith.constant 0 : index
    %1 = vector.load %arg2[%c0_1, %c0_2] : memref<160x16xbf16, #tpu.memory_space<vmem>>, vector<160x16xbf16>
    %cst = arith.constant dense<0.000000e+00> : vector<8x16xf32>
    %2 = tpu.matmul %0, %1, %cst {dimension_numbers = #tpu.dot_dimension_numbers<[1], [0], [0], [1], [0, 0, 1, 1], [], []>} : vector<8x160xbf16>, vector<160x16xbf16>, vector<8x16xf32> -> vector<8x16xf32>
    %c0_3 = arith.constant 0 : index
    %c0_4 = arith.constant 0 : index
    %3 = vector.load %arg3[%c0_3, %c0_4] : memref<1x16xf32, #tpu.memory_space<vmem>>, vector<1x16xf32>
    %4 = vector.broadcast %3 : vector<1x16xf32> to vector<8x16xf32>
    %5 = arith.addf %2, %4 : vector<8x16xf32>
    %c0_5 = arith.constant 0 : index
    %c0_6 = arith.constant 0 : index
    %6 = vector.load %arg4[%c0_5, %c0_6] : memref<8x16xf32, #tpu.memory_space<vmem>>, vector<8x16xf32>
    tpu.vector_store %arg4[%c0_5, %c0_6], %5 {strides = array<i32>} : memref<8x16xf32, #tpu.memory_space<vmem>>, vector<8x16xf32>,
    return
  }
  func.func @transform_0(%arg0: i32) -> (i32, i32) {
    %c0_i32 = arith.constant 0 : i32
    %c0_i32_0 = arith.constant 0 : i32
    %c0_i32_1 = arith.constant 0 : i32
    return %c0_i32, %c0_i32_0 : i32, i32
  }
  func.func @transform_1(%arg0: i32) -> (i32, i32) {
    %c0_i32 = arith.constant 0 : i32
    %c0_i32_0 = arith.constant 0 : i32
    %c0_i32_1 = arith.constant 0 : i32
    return %c0_i32, %c0_i32_0 : i32, i32
  }
  func.func @transform_2(%arg0: i32) -> (i32, i32) {
    %c0_i32 = arith.constant 0 : i32
    %c0_i32_0 = arith.constant 0 : i32
    %c0_i32_1 = arith.constant 0 : i32
    return %c0_i32, %c0_i32_0 : i32, i32
  }
  func.func @transform_3(%arg0: i32) -> (i32, i32) {
    %c0_i32 = arith.constant 0 : i32
    %c0_i32_0 = arith.constant 0 : i32
    %c0_i32_1 = arith.constant 0 : i32
    return %c0_i32, %c0_i32_0 : i32, i32
  }
}

module attributes {stable_mosaic.version = 11 : i64} {
  func.func @kernel(%arg0: i32, %arg1: memref<8x16xbf16, #tpu.memory_space<vmem>>, %arg2: memref<16x16xbf16, #tpu.memory_space<vmem>>, %arg3: memref<1x16xf32, #tpu.memory_space<vmem>>, %arg4: memref<8x16xf32, #tpu.memory_space<vmem>>) attributes {dimension_semantics = [#tpu.dimension_semantics<arbitrary>], iteration_bounds = array<i64: 1>, scalar_prefetch = 0 : i64, scratch_operands = 0 : i64, tpu.core_type = #tpu.core_type<tc>, window_params = [{pipeline_mode = #tpu.pipeline_mode<synchronous>, transform_indices = @transform_0, window_bounds = array<i64: 8, 16>}, {pipeline_mode = #tpu.pipeline_mode<synchronous>, transform_indices = @transform_1, window_bounds = array<i64: 16, 16>}, {pipeline_mode = #tpu.pipeline_mode<synchronous>, transform_indices = @transform_2, window_bounds = array<i64: 1, 16>}, {pipeline_mode = #tpu.pipeline_mode<synchronous>, transform_indices = @transform_3, window_bounds = array<i64: 8, 16>}]} {
    %c0 = arith.constant 0 : index
    %c0_0 = arith.constant 0 : index
    %0 = vector.load %arg1[%c0, %c0_0] : memref<8x16xbf16, #tpu.memory_space<vmem>>, vector<8x16xbf16>
    %c0_1 = arith.constant 0 : index
    %c0_2 = arith.constant 0 : index
    %1 = vector.load %arg2[%c0_1, %c0_2] : memref<16x16xbf16, #tpu.memory_space<vmem>>, vector<16x16xbf16>
    %cst = arith.constant dense<0.000000e+00> : vector<8x16xf32>
    %2 = tpu.matmul %0, %1, %cst {dimension_numbers = #tpu.dot_dimension_numbers<[1], [0], [0], [1], [0, 0, 1, 1], [], []>} : vector<8x16xbf16>, vector<16x16xbf16>, vector<8x16xf32> -> vector<8x16xf32>
    %c0_3 = arith.constant 0 : index
    %c0_4 = arith.constant 0 : index
    %3 = vector.load %arg3[%c0_3, %c0_4] : memref<1x16xf32, #tpu.memory_space<vmem>>, vector<1x16xf32>
    %4 = vector.broadcast %3 : vector<1x16xf32> to vector<8x16xf32>
    %5 = arith.addf %2, %4 : vector<8x16xf32>
    %cst_5 = arith.constant 0.000000e+00 : f32
    %6 = vector.broadcast %cst_5 : f32 to vector<8x16xf32>
    %7 = arith.cmpf ogt, %5, %6 : vector<8x16xf32>
    %cst_6 = arith.constant 0.000000e+00 : f32
    %8 = vector.broadcast %cst_6 : f32 to vector<8x16xf32>
    %9 = arith.minimumf %5, %8 : vector<8x16xf32>
    %10 = math.exp %9 : vector<8x16xf32>
    %cst_7 = arith.constant 1.000000e+00 : f32
    %11 = vector.broadcast %cst_7 : f32 to vector<8x16xf32>
    %12 = arith.subf %10, %11 : vector<8x16xf32>
    %cst_8 = arith.constant 1.67326319 : f32
    %13 = vector.broadcast %cst_8 : f32 to vector<8x16xf32>
    %14 = arith.mulf %13, %12 : vector<8x16xf32>
    %15 = arith.select %7, %5, %14 : vector<8x16xi1>, vector<8x16xf32>
    %cst_9 = arith.constant 1.05070102 : f32
    %16 = vector.broadcast %cst_9 : f32 to vector<8x16xf32>
    %17 = arith.mulf %16, %15 : vector<8x16xf32>
    %c0_10 = arith.constant 0 : index
    %c0_11 = arith.constant 0 : index
    %18 = vector.load %arg4[%c0_10, %c0_11] : memref<8x16xf32, #tpu.memory_space<vmem>>, vector<8x16xf32>
    tpu.vector_store %arg4[%c0_10, %c0_11], %17 {strides = array<i32>} : memref<8x16xf32, #tpu.memory_space<vmem>>, vector<8x16xf32>,
    return
  }
  func.func @transform_0(%arg0: i32) -> (i32, i32) {
    %c0_i32 = arith.constant 0 : i32
    %c0_i32_0 = arith.constant 0 : i32
    %c0_i32_1 = arith.constant 0 : i32
    return %c0_i32, %c0_i32_0 : i32, i32
  }
  func.func @transform_1(%arg0: i32) -> (i32, i32) {
    %c0_i32 = arith.constant 0 : i32
    %c0_i32_0 = arith.constant 0 : i32
    %c0_i32_1 = arith.constant 0 : i32
    return %c0_i32, %c0_i32_0 : i32, i32
  }
  func.func @transform_2(%arg0: i32) -> (i32, i32) {
    %c0_i32 = arith.constant 0 : i32
    %c0_i32_0 = arith.constant 0 : i32
    %c0_i32_1 = arith.constant 0 : i32
    return %c0_i32, %c0_i32_0 : i32, i32
  }
  func.func @transform_3(%arg0: i32) -> (i32, i32) {
    %c0_i32 = arith.constant 0 : i32
    %c0_i32_0 = arith.constant 0 : i32
    %c0_i32_1 = arith.constant 0 : i32
    return %c0_i32, %c0_i32_0 : i32, i32
  }
}

module attributes {stable_mosaic.version = 11 : i64} {
  func.func @kernel(%arg0: i32, %arg1: memref<8x64xbf16, #tpu.memory_space<vmem>>, %arg2: memref<64x16xbf16, #tpu.memory_space<vmem>>, %arg3: memref<1x16xf32, #tpu.memory_space<vmem>>, %arg4: memref<8x16xf32, #tpu.memory_space<vmem>>) attributes {dimension_semantics = [#tpu.dimension_semantics<arbitrary>], iteration_bounds = array<i64: 1>, scalar_prefetch = 0 : i64, scratch_operands = 0 : i64, tpu.core_type = #tpu.core_type<tc>, window_params = [{pipeline_mode = #tpu.pipeline_mode<synchronous>, transform_indices = @transform_0, window_bounds = array<i64: 8, 64>}, {pipeline_mode = #tpu.pipeline_mode<synchronous>, transform_indices = @transform_1, window_bounds = array<i64: 64, 16>}, {pipeline_mode = #tpu.pipeline_mode<synchronous>, transform_indices = @transform_2, window_bounds = array<i64: 1, 16>}, {pipeline_mode = #tpu.pipeline_mode<synchronous>, transform_indices = @transform_3, window_bounds = array<i64: 8, 16>}]} {
    %c0 = arith.constant 0 : index
    %c0_0 = arith.constant 0 : index
    %0 = vector.load %arg1[%c0, %c0_0] : memref<8x64xbf16, #tpu.memory_space<vmem>>, vector<8x64xbf16>
    %c0_1 = arith.constant 0 : index
    %c0_2 = arith.constant 0 : index
    %1 = vector.load %arg2[%c0_1, %c0_2] : memref<64x16xbf16, #tpu.memory_space<vmem>>, vector<64x16xbf16>
    %cst = arith.constant dense<0.000000e+00> : vector<8x16xf32>
    %2 = tpu.matmul %0, %1, %cst {dimension_numbers = #tpu.dot_dimension_numbers<[1], [0], [0], [1], [0, 0, 1, 1], [], []>} : vector<8x64xbf16>, vector<64x16xbf16>, vector<8x16xf32> -> vector<8x16xf32>
    %c0_3 = arith.constant 0 : index
    %c0_4 = arith.constant 0 : index
    %3 = vector.load %arg3[%c0_3, %c0_4] : memref<1x16xf32, #tpu.memory_space<vmem>>, vector<1x16xf32>
    %4 = vector.broadcast %3 : vector<1x16xf32> to vector<8x16xf32>
    %5 = arith.addf %2, %4 : vector<8x16xf32>
    %c0_5 = arith.constant 0 : index
    %c0_6 = arith.constant 0 : index
    %6 = vector.load %arg4[%c0_5, %c0_6] : memref<8x16xf32, #tpu.memory_space<vmem>>, vector<8x16xf32>
    tpu.vector_store %arg4[%c0_5, %c0_6], %5 {strides = array<i32>} : memref<8x16xf32, #tpu.memory_space<vmem>>, vector<8x16xf32>,
    return
  }
  func.func @transform_0(%arg0: i32) -> (i32, i32) {
    %c0_i32 = arith.constant 0 : i32
    %c0_i32_0 = arith.constant 0 : i32
    %c0_i32_1 = arith.constant 0 : i32
    return %c0_i32, %c0_i32_0 : i32, i32
  }
  func.func @transform_1(%arg0: i32) -> (i32, i32) {
    %c0_i32 = arith.constant 0 : i32
    %c0_i32_0 = arith.constant 0 : i32
    %c0_i32_1 = arith.constant 0 : i32
    return %c0_i32, %c0_i32_0 : i32, i32
  }
  func.func @transform_2(%arg0: i32) -> (i32, i32) {
    %c0_i32 = arith.constant 0 : i32
    %c0_i32_0 = arith.constant 0 : i32
    %c0_i32_1 = arith.constant 0 : i32
    return %c0_i32, %c0_i32_0 : i32, i32
  }
  func.func @transform_3(%arg0: i32) -> (i32, i32) {
    %c0_i32 = arith.constant 0 : i32
    %c0_i32_0 = arith.constant 0 : i32
    %c0_i32_1 = arith.constant 0 : i32
    return %c0_i32, %c0_i32_0 : i32, i32
  }
}

module attributes {stable_mosaic.version = 11 : i64} {
  func.func @_convt_gate_kernel(%arg0: i32, %arg1: memref<8x16xbf16, #tpu.memory_space<vmem>>, %arg2: memref<16x32xbf16, #tpu.memory_space<vmem>>, %arg3: memref<1x32xf32, #tpu.memory_space<vmem>>, %arg4: memref<8x32xf32, #tpu.memory_space<vmem>>, %arg5: memref<8x32xf32, #tpu.memory_space<vmem>>, %arg6: memref<8x32xf32, #tpu.memory_space<vmem>>) attributes {dimension_semantics = [#tpu.dimension_semantics<arbitrary>], iteration_bounds = array<i64: 1>, scalar_prefetch = 0 : i64, scratch_operands = 0 : i64, tpu.core_type = #tpu.core_type<tc>, window_params = [{pipeline_mode = #tpu.pipeline_mode<synchronous>, transform_indices = @transform_0, window_bounds = array<i64: 8, 16>}, {pipeline_mode = #tpu.pipeline_mode<synchronous>, transform_indices = @transform_1, window_bounds = array<i64: 16, 32>}, {pipeline_mode = #tpu.pipeline_mode<synchronous>, transform_indices = @transform_2, window_bounds = array<i64: 1, 32>}, {pipeline_mode = #tpu.pipeline_mode<synchronous>, transform_indices = @transform_3, window_bounds = array<i64: 8, 32>}, {pipeline_mode = #tpu.pipeline_mode<synchronous>, transform_indices = @transform_4, window_bounds = array<i64: 8, 32>}, {pipeline_mode = #tpu.pipeline_mode<synchronous>, transform_indices = @transform_5, window_bounds = array<i64: 8, 32>}]} {
    %c0 = arith.constant 0 : index
    %c0_0 = arith.constant 0 : index
    %0 = vector.load %arg1[%c0, %c0_0] : memref<8x16xbf16, #tpu.memory_space<vmem>>, vector<8x16xbf16>
    %c0_1 = arith.constant 0 : index
    %c0_2 = arith.constant 0 : index
    %1 = vector.load %arg2[%c0_1, %c0_2] : memref<16x32xbf16, #tpu.memory_space<vmem>>, vector<16x32xbf16>
    %cst = arith.constant dense<0.000000e+00> : vector<8x32xf32>
    %2 = tpu.matmul %0, %1, %cst {dimension_numbers = #tpu.dot_dimension_numbers<[1], [0], [0], [1], [0, 0, 1, 1], [], []>} : vector<8x16xbf16>, vector<16x32xbf16>, vector<8x32xf32> -> vector<8x32xf32>
    %c0_3 = arith.constant 0 : index
    %c0_4 = arith.constant 0 : index
    %3 = vector.load %arg3[%c0_3, %c0_4] : memref<1x32xf32, #tpu.memory_space<vmem>>, vector<1x32xf32>
    %4 = vector.broadcast %3 : vector<1x32xf32> to vector<8x32xf32>
    %5 = arith.addf %2, %4 : vector<8x32xf32>
    %c0_5 = arith.constant 0 : index
    %c0_6 = arith.constant 0 : index
    %6 = vector.load %arg5[%c0_5, %c0_6] : memref<8x32xf32, #tpu.memory_space<vmem>>, vector<8x32xf32>
    tpu.vector_store %arg5[%c0_5, %c0_6], %5 {strides = array<i32>} : memref<8x32xf32, #tpu.memory_space<vmem>>, vector<8x32xf32>,
    %cst_7 = arith.constant 0.000000e+00 : f32
    %7 = vector.broadcast %cst_7 : f32 to vector<8x32xf32>
    %8 = arith.subf %7, %5 : vector<8x32xf32>
    %9 = math.exp %8 : vector<8x32xf32>
    %cst_8 = arith.constant 1.000000e+00 : f32
    %10 = vector.broadcast %cst_8 : f32 to vector<8x32xf32>
    %11 = arith.addf %10, %9 : vector<8x32xf32>
    %12 = tpu.reciprocal %11 {approx = true} : vector<8x32xf32> -> vector<8x32xf32>
    %c0_9 = arith.constant 0 : index
    %c0_10 = arith.constant 0 : index
    %13 = vector.load %arg4[%c0_9, %c0_10] : memref<8x32xf32, #tpu.memory_space<vmem>>, vector<8x32xf32>
    %14 = arith.mulf %12, %13 : vector<8x32xf32>
    %c0_11 = arith.constant 0 : index
    %c0_12 = arith.constant 0 : index
    %15 = vector.load %arg6[%c0_11, %c0_12] : memref<8x32xf32, #tpu.memory_space<vmem>>, vector<8x32xf32>
    tpu.vector_store %arg6[%c0_11, %c0_12], %14 {strides = array<i32>} : memref<8x32xf32, #tpu.memory_space<vmem>>, vector<8x32xf32>,
    return
  }
  func.func @transform_0(%arg0: i32) -> (i32, i32) {
    %c0_i32 = arith.constant 0 : i32
    %c0_i32_0 = arith.constant 0 : i32
    %c0_i32_1 = arith.constant 0 : i32
    return %c0_i32, %c0_i32_0 : i32, i32
  }
  func.func @transform_1(%arg0: i32) -> (i32, i32) {
    %c0_i32 = arith.constant 0 : i32
    %c0_i32_0 = arith.constant 0 : i32
    %c0_i32_1 = arith.constant 0 : i32
    return %c0_i32, %c0_i32_0 : i32, i32
  }
  func.func @transform_2(%arg0: i32) -> (i32, i32) {
    %c0_i32 = arith.constant 0 : i32
    %c0_i32_0 = arith.constant 0 : i32
    %c0_i32_1 = arith.constant 0 : i32
    return %c0_i32, %c0_i32_0 : i32, i32
  }
  func.func @transform_3(%arg0: i32) -> (i32, i32) {
    %c0_i32 = arith.constant 0 : i32
    %c0_i32_0 = arith.constant 0 : i32
    %c0_i32_1 = arith.constant 0 : i32
    return %c0_i32, %c0_i32_0 : i32, i32
  }
  func.func @transform_4(%arg0: i32) -> (i32, i32) {
    %c0_i32 = arith.constant 0 : i32
    %c0_i32_0 = arith.constant 0 : i32
    %c0_i32_1 = arith.constant 0 : i32
    return %c0_i32, %c0_i32_0 : i32, i32
  }
  func.func @transform_5(%arg0: i32) -> (i32, i32) {
    %c0_i32 = arith.constant 0 : i32
    %c0_i32_0 = arith.constant 0 : i32
    %c0_i32_1 = arith.constant 0 : i32
    return %c0_i32, %c0_i32_0 : i32, i32
  }
}

module attributes {stable_mosaic.version = 11 : i64} {
  func.func @kernel(%arg0: i32, %arg1: memref<16x32xbf16, #tpu.memory_space<vmem>>, %arg2: memref<32x16xbf16, #tpu.memory_space<vmem>>, %arg3: memref<1x16xf32, #tpu.memory_space<vmem>>, %arg4: memref<16x16xf32, #tpu.memory_space<vmem>>) attributes {dimension_semantics = [#tpu.dimension_semantics<arbitrary>], iteration_bounds = array<i64: 1>, scalar_prefetch = 0 : i64, scratch_operands = 0 : i64, tpu.core_type = #tpu.core_type<tc>, window_params = [{pipeline_mode = #tpu.pipeline_mode<synchronous>, transform_indices = @transform_0, window_bounds = array<i64: 16, 32>}, {pipeline_mode = #tpu.pipeline_mode<synchronous>, transform_indices = @transform_1, window_bounds = array<i64: 32, 16>}, {pipeline_mode = #tpu.pipeline_mode<synchronous>, transform_indices = @transform_2, window_bounds = array<i64: 1, 16>}, {pipeline_mode = #tpu.pipeline_mode<synchronous>, transform_indices = @transform_3, window_bounds = array<i64: 16, 16>}]} {
    %c0 = arith.constant 0 : index
    %c0_0 = arith.constant 0 : index
    %0 = vector.load %arg1[%c0, %c0_0] : memref<16x32xbf16, #tpu.memory_space<vmem>>, vector<16x32xbf16>
    %c0_1 = arith.constant 0 : index
    %c0_2 = arith.constant 0 : index
    %1 = vector.load %arg2[%c0_1, %c0_2] : memref<32x16xbf16, #tpu.memory_space<vmem>>, vector<32x16xbf16>
    %cst = arith.constant dense<0.000000e+00> : vector<16x16xf32>
    %2 = tpu.matmul %0, %1, %cst {dimension_numbers = #tpu.dot_dimension_numbers<[1], [0], [0], [1], [0, 0, 1, 1], [], []>} : vector<16x32xbf16>, vector<32x16xbf16>, vector<16x16xf32> -> vector<16x16xf32>
    %c0_3 = arith.constant 0 : index
    %c0_4 = arith.constant 0 : index
    %3 = vector.load %arg3[%c0_3, %c0_4] : memref<1x16xf32, #tpu.memory_space<vmem>>, vector<1x16xf32>
    %4 = vector.broadcast %3 : vector<1x16xf32> to vector<16x16xf32>
    %5 = arith.addf %2, %4 : vector<16x16xf32>
    %cst_5 = arith.constant 0.000000e+00 : f32
    %6 = vector.broadcast %cst_5 : f32 to vector<16x16xf32>
    %7 = arith.cmpf ogt, %5, %6 : vector<16x16xf32>
    %cst_6 = arith.constant 0.000000e+00 : f32
    %8 = vector.broadcast %cst_6 : f32 to vector<16x16xf32>
    %9 = arith.minimumf %5, %8 : vector<16x16xf32>
    %10 = math.exp %9 : vector<16x16xf32>
    %cst_7 = arith.constant 1.000000e+00 : f32
    %11 = vector.broadcast %cst_7 : f32 to vector<16x16xf32>
    %12 = arith.subf %10, %11 : vector<16x16xf32>
    %cst_8 = arith.constant 1.67326319 : f32
    %13 = vector.broadcast %cst_8 : f32 to vector<16x16xf32>
    %14 = arith.mulf %13, %12 : vector<16x16xf32>
    %15 = arith.select %7, %5, %14 : vector<16x16xi1>, vector<16x16xf32>
    %cst_9 = arith.constant 1.05070102 : f32
    %16 = vector.broadcast %cst_9 : f32 to vector<16x16xf32>
    %17 = arith.mulf %16, %15 : vector<16x16xf32>
    %c0_10 = arith.constant 0 : index
    %c0_11 = arith.constant 0 : index
    %18 = vector.load %arg4[%c0_10, %c0_11] : memref<16x16xf32, #tpu.memory_space<vmem>>, vector<16x16xf32>
    tpu.vector_store %arg4[%c0_10, %c0_11], %17 {strides = array<i32>} : memref<16x16xf32, #tpu.memory_space<vmem>>, vector<16x16xf32>,
    return
  }
  func.func @transform_0(%arg0: i32) -> (i32, i32) {
    %c0_i32 = arith.constant 0 : i32
    %c0_i32_0 = arith.constant 0 : i32
    %c0_i32_1 = arith.constant 0 : i32
    return %c0_i32, %c0_i32_0 : i32, i32
  }
  func.func @transform_1(%arg0: i32) -> (i32, i32) {
    %c0_i32 = arith.constant 0 : i32
    %c0_i32_0 = arith.constant 0 : i32
    %c0_i32_1 = arith.constant 0 : i32
    return %c0_i32, %c0_i32_0 : i32, i32
  }
  func.func @transform_2(%arg0: i32) -> (i32, i32) {
    %c0_i32 = arith.constant 0 : i32
    %c0_i32_0 = arith.constant 0 : i32
    %c0_i32_1 = arith.constant 0 : i32
    return %c0_i32, %c0_i32_0 : i32, i32
  }
  func.func @transform_3(%arg0: i32) -> (i32, i32) {
    %c0_i32 = arith.constant 0 : i32
    %c0_i32_0 = arith.constant 0 : i32
    %c0_i32_1 = arith.constant 0 : i32
    return %c0_i32, %c0_i32_0 : i32, i32
  }
}

module attributes {stable_mosaic.version = 11 : i64} {
  func.func @kernel(%arg0: i32, %arg1: memref<16x16xbf16, #tpu.memory_space<vmem>>, %arg2: memref<16x16xbf16, #tpu.memory_space<vmem>>, %arg3: memref<1x16xf32, #tpu.memory_space<vmem>>, %arg4: memref<16x16xf32, #tpu.memory_space<vmem>>) attributes {dimension_semantics = [#tpu.dimension_semantics<arbitrary>], iteration_bounds = array<i64: 1>, scalar_prefetch = 0 : i64, scratch_operands = 0 : i64, tpu.core_type = #tpu.core_type<tc>, window_params = [{pipeline_mode = #tpu.pipeline_mode<synchronous>, transform_indices = @transform_0, window_bounds = array<i64: 16, 16>}, {pipeline_mode = #tpu.pipeline_mode<synchronous>, transform_indices = @transform_1, window_bounds = array<i64: 16, 16>}, {pipeline_mode = #tpu.pipeline_mode<synchronous>, transform_indices = @transform_2, window_bounds = array<i64: 1, 16>}, {pipeline_mode = #tpu.pipeline_mode<synchronous>, transform_indices = @transform_3, window_bounds = array<i64: 16, 16>}]} {
    %c0 = arith.constant 0 : index
    %c0_0 = arith.constant 0 : index
    %0 = vector.load %arg1[%c0, %c0_0] : memref<16x16xbf16, #tpu.memory_space<vmem>>, vector<16x16xbf16>
    %c0_1 = arith.constant 0 : index
    %c0_2 = arith.constant 0 : index
    %1 = vector.load %arg2[%c0_1, %c0_2] : memref<16x16xbf16, #tpu.memory_space<vmem>>, vector<16x16xbf16>
    %cst = arith.constant dense<0.000000e+00> : vector<16x16xf32>
    %2 = tpu.matmul %0, %1, %cst {dimension_numbers = #tpu.dot_dimension_numbers<[1], [0], [0], [1], [0, 0, 1, 1], [], []>} : vector<16x16xbf16>, vector<16x16xbf16>, vector<16x16xf32> -> vector<16x16xf32>
    %c0_3 = arith.constant 0 : index
    %c0_4 = arith.constant 0 : index
    %3 = vector.load %arg3[%c0_3, %c0_4] : memref<1x16xf32, #tpu.memory_space<vmem>>, vector<1x16xf32>
    %4 = vector.broadcast %3 : vector<1x16xf32> to vector<16x16xf32>
    %5 = arith.addf %2, %4 : vector<16x16xf32>
    %cst_5 = arith.constant 0.000000e+00 : f32
    %6 = vector.broadcast %cst_5 : f32 to vector<16x16xf32>
    %7 = arith.cmpf ogt, %5, %6 : vector<16x16xf32>
    %cst_6 = arith.constant 0.000000e+00 : f32
    %8 = vector.broadcast %cst_6 : f32 to vector<16x16xf32>
    %9 = arith.minimumf %5, %8 : vector<16x16xf32>
    %10 = math.exp %9 : vector<16x16xf32>
    %cst_7 = arith.constant 1.000000e+00 : f32
    %11 = vector.broadcast %cst_7 : f32 to vector<16x16xf32>
    %12 = arith.subf %10, %11 : vector<16x16xf32>
    %cst_8 = arith.constant 1.67326319 : f32
    %13 = vector.broadcast %cst_8 : f32 to vector<16x16xf32>
    %14 = arith.mulf %13, %12 : vector<16x16xf32>
    %15 = arith.select %7, %5, %14 : vector<16x16xi1>, vector<16x16xf32>
    %cst_9 = arith.constant 1.05070102 : f32
    %16 = vector.broadcast %cst_9 : f32 to vector<16x16xf32>
    %17 = arith.mulf %16, %15 : vector<16x16xf32>
    %c0_10 = arith.constant 0 : index
    %c0_11 = arith.constant 0 : index
    %18 = vector.load %arg4[%c0_10, %c0_11] : memref<16x16xf32, #tpu.memory_space<vmem>>, vector<16x16xf32>
    tpu.vector_store %arg4[%c0_10, %c0_11], %17 {strides = array<i32>} : memref<16x16xf32, #tpu.memory_space<vmem>>, vector<16x16xf32>,
    return
  }
  func.func @transform_0(%arg0: i32) -> (i32, i32) {
    %c0_i32 = arith.constant 0 : i32
    %c0_i32_0 = arith.constant 0 : i32
    %c0_i32_1 = arith.constant 0 : i32
    return %c0_i32, %c0_i32_0 : i32, i32
  }
  func.func @transform_1(%arg0: i32) -> (i32, i32) {
    %c0_i32 = arith.constant 0 : i32
    %c0_i32_0 = arith.constant 0 : i32
    %c0_i32_1 = arith.constant 0 : i32
    return %c0_i32, %c0_i32_0 : i32, i32
  }
  func.func @transform_2(%arg0: i32) -> (i32, i32) {
    %c0_i32 = arith.constant 0 : i32
    %c0_i32_0 = arith.constant 0 : i32
    %c0_i32_1 = arith.constant 0 : i32
    return %c0_i32, %c0_i32_0 : i32, i32
  }
  func.func @transform_3(%arg0: i32) -> (i32, i32) {
    %c0_i32 = arith.constant 0 : i32
    %c0_i32_0 = arith.constant 0 : i32
    %c0_i32_1 = arith.constant 0 : i32
    return %c0_i32, %c0_i32_0 : i32, i32
  }
}

module attributes {stable_mosaic.version = 11 : i64} {
  func.func @_convt_gate_kernel(%arg0: i32, %arg1: memref<16x16xbf16, #tpu.memory_space<vmem>>, %arg2: memref<16x32xbf16, #tpu.memory_space<vmem>>, %arg3: memref<1x32xf32, #tpu.memory_space<vmem>>, %arg4: memref<16x32xf32, #tpu.memory_space<vmem>>, %arg5: memref<16x32xf32, #tpu.memory_space<vmem>>, %arg6: memref<16x32xf32, #tpu.memory_space<vmem>>) attributes {dimension_semantics = [#tpu.dimension_semantics<arbitrary>], iteration_bounds = array<i64: 1>, scalar_prefetch = 0 : i64, scratch_operands = 0 : i64, tpu.core_type = #tpu.core_type<tc>, window_params = [{pipeline_mode = #tpu.pipeline_mode<synchronous>, transform_indices = @transform_0, window_bounds = array<i64: 16, 16>}, {pipeline_mode = #tpu.pipeline_mode<synchronous>, transform_indices = @transform_1, window_bounds = array<i64: 16, 32>}, {pipeline_mode = #tpu.pipeline_mode<synchronous>, transform_indices = @transform_2, window_bounds = array<i64: 1, 32>}, {pipeline_mode = #tpu.pipeline_mode<synchronous>, transform_indices = @transform_3, window_bounds = array<i64: 16, 32>}, {pipeline_mode = #tpu.pipeline_mode<synchronous>, transform_indices = @transform_4, window_bounds = array<i64: 16, 32>}, {pipeline_mode = #tpu.pipeline_mode<synchronous>, transform_indices = @transform_5, window_bounds = array<i64: 16, 32>}]} {
    %c0 = arith.constant 0 : index
    %c0_0 = arith.constant 0 : index
    %0 = vector.load %arg1[%c0, %c0_0] : memref<16x16xbf16, #tpu.memory_space<vmem>>, vector<16x16xbf16>
    %c0_1 = arith.constant 0 : index
    %c0_2 = arith.constant 0 : index
    %1 = vector.load %arg2[%c0_1, %c0_2] : memref<16x32xbf16, #tpu.memory_space<vmem>>, vector<16x32xbf16>
    %cst = arith.constant dense<0.000000e+00> : vector<16x32xf32>
    %2 = tpu.matmul %0, %1, %cst {dimension_numbers = #tpu.dot_dimension_numbers<[1], [0], [0], [1], [0, 0, 1, 1], [], []>} : vector<16x16xbf16>, vector<16x32xbf16>, vector<16x32xf32> -> vector<16x32xf32>
    %c0_3 = arith.constant 0 : index
    %c0_4 = arith.constant 0 : index
    %3 = vector.load %arg3[%c0_3, %c0_4] : memref<1x32xf32, #tpu.memory_space<vmem>>, vector<1x32xf32>
    %4 = vector.broadcast %3 : vector<1x32xf32> to vector<16x32xf32>
    %5 = arith.addf %2, %4 : vector<16x32xf32>
    %c0_5 = arith.constant 0 : index
    %c0_6 = arith.constant 0 : index
    %6 = vector.load %arg5[%c0_5, %c0_6] : memref<16x32xf32, #tpu.memory_space<vmem>>, vector<16x32xf32>
    tpu.vector_store %arg5[%c0_5, %c0_6], %5 {strides = array<i32>} : memref<16x32xf32, #tpu.memory_space<vmem>>, vector<16x32xf32>,
    %cst_7 = arith.constant 0.000000e+00 : f32
    %7 = vector.broadcast %cst_7 : f32 to vector<16x32xf32>
    %8 = arith.subf %7, %5 : vector<16x32xf32>
    %9 = math.exp %8 : vector<16x32xf32>
    %cst_8 = arith.constant 1.000000e+00 : f32
    %10 = vector.broadcast %cst_8 : f32 to vector<16x32xf32>
    %11 = arith.addf %10, %9 : vector<16x32xf32>
    %12 = tpu.reciprocal %11 {approx = true} : vector<16x32xf32> -> vector<16x32xf32>
    %c0_9 = arith.constant 0 : index
    %c0_10 = arith.constant 0 : index
    %13 = vector.load %arg4[%c0_9, %c0_10] : memref<16x32xf32, #tpu.memory_space<vmem>>, vector<16x32xf32>
    %14 = arith.mulf %12, %13 : vector<16x32xf32>
    %c0_11 = arith.constant 0 : index
    %c0_12 = arith.constant 0 : index
    %15 = vector.load %arg6[%c0_11, %c0_12] : memref<16x32xf32, #tpu.memory_space<vmem>>, vector<16x32xf32>
    tpu.vector_store %arg6[%c0_11, %c0_12], %14 {strides = array<i32>} : memref<16x32xf32, #tpu.memory_space<vmem>>, vector<16x32xf32>,
    return
  }
  func.func @transform_0(%arg0: i32) -> (i32, i32) {
    %c0_i32 = arith.constant 0 : i32
    %c0_i32_0 = arith.constant 0 : i32
    %c0_i32_1 = arith.constant 0 : i32
    return %c0_i32, %c0_i32_0 : i32, i32
  }
  func.func @transform_1(%arg0: i32) -> (i32, i32) {
    %c0_i32 = arith.constant 0 : i32
    %c0_i32_0 = arith.constant 0 : i32
    %c0_i32_1 = arith.constant 0 : i32
    return %c0_i32, %c0_i32_0 : i32, i32
  }
  func.func @transform_2(%arg0: i32) -> (i32, i32) {
    %c0_i32 = arith.constant 0 : i32
    %c0_i32_0 = arith.constant 0 : i32
    %c0_i32_1 = arith.constant 0 : i32
    return %c0_i32, %c0_i32_0 : i32, i32
  }
  func.func @transform_3(%arg0: i32) -> (i32, i32) {
    %c0_i32 = arith.constant 0 : i32
    %c0_i32_0 = arith.constant 0 : i32
    %c0_i32_1 = arith.constant 0 : i32
    return %c0_i32, %c0_i32_0 : i32, i32
  }
  func.func @transform_4(%arg0: i32) -> (i32, i32) {
    %c0_i32 = arith.constant 0 : i32
    %c0_i32_0 = arith.constant 0 : i32
    %c0_i32_1 = arith.constant 0 : i32
    return %c0_i32, %c0_i32_0 : i32, i32
  }
  func.func @transform_5(%arg0: i32) -> (i32, i32) {
    %c0_i32 = arith.constant 0 : i32
    %c0_i32_0 = arith.constant 0 : i32
    %c0_i32_1 = arith.constant 0 : i32
    return %c0_i32, %c0_i32_0 : i32, i32
  }
}

module attributes {stable_mosaic.version = 11 : i64} {
  func.func @kernel(%arg0: i32, %arg1: memref<8x16xbf16, #tpu.memory_space<vmem>>, %arg2: memref<16x32xbf16, #tpu.memory_space<vmem>>, %arg3: memref<1x32xf32, #tpu.memory_space<vmem>>, %arg4: memref<8x32xf32, #tpu.memory_space<vmem>>) attributes {dimension_semantics = [#tpu.dimension_semantics<arbitrary>], iteration_bounds = array<i64: 1>, scalar_prefetch = 0 : i64, scratch_operands = 0 : i64, tpu.core_type = #tpu.core_type<tc>, window_params = [{pipeline_mode = #tpu.pipeline_mode<synchronous>, transform_indices = @transform_0, window_bounds = array<i64: 8, 16>}, {pipeline_mode = #tpu.pipeline_mode<synchronous>, transform_indices = @transform_1, window_bounds = array<i64: 16, 32>}, {pipeline_mode = #tpu.pipeline_mode<synchronous>, transform_indices = @transform_2, window_bounds = array<i64: 1, 32>}, {pipeline_mode = #tpu.pipeline_mode<synchronous>, transform_indices = @transform_3, window_bounds = array<i64: 8, 32>}]} {
    %c0 = arith.constant 0 : index
    %c0_0 = arith.constant 0 : index
    %0 = vector.load %arg1[%c0, %c0_0] : memref<8x16xbf16, #tpu.memory_space<vmem>>, vector<8x16xbf16>
    %c0_1 = arith.constant 0 : index
    %c0_2 = arith.constant 0 : index
    %1 = vector.load %arg2[%c0_1, %c0_2] : memref<16x32xbf16, #tpu.memory_space<vmem>>, vector<16x32xbf16>
    %cst = arith.constant dense<0.000000e+00> : vector<8x32xf32>
    %2 = tpu.matmul %0, %1, %cst {dimension_numbers = #tpu.dot_dimension_numbers<[1], [0], [0], [1], [0, 0, 1, 1], [], []>} : vector<8x16xbf16>, vector<16x32xbf16>, vector<8x32xf32> -> vector<8x32xf32>
    %c0_3 = arith.constant 0 : index
    %c0_4 = arith.constant 0 : index
    %3 = vector.load %arg3[%c0_3, %c0_4] : memref<1x32xf32, #tpu.memory_space<vmem>>, vector<1x32xf32>
    %4 = vector.broadcast %3 : vector<1x32xf32> to vector<8x32xf32>
    %5 = arith.addf %2, %4 : vector<8x32xf32>
    %c0_5 = arith.constant 0 : index
    %c0_6 = arith.constant 0 : index
    %6 = vector.load %arg4[%c0_5, %c0_6] : memref<8x32xf32, #tpu.memory_space<vmem>>, vector<8x32xf32>
    tpu.vector_store %arg4[%c0_5, %c0_6], %5 {strides = array<i32>} : memref<8x32xf32, #tpu.memory_space<vmem>>, vector<8x32xf32>,
    return
  }
  func.func @transform_0(%arg0: i32) -> (i32, i32) {
    %c0_i32 = arith.constant 0 : i32
    %c0_i32_0 = arith.constant 0 : i32
    %c0_i32_1 = arith.constant 0 : i32
    return %c0_i32, %c0_i32_0 : i32, i32
  }
  func.func @transform_1(%arg0: i32) -> (i32, i32) {
    %c0_i32 = arith.constant 0 : i32
    %c0_i32_0 = arith.constant 0 : i32
    %c0_i32_1 = arith.constant 0 : i32
    return %c0_i32, %c0_i32_0 : i32, i32
  }
  func.func @transform_2(%arg0: i32) -> (i32, i32) {
    %c0_i32 = arith.constant 0 : i32
    %c0_i32_0 = arith.constant 0 : i32
    %c0_i32_1 = arith.constant 0 : i32
    return %c0_i32, %c0_i32_0 : i32, i32
  }
  func.func @transform_3(%arg0: i32) -> (i32, i32) {
    %c0_i32 = arith.constant 0 : i32
    %c0_i32_0 = arith.constant 0 : i32
    %c0_i32_1 = arith.constant 0 : i32
    return %c0_i32, %c0_i32_0 : i32, i32
  }
}

module attributes {stable_mosaic.version = 11 : i64} {
  func.func @kernel(%arg0: i32, %arg1: memref<32x32xbf16, #tpu.memory_space<vmem>>, %arg2: memref<32x16xbf16, #tpu.memory_space<vmem>>, %arg3: memref<1x16xf32, #tpu.memory_space<vmem>>, %arg4: memref<32x16xf32, #tpu.memory_space<vmem>>) attributes {dimension_semantics = [#tpu.dimension_semantics<arbitrary>], iteration_bounds = array<i64: 1>, scalar_prefetch = 0 : i64, scratch_operands = 0 : i64, tpu.core_type = #tpu.core_type<tc>, window_params = [{pipeline_mode = #tpu.pipeline_mode<synchronous>, transform_indices = @transform_0, window_bounds = array<i64: 32, 32>}, {pipeline_mode = #tpu.pipeline_mode<synchronous>, transform_indices = @transform_1, window_bounds = array<i64: 32, 16>}, {pipeline_mode = #tpu.pipeline_mode<synchronous>, transform_indices = @transform_2, window_bounds = array<i64: 1, 16>}, {pipeline_mode = #tpu.pipeline_mode<synchronous>, transform_indices = @transform_3, window_bounds = array<i64: 32, 16>}]} {
    %c0 = arith.constant 0 : index
    %c0_0 = arith.constant 0 : index
    %0 = vector.load %arg1[%c0, %c0_0] : memref<32x32xbf16, #tpu.memory_space<vmem>>, vector<32x32xbf16>
    %c0_1 = arith.constant 0 : index
    %c0_2 = arith.constant 0 : index
    %1 = vector.load %arg2[%c0_1, %c0_2] : memref<32x16xbf16, #tpu.memory_space<vmem>>, vector<32x16xbf16>
    %cst = arith.constant dense<0.000000e+00> : vector<32x16xf32>
    %2 = tpu.matmul %0, %1, %cst {dimension_numbers = #tpu.dot_dimension_numbers<[1], [0], [0], [1], [0, 0, 1, 1], [], []>} : vector<32x32xbf16>, vector<32x16xbf16>, vector<32x16xf32> -> vector<32x16xf32>
    %c0_3 = arith.constant 0 : index
    %c0_4 = arith.constant 0 : index
    %3 = vector.load %arg3[%c0_3, %c0_4] : memref<1x16xf32, #tpu.memory_space<vmem>>, vector<1x16xf32>
    %4 = vector.broadcast %3 : vector<1x16xf32> to vector<32x16xf32>
    %5 = arith.addf %2, %4 : vector<32x16xf32>
    %cst_5 = arith.constant 0.000000e+00 : f32
    %6 = vector.broadcast %cst_5 : f32 to vector<32x16xf32>
    %7 = arith.cmpf ogt, %5, %6 : vector<32x16xf32>
    %cst_6 = arith.constant 0.000000e+00 : f32
    %8 = vector.broadcast %cst_6 : f32 to vector<32x16xf32>
    %9 = arith.minimumf %5, %8 : vector<32x16xf32>
    %10 = math.exp %9 : vector<32x16xf32>
    %cst_7 = arith.constant 1.000000e+00 : f32
    %11 = vector.broadcast %cst_7 : f32 to vector<32x16xf32>
    %12 = arith.subf %10, %11 : vector<32x16xf32>
    %cst_8 = arith.constant 1.67326319 : f32
    %13 = vector.broadcast %cst_8 : f32 to vector<32x16xf32>
    %14 = arith.mulf %13, %12 : vector<32x16xf32>
    %15 = arith.select %7, %5, %14 : vector<32x16xi1>, vector<32x16xf32>
    %cst_9 = arith.constant 1.05070102 : f32
    %16 = vector.broadcast %cst_9 : f32 to vector<32x16xf32>
    %17 = arith.mulf %16, %15 : vector<32x16xf32>
    %c0_10 = arith.constant 0 : index
    %c0_11 = arith.constant 0 : index
    %18 = vector.load %arg4[%c0_10, %c0_11] : memref<32x16xf32, #tpu.memory_space<vmem>>, vector<32x16xf32>
    tpu.vector_store %arg4[%c0_10, %c0_11], %17 {strides = array<i32>} : memref<32x16xf32, #tpu.memory_space<vmem>>, vector<32x16xf32>,
    return
  }
  func.func @transform_0(%arg0: i32) -> (i32, i32) {
    %c0_i32 = arith.constant 0 : i32
    %c0_i32_0 = arith.constant 0 : i32
    %c0_i32_1 = arith.constant 0 : i32
    return %c0_i32, %c0_i32_0 : i32, i32
  }
  func.func @transform_1(%arg0: i32) -> (i32, i32) {
    %c0_i32 = arith.constant 0 : i32
    %c0_i32_0 = arith.constant 0 : i32
    %c0_i32_1 = arith.constant 0 : i32
    return %c0_i32, %c0_i32_0 : i32, i32
  }
  func.func @transform_2(%arg0: i32) -> (i32, i32) {
    %c0_i32 = arith.constant 0 : i32
    %c0_i32_0 = arith.constant 0 : i32
    %c0_i32_1 = arith.constant 0 : i32
    return %c0_i32, %c0_i32_0 : i32, i32
  }
  func.func @transform_3(%arg0: i32) -> (i32, i32) {
    %c0_i32 = arith.constant 0 : i32
    %c0_i32_0 = arith.constant 0 : i32
    %c0_i32_1 = arith.constant 0 : i32
    return %c0_i32, %c0_i32_0 : i32, i32
  }
}

module attributes {stable_mosaic.version = 11 : i64} {
  func.func @kernel(%arg0: i32, %arg1: memref<16x64xbf16, #tpu.memory_space<vmem>>, %arg2: memref<64x16xbf16, #tpu.memory_space<vmem>>, %arg3: memref<1x16xf32, #tpu.memory_space<vmem>>, %arg4: memref<16x16xf32, #tpu.memory_space<vmem>>, %arg5: memref<16x16xf32, #tpu.memory_space<vmem>>) attributes {dimension_semantics = [#tpu.dimension_semantics<arbitrary>], iteration_bounds = array<i64: 1>, scalar_prefetch = 0 : i64, scratch_operands = 0 : i64, tpu.core_type = #tpu.core_type<tc>, window_params = [{pipeline_mode = #tpu.pipeline_mode<synchronous>, transform_indices = @transform_0, window_bounds = array<i64: 16, 64>}, {pipeline_mode = #tpu.pipeline_mode<synchronous>, transform_indices = @transform_1, window_bounds = array<i64: 64, 16>}, {pipeline_mode = #tpu.pipeline_mode<synchronous>, transform_indices = @transform_2, window_bounds = array<i64: 1, 16>}, {pipeline_mode = #tpu.pipeline_mode<synchronous>, transform_indices = @transform_3, window_bounds = array<i64: 16, 16>}, {pipeline_mode = #tpu.pipeline_mode<synchronous>, transform_indices = @transform_4, window_bounds = array<i64: 16, 16>}]} {
    %c0 = arith.constant 0 : index
    %c0_0 = arith.constant 0 : index
    %0 = vector.load %arg1[%c0, %c0_0] : memref<16x64xbf16, #tpu.memory_space<vmem>>, vector<16x64xbf16>
    %c0_1 = arith.constant 0 : index
    %c0_2 = arith.constant 0 : index
    %1 = vector.load %arg2[%c0_1, %c0_2] : memref<64x16xbf16, #tpu.memory_space<vmem>>, vector<64x16xbf16>
    %cst = arith.constant dense<0.000000e+00> : vector<16x16xf32>
    %2 = tpu.matmul %0, %1, %cst {dimension_numbers = #tpu.dot_dimension_numbers<[1], [0], [0], [1], [0, 0, 1, 1], [], []>} : vector<16x64xbf16>, vector<64x16xbf16>, vector<16x16xf32> -> vector<16x16xf32>
    %c0_3 = arith.constant 0 : index
    %c0_4 = arith.constant 0 : index
    %3 = vector.load %arg3[%c0_3, %c0_4] : memref<1x16xf32, #tpu.memory_space<vmem>>, vector<1x16xf32>
    %4 = vector.broadcast %3 : vector<1x16xf32> to vector<16x16xf32>
    %5 = arith.addf %2, %4 : vector<16x16xf32>
    %c0_5 = arith.constant 0 : index
    %c0_6 = arith.constant 0 : index
    %6 = vector.load %arg4[%c0_5, %c0_6] : memref<16x16xf32, #tpu.memory_space<vmem>>, vector<16x16xf32>
    %7 = arith.addf %5, %6 : vector<16x16xf32>
    %c0_7 = arith.constant 0 : index
    %c0_8 = arith.constant 0 : index
    %8 = vector.load %arg5[%c0_7, %c0_8] : memref<16x16xf32, #tpu.memory_space<vmem>>, vector<16x16xf32>
    tpu.vector_store %arg5[%c0_7, %c0_8], %7 {strides = array<i32>} : memref<16x16xf32, #tpu.memory_space<vmem>>, vector<16x16xf32>,
    return
  }
  func.func @transform_0(%arg0: i32) -> (i32, i32) {
    %c0_i32 = arith.constant 0 : i32
    %c0_i32_0 = arith.constant 0 : i32
    %c0_i32_1 = arith.constant 0 : i32
    return %c0_i32, %c0_i32_0 : i32, i32
  }
  func.func @transform_1(%arg0: i32) -> (i32, i32) {
    %c0_i32 = arith.constant 0 : i32
    %c0_i32_0 = arith.constant 0 : i32
    %c0_i32_1 = arith.constant 0 : i32
    return %c0_i32, %c0_i32_0 : i32, i32
  }
  func.func @transform_2(%arg0: i32) -> (i32, i32) {
    %c0_i32 = arith.constant 0 : i32
    %c0_i32_0 = arith.constant 0 : i32
    %c0_i32_1 = arith.constant 0 : i32
    return %c0_i32, %c0_i32_0 : i32, i32
  }
  func.func @transform_3(%arg0: i32) -> (i32, i32) {
    %c0_i32 = arith.constant 0 : i32
    %c0_i32_0 = arith.constant 0 : i32
    %c0_i32_1 = arith.constant 0 : i32
    return %c0_i32, %c0_i32_0 : i32, i32
  }
  func.func @transform_4(%arg0: i32) -> (i32, i32) {
    %c0_i32 = arith.constant 0 : i32
    %c0_i32_0 = arith.constant 0 : i32
    %c0_i32_1 = arith.constant 0 : i32
    return %c0_i32, %c0_i32_0 : i32, i32
  }
}

module attributes {stable_mosaic.version = 11 : i64} {
  func.func @kernel(%arg0: i32, %arg1: memref<16x16xbf16, #tpu.memory_space<vmem>>, %arg2: memref<16x32xbf16, #tpu.memory_space<vmem>>, %arg3: memref<1x32xf32, #tpu.memory_space<vmem>>, %arg4: memref<16x32xf32, #tpu.memory_space<vmem>>) attributes {dimension_semantics = [#tpu.dimension_semantics<arbitrary>], iteration_bounds = array<i64: 1>, scalar_prefetch = 0 : i64, scratch_operands = 0 : i64, tpu.core_type = #tpu.core_type<tc>, window_params = [{pipeline_mode = #tpu.pipeline_mode<synchronous>, transform_indices = @transform_0, window_bounds = array<i64: 16, 16>}, {pipeline_mode = #tpu.pipeline_mode<synchronous>, transform_indices = @transform_1, window_bounds = array<i64: 16, 32>}, {pipeline_mode = #tpu.pipeline_mode<synchronous>, transform_indices = @transform_2, window_bounds = array<i64: 1, 32>}, {pipeline_mode = #tpu.pipeline_mode<synchronous>, transform_indices = @transform_3, window_bounds = array<i64: 16, 32>}]} {
    %c0 = arith.constant 0 : index
    %c0_0 = arith.constant 0 : index
    %0 = vector.load %arg1[%c0, %c0_0] : memref<16x16xbf16, #tpu.memory_space<vmem>>, vector<16x16xbf16>
    %c0_1 = arith.constant 0 : index
    %c0_2 = arith.constant 0 : index
    %1 = vector.load %arg2[%c0_1, %c0_2] : memref<16x32xbf16, #tpu.memory_space<vmem>>, vector<16x32xbf16>
    %cst = arith.constant dense<0.000000e+00> : vector<16x32xf32>
    %2 = tpu.matmul %0, %1, %cst {dimension_numbers = #tpu.dot_dimension_numbers<[1], [0], [0], [1], [0, 0, 1, 1], [], []>} : vector<16x16xbf16>, vector<16x32xbf16>, vector<16x32xf32> -> vector<16x32xf32>
    %c0_3 = arith.constant 0 : index
    %c0_4 = arith.constant 0 : index
    %3 = vector.load %arg3[%c0_3, %c0_4] : memref<1x32xf32, #tpu.memory_space<vmem>>, vector<1x32xf32>
    %4 = vector.broadcast %3 : vector<1x32xf32> to vector<16x32xf32>
    %5 = arith.addf %2, %4 : vector<16x32xf32>
    %c0_5 = arith.constant 0 : index
    %c0_6 = arith.constant 0 : index
    %6 = vector.load %arg4[%c0_5, %c0_6] : memref<16x32xf32, #tpu.memory_space<vmem>>, vector<16x32xf32>
    tpu.vector_store %arg4[%c0_5, %c0_6], %5 {strides = array<i32>} : memref<16x32xf32, #tpu.memory_space<vmem>>, vector<16x32xf32>,
    return
  }
  func.func @transform_0(%arg0: i32) -> (i32, i32) {
    %c0_i32 = arith.constant 0 : i32
    %c0_i32_0 = arith.constant 0 : i32
    %c0_i32_1 = arith.constant 0 : i32
    return %c0_i32, %c0_i32_0 : i32, i32
  }
  func.func @transform_1(%arg0: i32) -> (i32, i32) {
    %c0_i32 = arith.constant 0 : i32
    %c0_i32_0 = arith.constant 0 : i32
    %c0_i32_1 = arith.constant 0 : i32
    return %c0_i32, %c0_i32_0 : i32, i32
  }
  func.func @transform_2(%arg0: i32) -> (i32, i32) {
    %c0_i32 = arith.constant 0 : i32
    %c0_i32_0 = arith.constant 0 : i32
    %c0_i32_1 = arith.constant 0 : i32
    return %c0_i32, %c0_i32_0 : i32, i32
  }
  func.func @transform_3(%arg0: i32) -> (i32, i32) {
    %c0_i32 = arith.constant 0 : i32
    %c0_i32_0 = arith.constant 0 : i32
    %c0_i32_1 = arith.constant 0 : i32
    return %c0_i32, %c0_i32_0 : i32, i32
  }
}

module attributes {stable_mosaic.version = 11 : i64} {
  func.func @kernel(%arg0: i32, %arg1: memref<32x64xbf16, #tpu.memory_space<vmem>>, %arg2: memref<64x16xbf16, #tpu.memory_space<vmem>>, %arg3: memref<1x16xf32, #tpu.memory_space<vmem>>, %arg4: memref<32x16xf32, #tpu.memory_space<vmem>>, %arg5: memref<32x16xf32, #tpu.memory_space<vmem>>) attributes {dimension_semantics = [#tpu.dimension_semantics<arbitrary>], iteration_bounds = array<i64: 1>, scalar_prefetch = 0 : i64, scratch_operands = 0 : i64, tpu.core_type = #tpu.core_type<tc>, window_params = [{pipeline_mode = #tpu.pipeline_mode<synchronous>, transform_indices = @transform_0, window_bounds = array<i64: 32, 64>}, {pipeline_mode = #tpu.pipeline_mode<synchronous>, transform_indices = @transform_1, window_bounds = array<i64: 64, 16>}, {pipeline_mode = #tpu.pipeline_mode<synchronous>, transform_indices = @transform_2, window_bounds = array<i64: 1, 16>}, {pipeline_mode = #tpu.pipeline_mode<synchronous>, transform_indices = @transform_3, window_bounds = array<i64: 32, 16>}, {pipeline_mode = #tpu.pipeline_mode<synchronous>, transform_indices = @transform_4, window_bounds = array<i64: 32, 16>}]} {
    %c0 = arith.constant 0 : index
    %c0_0 = arith.constant 0 : index
    %0 = vector.load %arg1[%c0, %c0_0] : memref<32x64xbf16, #tpu.memory_space<vmem>>, vector<32x64xbf16>
    %c0_1 = arith.constant 0 : index
    %c0_2 = arith.constant 0 : index
    %1 = vector.load %arg2[%c0_1, %c0_2] : memref<64x16xbf16, #tpu.memory_space<vmem>>, vector<64x16xbf16>
    %cst = arith.constant dense<0.000000e+00> : vector<32x16xf32>
    %2 = tpu.matmul %0, %1, %cst {dimension_numbers = #tpu.dot_dimension_numbers<[1], [0], [0], [1], [0, 0, 1, 1], [], []>} : vector<32x64xbf16>, vector<64x16xbf16>, vector<32x16xf32> -> vector<32x16xf32>
    %c0_3 = arith.constant 0 : index
    %c0_4 = arith.constant 0 : index
    %3 = vector.load %arg3[%c0_3, %c0_4] : memref<1x16xf32, #tpu.memory_space<vmem>>, vector<1x16xf32>
    %4 = vector.broadcast %3 : vector<1x16xf32> to vector<32x16xf32>
    %5 = arith.addf %2, %4 : vector<32x16xf32>
    %c0_5 = arith.constant 0 : index
    %c0_6 = arith.constant 0 : index
    %6 = vector.load %arg4[%c0_5, %c0_6] : memref<32x16xf32, #tpu.memory_space<vmem>>, vector<32x16xf32>
    %7 = arith.addf %5, %6 : vector<32x16xf32>
    %c0_7 = arith.constant 0 : index
    %c0_8 = arith.constant 0 : index
    %8 = vector.load %arg5[%c0_7, %c0_8] : memref<32x16xf32, #tpu.memory_space<vmem>>, vector<32x16xf32>
    tpu.vector_store %arg5[%c0_7, %c0_8], %7 {strides = array<i32>} : memref<32x16xf32, #tpu.memory_space<vmem>>, vector<32x16xf32>,
    return
  }
  func.func @transform_0(%arg0: i32) -> (i32, i32) {
    %c0_i32 = arith.constant 0 : i32
    %c0_i32_0 = arith.constant 0 : i32
    %c0_i32_1 = arith.constant 0 : i32
    return %c0_i32, %c0_i32_0 : i32, i32
  }
  func.func @transform_1(%arg0: i32) -> (i32, i32) {
    %c0_i32 = arith.constant 0 : i32
    %c0_i32_0 = arith.constant 0 : i32
    %c0_i32_1 = arith.constant 0 : i32
    return %c0_i32, %c0_i32_0 : i32, i32
  }
  func.func @transform_2(%arg0: i32) -> (i32, i32) {
    %c0_i32 = arith.constant 0 : i32
    %c0_i32_0 = arith.constant 0 : i32
    %c0_i32_1 = arith.constant 0 : i32
    return %c0_i32, %c0_i32_0 : i32, i32
  }
  func.func @transform_3(%arg0: i32) -> (i32, i32) {
    %c0_i32 = arith.constant 0 : i32
    %c0_i32_0 = arith.constant 0 : i32
    %c0_i32_1 = arith.constant 0 : i32
    return %c0_i32, %c0_i32_0 : i32, i32
  }
  func.func @transform_4(%arg0: i32) -> (i32, i32) {
    %c0_i32 = arith.constant 0 : i32
    %c0_i32_0 = arith.constant 0 : i32
    %c0_i32_1 = arith.constant 0 : i32
    return %c0_i32, %c0_i32_0 : i32, i32
  }
}

module attributes {stable_mosaic.version = 11 : i64} {
  func.func @kernel(%arg0: i32, %arg1: memref<32x16xbf16, #tpu.memory_space<vmem>>, %arg2: memref<16x32xbf16, #tpu.memory_space<vmem>>, %arg3: memref<1x32xf32, #tpu.memory_space<vmem>>, %arg4: memref<32x32xf32, #tpu.memory_space<vmem>>) attributes {dimension_semantics = [#tpu.dimension_semantics<arbitrary>], iteration_bounds = array<i64: 1>, scalar_prefetch = 0 : i64, scratch_operands = 0 : i64, tpu.core_type = #tpu.core_type<tc>, window_params = [{pipeline_mode = #tpu.pipeline_mode<synchronous>, transform_indices = @transform_0, window_bounds = array<i64: 32, 16>}, {pipeline_mode = #tpu.pipeline_mode<synchronous>, transform_indices = @transform_1, window_bounds = array<i64: 16, 32>}, {pipeline_mode = #tpu.pipeline_mode<synchronous>, transform_indices = @transform_2, window_bounds = array<i64: 1, 32>}, {pipeline_mode = #tpu.pipeline_mode<synchronous>, transform_indices = @transform_3, window_bounds = array<i64: 32, 32>}]} {
    %c0 = arith.constant 0 : index
    %c0_0 = arith.constant 0 : index
    %0 = vector.load %arg1[%c0, %c0_0] : memref<32x16xbf16, #tpu.memory_space<vmem>>, vector<32x16xbf16>
    %c0_1 = arith.constant 0 : index
    %c0_2 = arith.constant 0 : index
    %1 = vector.load %arg2[%c0_1, %c0_2] : memref<16x32xbf16, #tpu.memory_space<vmem>>, vector<16x32xbf16>
    %cst = arith.constant dense<0.000000e+00> : vector<32x32xf32>
    %2 = tpu.matmul %0, %1, %cst {dimension_numbers = #tpu.dot_dimension_numbers<[1], [0], [0], [1], [0, 0, 1, 1], [], []>} : vector<32x16xbf16>, vector<16x32xbf16>, vector<32x32xf32> -> vector<32x32xf32>
    %c0_3 = arith.constant 0 : index
    %c0_4 = arith.constant 0 : index
    %3 = vector.load %arg3[%c0_3, %c0_4] : memref<1x32xf32, #tpu.memory_space<vmem>>, vector<1x32xf32>
    %4 = vector.broadcast %3 : vector<1x32xf32> to vector<32x32xf32>
    %5 = arith.addf %2, %4 : vector<32x32xf32>
    %c0_5 = arith.constant 0 : index
    %c0_6 = arith.constant 0 : index
    %6 = vector.load %arg4[%c0_5, %c0_6] : memref<32x32xf32, #tpu.memory_space<vmem>>, vector<32x32xf32>
    tpu.vector_store %arg4[%c0_5, %c0_6], %5 {strides = array<i32>} : memref<32x32xf32, #tpu.memory_space<vmem>>, vector<32x32xf32>,
    return
  }
  func.func @transform_0(%arg0: i32) -> (i32, i32) {
    %c0_i32 = arith.constant 0 : i32
    %c0_i32_0 = arith.constant 0 : i32
    %c0_i32_1 = arith.constant 0 : i32
    return %c0_i32, %c0_i32_0 : i32, i32
  }
  func.func @transform_1(%arg0: i32) -> (i32, i32) {
    %c0_i32 = arith.constant 0 : i32
    %c0_i32_0 = arith.constant 0 : i32
    %c0_i32_1 = arith.constant 0 : i32
    return %c0_i32, %c0_i32_0 : i32, i32
  }
  func.func @transform_2(%arg0: i32) -> (i32, i32) {
    %c0_i32 = arith.constant 0 : i32
    %c0_i32_0 = arith.constant 0 : i32
    %c0_i32_1 = arith.constant 0 : i32
    return %c0_i32, %c0_i32_0 : i32, i32
  }
  func.func @transform_3(%arg0: i32) -> (i32, i32) {
    %c0_i32 = arith.constant 0 : i32
    %c0_i32_0 = arith.constant 0 : i32
    %c0_i32_1 = arith.constant 0 : i32
    return %c0_i32, %c0_i32_0 : i32, i32
  }
}

module attributes {stable_mosaic.version = 11 : i64} {
  func.func @kernel(%arg0: i32, %arg1: memref<64x64xbf16, #tpu.memory_space<vmem>>, %arg2: memref<64x16xbf16, #tpu.memory_space<vmem>>, %arg3: memref<1x16xf32, #tpu.memory_space<vmem>>, %arg4: memref<64x16xf32, #tpu.memory_space<vmem>>) attributes {dimension_semantics = [#tpu.dimension_semantics<arbitrary>], iteration_bounds = array<i64: 1>, scalar_prefetch = 0 : i64, scratch_operands = 0 : i64, tpu.core_type = #tpu.core_type<tc>, window_params = [{pipeline_mode = #tpu.pipeline_mode<synchronous>, transform_indices = @transform_0, window_bounds = array<i64: 64, 64>}, {pipeline_mode = #tpu.pipeline_mode<synchronous>, transform_indices = @transform_1, window_bounds = array<i64: 64, 16>}, {pipeline_mode = #tpu.pipeline_mode<synchronous>, transform_indices = @transform_2, window_bounds = array<i64: 1, 16>}, {pipeline_mode = #tpu.pipeline_mode<synchronous>, transform_indices = @transform_3, window_bounds = array<i64: 64, 16>}]} {
    %c0 = arith.constant 0 : index
    %c0_0 = arith.constant 0 : index
    %0 = vector.load %arg1[%c0, %c0_0] : memref<64x64xbf16, #tpu.memory_space<vmem>>, vector<64x64xbf16>
    %c0_1 = arith.constant 0 : index
    %c0_2 = arith.constant 0 : index
    %1 = vector.load %arg2[%c0_1, %c0_2] : memref<64x16xbf16, #tpu.memory_space<vmem>>, vector<64x16xbf16>
    %cst = arith.constant dense<0.000000e+00> : vector<64x16xf32>
    %2 = tpu.matmul %0, %1, %cst {dimension_numbers = #tpu.dot_dimension_numbers<[1], [0], [0], [1], [0, 0, 1, 1], [], []>} : vector<64x64xbf16>, vector<64x16xbf16>, vector<64x16xf32> -> vector<64x16xf32>
    %c0_3 = arith.constant 0 : index
    %c0_4 = arith.constant 0 : index
    %3 = vector.load %arg3[%c0_3, %c0_4] : memref<1x16xf32, #tpu.memory_space<vmem>>, vector<1x16xf32>
    %4 = vector.broadcast %3 : vector<1x16xf32> to vector<64x16xf32>
    %5 = arith.addf %2, %4 : vector<64x16xf32>
    %c0_5 = arith.constant 0 : index
    %c0_6 = arith.constant 0 : index
    %6 = vector.load %arg4[%c0_5, %c0_6] : memref<64x16xf32, #tpu.memory_space<vmem>>, vector<64x16xf32>
    tpu.vector_store %arg4[%c0_5, %c0_6], %5 {strides = array<i32>} : memref<64x16xf32, #tpu.memory_space<vmem>>, vector<64x16xf32>,
    return
  }
  func.func @transform_0(%arg0: i32) -> (i32, i32) {
    %c0_i32 = arith.constant 0 : i32
    %c0_i32_0 = arith.constant 0 : i32
    %c0_i32_1 = arith.constant 0 : i32
    return %c0_i32, %c0_i32_0 : i32, i32
  }
  func.func @transform_1(%arg0: i32) -> (i32, i32) {
    %c0_i32 = arith.constant 0 : i32
    %c0_i32_0 = arith.constant 0 : i32
    %c0_i32_1 = arith.constant 0 : i32
    return %c0_i32, %c0_i32_0 : i32, i32
  }
  func.func @transform_2(%arg0: i32) -> (i32, i32) {
    %c0_i32 = arith.constant 0 : i32
    %c0_i32_0 = arith.constant 0 : i32
    %c0_i32_1 = arith.constant 0 : i32
    return %c0_i32, %c0_i32_0 : i32, i32
  }
  func.func @transform_3(%arg0: i32) -> (i32, i32) {
    %c0_i32 = arith.constant 0 : i32
    %c0_i32_0 = arith.constant 0 : i32
    %c0_i32_1 = arith.constant 0 : i32
    return %c0_i32, %c0_i32_0 : i32, i32
  }
}

</mosaic_0001>

<llo_original>
// kernel: forward.61
$region0: #{forward.61}
  #allocation0 [shape = 'u32[]', space=smem, size = 0x4, offset = 0x4, fixed_abs, tag = 'smem constant byte address 0x4 - core index']
  #allocation1 [shape = 'u32[72,128]{1,0:T(1,128)}', space=vmem, size = 0x9000, scoped, tag = 'internal scratch']
  %s0 = inlined_call_operand.vmem [shape: bf16[64,256], index: 0, kind: input, shape index: {}]
  %s1 = inlined_call_operand.vmem [shape: bf16[256,16], index: 1, kind: input, shape index: {}]
  %s2 = inlined_call_operand.vmem [shape: f32[1,16], index: 2, kind: input, shape index: {}]
  %s3 = inlined_call_operand.vmem [shape: f32[64,16], index: 3, kind: output, shape index: {}]
  %s4 = sld [smem:[#allocation0]]
  $region22: #{forward.61} parent=0
    _
  %s6 = ssub.s32 1, %s4
  %s7 = scalar_select 0, %s6, %s4
  // Predicated region
  $region2: #{forward.61} parent=0 // pred_check
    _
  $region3: #{forward.61} parent=0 // pred_check_branch
    %9 = sbr.rel (0) target = $region5
  $region4: #{forward.61} parent=0 // pred_region
    _
  $region5: #{forward.61} parent=0 // pred_fallthru
    _
  // Predicated region
  $region6: #{forward.61} parent=0 // pred_check
    _
  $region7: #{forward.61} parent=0 // pred_check_branch
    %11 = sbr.rel (0) target = $region9
  $region8: #{forward.61} parent=0 // pred_region
    _
  $region9: #{forward.61} parent=0 // pred_fallthru
    _
  // Predicated region
  $region10: #{forward.61} parent=0 // pred_check
    _
  $region11: #{forward.61} parent=0 // pred_check_branch
    %13 = sbr.rel (0) target = $region13
  $region12: #{forward.61} parent=0 // pred_region
    _
  $region13: #{forward.61} parent=0 // pred_fallthru
    _
  %v14 = vld [vmem:[%s0] sm:$0xff]
  %v15 = vld [vmem:[%s0 + $0x8] sm:$0xff]
  %v16 = vld [vmem:[%s0 + $0x10] sm:$0xff]
  %v17 = vld [vmem:[%s0 + $0x18] sm:$0xff]
  %v18 = vld [vmem:[%s0 + $0x20] sm:$0xff]
  %v19 = vld [vmem:[%s0 + $0x28] sm:$0xff]
  %v20 = vld [vmem:[%s0 + $0x30] sm:$0xff]
  %v21 = vld [vmem:[%s0 + $0x38] sm:$0xff]
  %v22 = vld [vmem:[%s1] sm:$0xf]
  %v23 = vld [vmem:[%s1 + $0x4] sm:$0xf]
  %v24 = vld [vmem:[%s1 + $0x8] sm:$0xf]
  %v25 = vld [vmem:[%s1 + $0xc] sm:$0xf]
  %v26 = vld [vmem:[%s1 + $0x10] sm:$0xf]
  %v27 = vld [vmem:[%s1 + $0x14] sm:$0xf]
  %v28 = vld [vmem:[%s1 + $0x18] sm:$0xf]
  %v29 = vld [vmem:[%s1 + $0x1c] sm:$0xf]
  %v30 = vld [vmem:[%s1 + $0x20] sm:$0xf]
  %v31 = vld [vmem:[%s1 + $0x24] sm:$0xf]
  %v32 = vld [vmem:[%s1 + $0x28] sm:$0xf]
  %v33 = vld [vmem:[%s1 + $0x2c] sm:$0xf]
  %v34 = vld [vmem:[%s1 + $0x30] sm:$0xf]
  %v35 = vld [vmem:[%s1 + $0x34] sm:$0xf]
  %v36 = vld [vmem:[%s1 + $0x38] sm:$0xf]
  %v37 = vld [vmem:[%s1 + $0x3c] sm:$0xf]
  %v38 = vld [vmem:[%s1 + $0x40] sm:$0xf]
  %v39 = vld [vmem:[%s1 + $0x44] sm:$0xf]
  %v40 = vld [vmem:[%s1 + $0x48] sm:$0xf]
  %v41 = vld [vmem:[%s1 + $0x4c] sm:$0xf]
  %v42 = vld [vmem:[%s1 + $0x50] sm:$0xf]
  %v43 = vld [vmem:[%s1 + $0x54] sm:$0xf]
  %v44 = vld [vmem:[%s1 + $0x58] sm:$0xf]
  %v45 = vld [vmem:[%s1 + $0x5c] sm:$0xf]
  %v46 = vld [vmem:[%s1 + $0x60] sm:$0xf]
  %v47 = vld [vmem:[%s1 + $0x64] sm:$0xf]
  %v48 = vld [vmem:[%s1 + $0x68] sm:$0xf]
  %v49 = vld [vmem:[%s1 + $0x6c] sm:$0xf]
  %v50 = vld [vmem:[%s1 + $0x70] sm:$0xf]
  %v51 = vld [vmem:[%s1 + $0x74] sm:$0xf]
  %v52 = vld [vmem:[%s1 + $0x78] sm:$0xf]
  %v53 = vld [vmem:[%s1 + $0x7c] sm:$0xf]
  %v54 = vld [vmem:[%s2] sm:$0x1]
  %v56 = vperm.slane %v54, 0
  %v66 = vunpack.c.l.b16 %v14
  %v67 = vunpack.c.h.b16 %v14
  %v68 = vunpack.c.l.b16 %v15
  %v69 = vunpack.c.h.b16 %v15
  %v70 = vunpack.c.l.b16 %v16
  %v71 = vunpack.c.h.b16 %v16
  %v72 = vunpack.c.l.b16 %v17
  %v73 = vunpack.c.h.b16 %v17
  %v74 = vunpack.c.l.b16 %v18
  %v75 = vunpack.c.h.b16 %v18
  %v76 = vunpack.c.l.b16 %v19
  %v77 = vunpack.c.h.b16 %v19
  %v78 = vunpack.c.l.b16 %v20
  %v79 = vunpack.c.h.b16 %v20
  %v80 = vunpack.c.l.b16 %v21
  %v81 = vunpack.c.h.b16 %v21
  %v82 = vpack.c.b16 %v68, %v66
  %v83 = vpack.c.b16 %v69, %v67
  %v84 = vpack.c.b16 %v72, %v70
  %v85 = vpack.c.b16 %v73, %v71
  %v86 = vpack.c.b16 %v76, %v74
  %v87 = vpack.c.b16 %v77, %v75
  %v88 = vpack.c.b16 %v80, %v78
  %v89 = vpack.c.b16 %v81, %v79
  %v130 = vunpack.c.l.b16 %v22
  %v131 = vunpack.c.l.b16 %v23
  %v132 = vunpack.c.l.b16 %v24
  %v133 = vunpack.c.l.b16 %v25
  %v134 = vunpack.c.l.b16 %v26
  %v135 = vunpack.c.l.b16 %v27
  %v136 = vunpack.c.l.b16 %v28
  %v137 = vunpack.c.l.b16 %v29
  %v138 = vunpack.c.l.b16 %v30
  %v139 = vunpack.c.l.b16 %v31
  %v140 = vunpack.c.l.b16 %v32
  %v141 = vunpack.c.l.b16 %v33
  %v142 = vunpack.c.l.b16 %v34
  %v143 = vunpack.c.l.b16 %v35
  %v144 = vunpack.c.l.b16 %v36
  %v145 = vunpack.c.l.b16 %v37
  %v146 = vunpack.c.l.b16 %v38
  %v147 = vunpack.c.l.b16 %v39
  %v148 = vunpack.c.l.b16 %v40
  %v149 = vunpack.c.l.b16 %v41
  %v150 = vunpack.c.l.b16 %v42
  %v151 = vunpack.c.l.b16 %v43
  %v152 = vunpack.c.l.b16 %v44
  %v153 = vunpack.c.l.b16 %v45
  %v154 = vunpack.c.l.b16 %v46
  %v155 = vunpack.c.l.b16 %v47
  %v156 = vunpack.c.l.b16 %v48
  %v157 = vunpack.c.l.b16 %v49
  %v158 = vunpack.c.l.b16 %v50
  %v159 = vunpack.c.l.b16 %v51
  %v160 = vunpack.c.l.b16 %v52
  %v161 = vunpack.c.l.b16 %v53
  %v162 = vpack.c.b16 %v131, %v130
  %v163 = vpack.c.b16 %v133, %v132
  %v164 = vpack.c.b16 %v135, %v134
  %v165 = vpack.c.b16 %v137, %v136
  %v166 = vpack.c.b16 %v139, %v138
  %v167 = vpack.c.b16 %v141, %v140
  %v168 = vpack.c.b16 %v143, %v142
  %v169 = vpack.c.b16 %v145, %v144
  %v170 = vpack.c.b16 %v147, %v146
  %v171 = vpack.c.b16 %v149, %v148
  %v172 = vpack.c.b16 %v151, %v150
  %v173 = vpack.c.b16 %v153, %v152
  %v174 = vpack.c.b16 %v155, %v154
  %v175 = vpack.c.b16 %v157, %v156
  %v176 = vpack.c.b16 %v159, %v158
  %v177 = vpack.c.b16 %v161, %v160
  %194 = vmatpush.bf16.msra.mxu0 %v169
  %195 = vmatpush.bf16.msra.mxu0 %v168
  %196 = vmatpush.bf16.msra.mxu0 %v167
  %197 = vmatpush.bf16.msra.mxu0 %v166
  %198 = vmatpush.bf16.msra.mxu0 %v165
  %199 = vmatpush.bf16.msra.mxu0 %v164
  %200 = vmatpush.bf16.msra.mxu0 %v163
  %201 = vmatpush.bf16.msra.mxu0 %v162
  %202 = vmatmul.bf16.gmra.mxu0 %v82
  %v203 = vpop.f32.mrf.mxu0
  %v204 = vadd.f32 %v56, %v203
  %v205 = vpop.f32.mrf.mxu0
  %v206 = vadd.f32 %v56, %v205
  %207 = vmatmul.bf16.gmra.mxu0 %v84
  %v208 = vpop.f32.mrf.mxu0
  %v209 = vadd.f32 %v56, %v208
  %v210 = vpop.f32.mrf.mxu0
  %v211 = vadd.f32 %v56, %v210
  %212 = vmatmul.bf16.gmra.mxu0 %v86
  %v213 = vpop.f32.mrf.mxu0
  %v214 = vadd.f32 %v56, %v213
  %v215 = vpop.f32.mrf.mxu0
  %v216 = vadd.f32 %v56, %v215
  %217 = vmatmul.bf16.gmra.mxu0 %v88
  %v218 = vpop.f32.mrf.mxu0
  %v219 = vadd.f32 %v56, %v218
  %v220 = vpop.f32.mrf.mxu0
  %v221 = vadd.f32 %v56, %v220
  %222 = vdwg.mxu0
  %223 = vmatpush.bf16.msra.mxu0 %v177
  %224 = vmatpush.bf16.msra.mxu0 %v176
  %225 = vmatpush.bf16.msra.mxu0 %v175
  %226 = vmatpush.bf16.msra.mxu0 %v174
  %227 = vmatpush.bf16.msra.mxu0 %v173
  %228 = vmatpush.bf16.msra.mxu0 %v172
  %229 = vmatpush.bf16.msra.mxu0 %v171
  %230 = vmatpush.bf16.msra.mxu0 %v170
  %231 = vmatmul.bf16.gmra.mxu0 %v83
  %v232 = vpop.f32.mrf.mxu0
  %v233 = vadd.f32 %v204, %v232
  %v234 = vpop.f32.mrf.mxu0
  %v235 = vadd.f32 %v206, %v234
  %236 = vmatmul.bf16.gmra.mxu0 %v85
  %v237 = vpop.f32.mrf.mxu0
  %v238 = vadd.f32 %v209, %v237
  %v239 = vpop.f32.mrf.mxu0
  %v240 = vadd.f32 %v211, %v239
  %241 = vmatmul.bf16.gmra.mxu0 %v87
  %v242 = vpop.f32.mrf.mxu0
  %v243 = vadd.f32 %v214, %v242
  %v244 = vpop.f32.mrf.mxu0
  %v245 = vadd.f32 %v216, %v244
  %246 = vmatmul.bf16.gmra.mxu0 %v89
  %v247 = vpop.f32.mrf.mxu0
  %v248 = vadd.f32 %v219, %v247
  %v249 = vpop.f32.mrf.mxu0
  %v250 = vadd.f32 %v221, %v249
  %251 = vdwg.mxu0
  %vm252 = vcmask 130048
  %253 = vst.msk [vmem:[%s3] sm:$0xff] %vm252, %v233
  %254 = vst.msk [vmem:[%s3 + $0x8] sm:$0xff] %vm252, %v235
  %255 = vst.msk [vmem:[%s3 + $0x10] sm:$0xff] %vm252, %v238
  %256 = vst.msk [vmem:[%s3 + $0x18] sm:$0xff] %vm252, %v240
  %257 = vst.msk [vmem:[%s3 + $0x20] sm:$0xff] %vm252, %v243
  %258 = vst.msk [vmem:[%s3 + $0x28] sm:$0xff] %vm252, %v245
  %259 = vst.msk [vmem:[%s3 + $0x30] sm:$0xff] %vm252, %v248
  %260 = vst.msk [vmem:[%s3 + $0x38] sm:$0xff] %vm252, %v250
  // Predicated region
  $region14: #{forward.61} parent=0 // pred_check
    _
  $region15: #{forward.61} parent=0 // pred_check_branch
    %262 = sbr.rel (0) target = $region17
  $region16: #{forward.61} parent=0 // pred_region
    _
  $region17: #{forward.61} parent=0 // pred_fallthru
    _
  // Predicated region
  $region18: #{forward.61} parent=0 // pred_check
    _
  $region19: #{forward.61} parent=0 // pred_check_branch
    %264 = sbr.rel (0) target = $region21
  $region20: #{forward.61} parent=0 // pred_region
    _
  $region21: #{forward.61} parent=0 // pred_fallthru
    _

// kernel: forward.62
$region0: #{forward.62}
  #allocation0 [shape = 'u32[]', space=smem, size = 0x4, offset = 0x4, fixed_abs, tag = 'smem constant byte address 0x4 - core index']
  #allocation1 [shape = 'u32[72,128]{1,0:T(1,128)}', space=vmem, size = 0x9000, scoped, tag = 'internal scratch']
  %s0 = inlined_call_operand.vmem [shape: bf16[64,128], index: 0, kind: input, shape index: {}]
  %s1 = inlined_call_operand.vmem [shape: bf16[128,16], index: 1, kind: input, shape index: {}]
  %s2 = inlined_call_operand.vmem [shape: f32[1,16], index: 2, kind: input, shape index: {}]
  %s3 = inlined_call_operand.vmem [shape: f32[64,16], index: 3, kind: output, shape index: {}]
  %s4 = sld [smem:[#allocation0]]
  $region22: #{forward.62} parent=0
    _
  %s6 = ssub.s32 1, %s4
  %s7 = scalar_select 0, %s6, %s4
  // Predicated region
  $region2: #{forward.62} parent=0 // pred_check
    _
  $region3: #{forward.62} parent=0 // pred_check_branch
    %9 = sbr.rel (0) target = $region5
  $region4: #{forward.62} parent=0 // pred_region
    _
  $region5: #{forward.62} parent=0 // pred_fallthru
    _
  // Predicated region
  $region6: #{forward.62} parent=0 // pred_check
    _
  $region7: #{forward.62} parent=0 // pred_check_branch
    %11 = sbr.rel (0) target = $region9
  $region8: #{forward.62} parent=0 // pred_region
    _
  $region9: #{forward.62} parent=0 // pred_fallthru
    _
  // Predicated region
  $region10: #{forward.62} parent=0 // pred_check
    _
  $region11: #{forward.62} parent=0 // pred_check_branch
    %13 = sbr.rel (0) target = $region13
  $region12: #{forward.62} parent=0 // pred_region
    _
  $region13: #{forward.62} parent=0 // pred_fallthru
    _
  %v14 = vld [vmem:[%s0] sm:$0xf]
  %v15 = vld [vmem:[%s0 + $0x4] sm:$0xf]
  %v16 = vld [vmem:[%s0 + $0x8] sm:$0xf]
  %v17 = vld [vmem:[%s0 + $0xc] sm:$0xf]
  %v18 = vld [vmem:[%s0 + $0x10] sm:$0xf]
  %v19 = vld [vmem:[%s0 + $0x14] sm:$0xf]
  %v20 = vld [vmem:[%s0 + $0x18] sm:$0xf]
  %v21 = vld [vmem:[%s0 + $0x1c] sm:$0xf]
  %v22 = vld [vmem:[%s1] sm:$0xf]
  %v23 = vld [vmem:[%s1 + $0x4] sm:$0xf]
  %v24 = vld [vmem:[%s1 + $0x8] sm:$0xf]
  %v25 = vld [vmem:[%s1 + $0xc] sm:$0xf]
  %v26 = vld [vmem:[%s1 + $0x10] sm:$0xf]
  %v27 = vld [vmem:[%s1 + $0x14] sm:$0xf]
  %v28 = vld [vmem:[%s1 + $0x18] sm:$0xf]
  %v29 = vld [vmem:[%s1 + $0x1c] sm:$0xf]
  %v30 = vld [vmem:[%s1 + $0x20] sm:$0xf]
  %v31 = vld [vmem:[%s1 + $0x24] sm:$0xf]
  %v32 = vld [vmem:[%s1 + $0x28] sm:$0xf]
  %v33 = vld [vmem:[%s1 + $0x2c] sm:$0xf]
  %v34 = vld [vmem:[%s1 + $0x30] sm:$0xf]
  %v35 = vld [vmem:[%s1 + $0x34] sm:$0xf]
  %v36 = vld [vmem:[%s1 + $0x38] sm:$0xf]
  %v37 = vld [vmem:[%s1 + $0x3c] sm:$0xf]
  %v38 = vld [vmem:[%s2] sm:$0x1]
  %v40 = vperm.slane %v38, 0
  %v50 = vunpack.c.l.b16 %v14
  %v51 = vunpack.c.l.b16 %v15
  %v52 = vunpack.c.l.b16 %v16
  %v53 = vunpack.c.l.b16 %v17
  %v54 = vunpack.c.l.b16 %v18
  %v55 = vunpack.c.l.b16 %v19
  %v56 = vunpack.c.l.b16 %v20
  %v57 = vunpack.c.l.b16 %v21
  %v58 = vpack.c.b16 %v51, %v50
  %v59 = vpack.c.b16 %v53, %v52
  %v60 = vpack.c.b16 %v55, %v54
  %v61 = vpack.c.b16 %v57, %v56
  %v82 = vunpack.c.l.b16 %v22
  %v83 = vunpack.c.l.b16 %v23
  %v84 = vunpack.c.l.b16 %v24
  %v85 = vunpack.c.l.b16 %v25
  %v86 = vunpack.c.l.b16 %v26
  %v87 = vunpack.c.l.b16 %v27
  %v88 = vunpack.c.l.b16 %v28
  %v89 = vunpack.c.l.b16 %v29
  %v90 = vunpack.c.l.b16 %v30
  %v91 = vunpack.c.l.b16 %v31
  %v92 = vunpack.c.l.b16 %v32
  %v93 = vunpack.c.l.b16 %v33
  %v94 = vunpack.c.l.b16 %v34
  %v95 = vunpack.c.l.b16 %v35
  %v96 = vunpack.c.l.b16 %v36
  %v97 = vunpack.c.l.b16 %v37
  %v98 = vpack.c.b16 %v83, %v82
  %v99 = vpack.c.b16 %v85, %v84
  %v100 = vpack.c.b16 %v87, %v86
  %v101 = vpack.c.b16 %v89, %v88
  %v102 = vpack.c.b16 %v91, %v90
  %v103 = vpack.c.b16 %v93, %v92
  %v104 = vpack.c.b16 %v95, %v94
  %v105 = vpack.c.b16 %v97, %v96
  %114 = vmatpush.bf16.msra.mxu0 %v105
  %115 = vmatpush.bf16.msra.mxu0 %v104
  %116 = vmatpush.bf16.msra.mxu0 %v103
  %117 = vmatpush.bf16.msra.mxu0 %v102
  %118 = vmatpush.bf16.msra.mxu0 %v101
  %119 = vmatpush.bf16.msra.mxu0 %v100
  %120 = vmatpush.bf16.msra.mxu0 %v99
  %121 = vmatpush.bf16.msra.mxu0 %v98
  %122 = vmatmul.bf16.gmra.mxu0 %v58
  %v123 = vpop.f32.mrf.mxu0
  %v124 = vadd.f32 %v40, %v123
  %v125 = vpop.f32.mrf.mxu0
  %v126 = vadd.f32 %v40, %v125
  %127 = vmatmul.bf16.gmra.mxu0 %v59
  %v128 = vpop.f32.mrf.mxu0
  %v129 = vadd.f32 %v40, %v128
  %v130 = vpop.f32.mrf.mxu0
  %v131 = vadd.f32 %v40, %v130
  %132 = vmatmul.bf16.gmra.mxu0 %v60
  %v133 = vpop.f32.mrf.mxu0
  %v134 = vadd.f32 %v40, %v133
  %v135 = vpop.f32.mrf.mxu0
  %v136 = vadd.f32 %v40, %v135
  %137 = vmatmul.bf16.gmra.mxu0 %v61
  %v138 = vpop.f32.mrf.mxu0
  %v139 = vadd.f32 %v40, %v138
  %v140 = vpop.f32.mrf.mxu0
  %v141 = vadd.f32 %v40, %v140
  %142 = vdwg.mxu0
  %vm143 = vcmask 130048
  %144 = vst.msk [vmem:[%s3] sm:$0xff] %vm143, %v124
  %145 = vst.msk [vmem:[%s3 + $0x8] sm:$0xff] %vm143, %v126
  %146 = vst.msk [vmem:[%s3 + $0x10] sm:$0xff] %vm143, %v129
  %147 = vst.msk [vmem:[%s3 + $0x18] sm:$0xff] %vm143, %v131
  %148 = vst.msk [vmem:[%s3 + $0x20] sm:$0xff] %vm143, %v134
  %149 = vst.msk [vmem:[%s3 + $0x28] sm:$0xff] %vm143, %v136
  %150 = vst.msk [vmem:[%s3 + $0x30] sm:$0xff] %vm143, %v139
  %151 = vst.msk [vmem:[%s3 + $0x38] sm:$0xff] %vm143, %v141
  // Predicated region
  $region14: #{forward.62} parent=0 // pred_check
    _
  $region15: #{forward.62} parent=0 // pred_check_branch
    %153 = sbr.rel (0) target = $region17
  $region16: #{forward.62} parent=0 // pred_region
    _
  $region17: #{forward.62} parent=0 // pred_fallthru
    _
  // Predicated region
  $region18: #{forward.62} parent=0 // pred_check
    _
  $region19: #{forward.62} parent=0 // pred_check_branch
    %155 = sbr.rel (0) target = $region21
  $region20: #{forward.62} parent=0 // pred_region
    _
  $region21: #{forward.62} parent=0 // pred_fallthru
    _

// kernel: forward.63
$region0: #{forward.63}
  #allocation0 [shape = 'u32[]', space=smem, size = 0x4, offset = 0x4, fixed_abs, tag = 'smem constant byte address 0x4 - core index']
  #allocation1 [shape = 'u32[72,128]{1,0:T(1,128)}', space=vmem, size = 0x9000, scoped, tag = 'internal scratch']
  %s0 = inlined_call_operand.vmem [shape: bf16[64,176], index: 0, kind: input, shape index: {}]
  %s1 = inlined_call_operand.vmem [shape: bf16[176,16], index: 1, kind: input, shape index: {}]
  %s2 = inlined_call_operand.vmem [shape: f32[1,16], index: 2, kind: input, shape index: {}]
  %s3 = inlined_call_operand.vmem [shape: f32[64,16], index: 3, kind: output, shape index: {}]
  %s4 = sld [smem:[#allocation0]]
  $region22: #{forward.63} parent=0
    _
  %s6 = ssub.s32 1, %s4
  %s7 = scalar_select 0, %s6, %s4
  // Predicated region
  $region2: #{forward.63} parent=0 // pred_check
    _
  $region3: #{forward.63} parent=0 // pred_check_branch
    %9 = sbr.rel (0) target = $region5
  $region4: #{forward.63} parent=0 // pred_region
    _
  $region5: #{forward.63} parent=0 // pred_fallthru
    _
  // Predicated region
  $region6: #{forward.63} parent=0 // pred_check
    _
  $region7: #{forward.63} parent=0 // pred_check_branch
    %11 = sbr.rel (0) target = $region9
  $region8: #{forward.63} parent=0 // pred_region
    _
  $region9: #{forward.63} parent=0 // pred_fallthru
    _
  // Predicated region
  $region10: #{forward.63} parent=0 // pred_check
    _
  $region11: #{forward.63} parent=0 // pred_check_branch
    %13 = sbr.rel (0) target = $region13
  $region12: #{forward.63} parent=0 // pred_region
    _
  $region13: #{forward.63} parent=0 // pred_fallthru
    _
  %v15 = vld [vmem:[%s0] sm:$0xff]
  %v16 = vld [vmem:[%s0 + $0x8] sm:$0xff]
  %v17 = vld [vmem:[%s0 + $0x10] sm:$0xff]
  %v18 = vld [vmem:[%s0 + $0x18] sm:$0xff]
  %v19 = vld [vmem:[%s0 + $0x20] sm:$0xff]
  %v20 = vld [vmem:[%s0 + $0x28] sm:$0xff]
  %v21 = vld [vmem:[%s0 + $0x30] sm:$0xff]
  %v22 = vld [vmem:[%s0 + $0x38] sm:$0xff]
  %v23 = vld [vmem:[%s1] sm:$0xf]
  %v24 = vld [vmem:[%s1 + $0x4] sm:$0xf]
  %v25 = vld [vmem:[%s1 + $0x8] sm:$0xf]
  %v26 = vld [vmem:[%s1 + $0xc] sm:$0xf]
  %v27 = vld [vmem:[%s1 + $0x10] sm:$0xf]
  %v28 = vld [vmem:[%s1 + $0x14] sm:$0xf]
  %v29 = vld [vmem:[%s1 + $0x18] sm:$0xf]
  %v30 = vld [vmem:[%s1 + $0x1c] sm:$0xf]
  %v31 = vld [vmem:[%s1 + $0x20] sm:$0xf]
  %v32 = vld [vmem:[%s1 + $0x24] sm:$0xf]
  %v33 = vld [vmem:[%s1 + $0x28] sm:$0xf]
  %v34 = vld [vmem:[%s1 + $0x2c] sm:$0xf]
  %v35 = vld [vmem:[%s1 + $0x30] sm:$0xf]
  %v36 = vld [vmem:[%s1 + $0x34] sm:$0xf]
  %v37 = vld [vmem:[%s1 + $0x38] sm:$0xf]
  %v38 = vld [vmem:[%s1 + $0x3c] sm:$0xf]
  %v39 = vld [vmem:[%s1 + $0x40] sm:$0xf]
  %v40 = vld [vmem:[%s1 + $0x44] sm:$0xf]
  %v41 = vld [vmem:[%s1 + $0x48] sm:$0xf]
  %v42 = vld [vmem:[%s1 + $0x4c] sm:$0xf]
  %v43 = vld [vmem:[%s1 + $0x50] sm:$0xf]
  %v44 = vld [vmem:[%s1 + $0x54] sm:$0xf]
  %v45 = vld [vmem:[%s2] sm:$0x1]
  %v47 = vperm.slane %v45, 0
  %v57 = vunpack.c.l.b16 %v15
  %v58 = vunpack.c.h.b16 %v15
  %v59 = vunpack.c.l.b16 %v16
  %v60 = vunpack.c.h.b16 %v16
  %v61 = vunpack.c.l.b16 %v17
  %v62 = vunpack.c.h.b16 %v17
  %v63 = vunpack.c.l.b16 %v18
  %v64 = vunpack.c.h.b16 %v18
  %v65 = vunpack.c.l.b16 %v19
  %v66 = vunpack.c.h.b16 %v19
  %v67 = vunpack.c.l.b16 %v20
  %v68 = vunpack.c.h.b16 %v20
  %v69 = vunpack.c.l.b16 %v21
  %v70 = vunpack.c.h.b16 %v21
  %v71 = vunpack.c.l.b16 %v22
  %v72 = vunpack.c.h.b16 %v22
  %v73 = vpack.c.b16 %v59, %v57
  %v74 = vpack.c.b16 %v60, %v58
  %v75 = vpack.c.b16 %v63, %v61
  %v76 = vpack.c.b16 %v64, %v62
  %v77 = vpack.c.b16 %v67, %v65
  %v78 = vpack.c.b16 %v68, %v66
  %v79 = vpack.c.b16 %v71, %v69
  %v80 = vpack.c.b16 %v72, %v70
  %v107 = vunpack.c.l.b16 %v23
  %v108 = vunpack.c.l.b16 %v24
  %v109 = vunpack.c.l.b16 %v25
  %v110 = vunpack.c.l.b16 %v26
  %v111 = vunpack.c.l.b16 %v27
  %v112 = vunpack.c.l.b16 %v28
  %v113 = vunpack.c.l.b16 %v29
  %v114 = vunpack.c.l.b16 %v30
  %v115 = vunpack.c.l.b16 %v31
  %v116 = vunpack.c.l.b16 %v32
  %v117 = vunpack.c.l.b16 %v33
  %v118 = vunpack.c.l.b16 %v34
  %v119 = vunpack.c.l.b16 %v35
  %v120 = vunpack.c.l.b16 %v36
  %v121 = vunpack.c.l.b16 %v37
  %v122 = vunpack.c.l.b16 %v38
  %v123 = vunpack.c.l.b16 %v39
  %v124 = vunpack.c.l.b16 %v40
  %v125 = vunpack.c.l.b16 %v41
  %v126 = vunpack.c.l.b16 %v42
  %v127 = vunpack.c.l.b16 %v43
  %v128 = vunpack.c.l.b16 %v44
  %v129 = vpack.c.b16 %v108, %v107
  %v130 = vpack.c.b16 %v110, %v109
  %v131 = vpack.c.b16 %v112, %v111
  %v132 = vpack.c.b16 %v114, %v113
  %v133 = vpack.c.b16 %v116, %v115
  %v134 = vpack.c.b16 %v118, %v117
  %v135 = vpack.c.b16 %v120, %v119
  %v136 = vpack.c.b16 %v122, %v121
  %v137 = vpack.c.b16 %v124, %v123
  %v138 = vpack.c.b16 %v126, %v125
  %v139 = vpack.c.b16 %v128, %v127
  %vm151 = vcmask 392192
  %v153 = vsel %vm151, %v74, 0
  %v156 = vsel %vm151, %v76, 0
  %v159 = vsel %vm151, %v78, 0
  %v162 = vsel %vm151, %v80, 0
  %164 = vmatpush.bf16.msra.mxu0 %v136
  %165 = vmatpush.bf16.msra.mxu0 %v135
  %166 = vmatpush.bf16.msra.mxu0 %v134
  %167 = vmatpush.bf16.msra.mxu0 %v133
  %168 = vmatpush.bf16.msra.mxu0 %v132
  %169 = vmatpush.bf16.msra.mxu0 %v131
  %170 = vmatpush.bf16.msra.mxu0 %v130
  %171 = vmatpush.bf16.msra.mxu0 %v129
  %172 = vmatmul.bf16.gmra.mxu0 %v73
  %v173 = vpop.f32.mrf.mxu0
  %v174 = vadd.f32 %v47, %v173
  %v175 = vpop.f32.mrf.mxu0
  %v176 = vadd.f32 %v47, %v175
  %177 = vmatmul.bf16.gmra.mxu0 %v75
  %v178 = vpop.f32.mrf.mxu0
  %v179 = vadd.f32 %v47, %v178
  %v180 = vpop.f32.mrf.mxu0
  %v181 = vadd.f32 %v47, %v180
  %182 = vmatmul.bf16.gmra.mxu0 %v77
  %v183 = vpop.f32.mrf.mxu0
  %v184 = vadd.f32 %v47, %v183
  %v185 = vpop.f32.mrf.mxu0
  %v186 = vadd.f32 %v47, %v185
  %187 = vmatmul.bf16.gmra.mxu0 %v79
  %v188 = vpop.f32.mrf.mxu0
  %v189 = vadd.f32 %v47, %v188
  %v190 = vpop.f32.mrf.mxu0
  %v191 = vadd.f32 %v47, %v190
  %192 = vdwg.mxu0
  %193 = vmatpush.bf16.msra.mxu0 0
  %194 = vmatpush.bf16.msra.mxu0 0
  %195 = vmatpush.bf16.msra.mxu0 0
  %196 = vmatpush.bf16.msra.mxu0 0
  %197 = vmatpush.bf16.msra.mxu0 0
  %198 = vmatpush.bf16.msra.mxu0 %v139
  %199 = vmatpush.bf16.msra.mxu0 %v138
  %200 = vmatpush.bf16.msra.mxu0 %v137
  %201 = vmatmul.bf16.gmra.mxu0 %v153
  %v202 = vpop.f32.mrf.mxu0
  %v203 = vadd.f32 %v174, %v202
  %v204 = vpop.f32.mrf.mxu0
  %v205 = vadd.f32 %v176, %v204
  %206 = vmatmul.bf16.gmra.mxu0 %v156
  %v207 = vpop.f32.mrf.mxu0
  %v208 = vadd.f32 %v179, %v207
  %v209 = vpop.f32.mrf.mxu0
  %v210 = vadd.f32 %v181, %v209
  %211 = vmatmul.bf16.gmra.mxu0 %v159
  %v212 = vpop.f32.mrf.mxu0
  %v213 = vadd.f32 %v184, %v212
  %v214 = vpop.f32.mrf.mxu0
  %v215 = vadd.f32 %v186, %v214
  %216 = vmatmul.bf16.gmra.mxu0 %v162
  %v217 = vpop.f32.mrf.mxu0
  %v218 = vadd.f32 %v189, %v217
  %v219 = vpop.f32.mrf.mxu0
  %v220 = vadd.f32 %v191, %v219
  %221 = vdwg.mxu0
  %vm222 = vcmask 130048
  %223 = vst.msk [vmem:[%s3] sm:$0xff] %vm222, %v203
  %224 = vst.msk [vmem:[%s3 + $0x8] sm:$0xff] %vm222, %v205
  %225 = vst.msk [vmem:[%s3 + $0x10] sm:$0xff] %vm222, %v208
  %226 = vst.msk [vmem:[%s3 + $0x18] sm:$0xff] %vm222, %v210
  %227 = vst.msk [vmem:[%s3 + $0x20] sm:$0xff] %vm222, %v213
  %228 = vst.msk [vmem:[%s3 + $0x28] sm:$0xff] %vm222, %v215
  %229 = vst.msk [vmem:[%s3 + $0x30] sm:$0xff] %vm222, %v218
  %230 = vst.msk [vmem:[%s3 + $0x38] sm:$0xff] %vm222, %v220
  // Predicated region
  $region14: #{forward.63} parent=0 // pred_check
    _
  $region15: #{forward.63} parent=0 // pred_check_branch
    %232 = sbr.rel (0) target = $region17
  $region16: #{forward.63} parent=0 // pred_region
    _
  $region17: #{forward.63} parent=0 // pred_fallthru
    _
  // Predicated region
  $region18: #{forward.63} parent=0 // pred_check
    _
  $region19: #{forward.63} parent=0 // pred_check_branch
    %234 = sbr.rel (0) target = $region21
  $region20: #{forward.63} parent=0 // pred_region
    _
  $region21: #{forward.63} parent=0 // pred_fallthru
    _

// kernel: forward.66
$region0: #{forward.66}
  #allocation0 [shape = 'u32[]', space=smem, size = 0x4, offset = 0x4, fixed_abs, tag = 'smem constant byte address 0x4 - core index']
  #allocation1 [shape = 'u32[72,128]{1,0:T(1,128)}', space=vmem, size = 0x9000, scoped, tag = 'internal scratch']
  %s0 = inlined_call_operand.vmem [shape: bf16[64,160], index: 0, kind: input, shape index: {}]
  %s1 = inlined_call_operand.vmem [shape: bf16[160,16], index: 1, kind: input, shape index: {}]
  %s2 = inlined_call_operand.vmem [shape: f32[1,16], index: 2, kind: input, shape index: {}]
  %s3 = inlined_call_operand.vmem [shape: f32[64,16], index: 3, kind: output, shape index: {}]
  %s4 = sld [smem:[#allocation0]]
  $region22: #{forward.66} parent=0
    _
  %s6 = ssub.s32 1, %s4
  %s7 = scalar_select 0, %s6, %s4
  // Predicated region
  $region2: #{forward.66} parent=0 // pred_check
    _
  $region3: #{forward.66} parent=0 // pred_check_branch
    %9 = sbr.rel (0) target = $region5
  $region4: #{forward.66} parent=0 // pred_region
    _
  $region5: #{forward.66} parent=0 // pred_fallthru
    _
  // Predicated region
  $region6: #{forward.66} parent=0 // pred_check
    _
  $region7: #{forward.66} parent=0 // pred_check_branch
    %11 = sbr.rel (0) target = $region9
  $region8: #{forward.66} parent=0 // pred_region
    _
  $region9: #{forward.66} parent=0 // pred_fallthru
    _
  // Predicated region
  $region10: #{forward.66} parent=0 // pred_check
    _
  $region11: #{forward.66} parent=0 // pred_check_branch
    %13 = sbr.rel (0) target = $region13
  $region12: #{forward.66} parent=0 // pred_region
    _
  $region13: #{forward.66} parent=0 // pred_fallthru
    _
  %v15 = vld [vmem:[%s0] sm:$0xff]
  %v16 = vld [vmem:[%s0 + $0x8] sm:$0xff]
  %v17 = vld [vmem:[%s0 + $0x10] sm:$0xff]
  %v18 = vld [vmem:[%s0 + $0x18] sm:$0xff]
  %v19 = vld [vmem:[%s0 + $0x20] sm:$0xff]
  %v20 = vld [vmem:[%s0 + $0x28] sm:$0xff]
  %v21 = vld [vmem:[%s0 + $0x30] sm:$0xff]
  %v22 = vld [vmem:[%s0 + $0x38] sm:$0xff]
  %v23 = vld [vmem:[%s1] sm:$0xf]
  %v24 = vld [vmem:[%s1 + $0x4] sm:$0xf]
  %v25 = vld [vmem:[%s1 + $0x8] sm:$0xf]
  %v26 = vld [vmem:[%s1 + $0xc] sm:$0xf]
  %v27 = vld [vmem:[%s1 + $0x10] sm:$0xf]
  %v28 = vld [vmem:[%s1 + $0x14] sm:$0xf]
  %v29 = vld [vmem:[%s1 + $0x18] sm:$0xf]
  %v30 = vld [vmem:[%s1 + $0x1c] sm:$0xf]
  %v31 = vld [vmem:[%s1 + $0x20] sm:$0xf]
  %v32 = vld [vmem:[%s1 + $0x24] sm:$0xf]
  %v33 = vld [vmem:[%s1 + $0x28] sm:$0xf]
  %v34 = vld [vmem:[%s1 + $0x2c] sm:$0xf]
  %v35 = vld [vmem:[%s1 + $0x30] sm:$0xf]
  %v36 = vld [vmem:[%s1 + $0x34] sm:$0xf]
  %v37 = vld [vmem:[%s1 + $0x38] sm:$0xf]
  %v38 = vld [vmem:[%s1 + $0x3c] sm:$0xf]
  %v39 = vld [vmem:[%s1 + $0x40] sm:$0xf]
  %v40 = vld [vmem:[%s1 + $0x44] sm:$0xf]
  %v41 = vld [vmem:[%s1 + $0x48] sm:$0xf]
  %v42 = vld [vmem:[%s1 + $0x4c] sm:$0xf]
  %v43 = vld [vmem:[%s2] sm:$0x1]
  %v45 = vperm.slane %v43, 0
  %v55 = vunpack.c.l.b16 %v15
  %v56 = vunpack.c.h.b16 %v15
  %v57 = vunpack.c.l.b16 %v16
  %v58 = vunpack.c.h.b16 %v16
  %v59 = vunpack.c.l.b16 %v17
  %v60 = vunpack.c.h.b16 %v17
  %v61 = vunpack.c.l.b16 %v18
  %v62 = vunpack.c.h.b16 %v18
  %v63 = vunpack.c.l.b16 %v19
  %v64 = vunpack.c.h.b16 %v19
  %v65 = vunpack.c.l.b16 %v20
  %v66 = vunpack.c.h.b16 %v20
  %v67 = vunpack.c.l.b16 %v21
  %v68 = vunpack.c.h.b16 %v21
  %v69 = vunpack.c.l.b16 %v22
  %v70 = vunpack.c.h.b16 %v22
  %v71 = vpack.c.b16 %v57, %v55
  %v72 = vpack.c.b16 %v58, %v56
  %v73 = vpack.c.b16 %v61, %v59
  %v74 = vpack.c.b16 %v62, %v60
  %v75 = vpack.c.b16 %v65, %v63
  %v76 = vpack.c.b16 %v66, %v64
  %v77 = vpack.c.b16 %v69, %v67
  %v78 = vpack.c.b16 %v70, %v68
  %v103 = vunpack.c.l.b16 %v23
  %v104 = vunpack.c.l.b16 %v24
  %v105 = vunpack.c.l.b16 %v25
  %v106 = vunpack.c.l.b16 %v26
  %v107 = vunpack.c.l.b16 %v27
  %v108 = vunpack.c.l.b16 %v28
  %v109 = vunpack.c.l.b16 %v29
  %v110 = vunpack.c.l.b16 %v30
  %v111 = vunpack.c.l.b16 %v31
  %v112 = vunpack.c.l.b16 %v32
  %v113 = vunpack.c.l.b16 %v33
  %v114 = vunpack.c.l.b16 %v34
  %v115 = vunpack.c.l.b16 %v35
  %v116 = vunpack.c.l.b16 %v36
  %v117 = vunpack.c.l.b16 %v37
  %v118 = vunpack.c.l.b16 %v38
  %v119 = vunpack.c.l.b16 %v39
  %v120 = vunpack.c.l.b16 %v40
  %v121 = vunpack.c.l.b16 %v41
  %v122 = vunpack.c.l.b16 %v42
  %v123 = vpack.c.b16 %v104, %v103
  %v124 = vpack.c.b16 %v106, %v105
  %v125 = vpack.c.b16 %v108, %v107
  %v126 = vpack.c.b16 %v110, %v109
  %v127 = vpack.c.b16 %v112, %v111
  %v128 = vpack.c.b16 %v114, %v113
  %v129 = vpack.c.b16 %v116, %v115
  %v130 = vpack.c.b16 %v118, %v117
  %v131 = vpack.c.b16 %v120, %v119
  %v132 = vpack.c.b16 %v122, %v121
  %vm143 = vcmask 261120
  %v145 = vsel %vm143, %v72, 0
  %v148 = vsel %vm143, %v74, 0
  %v151 = vsel %vm143, %v76, 0
  %v154 = vsel %vm143, %v78, 0
  %156 = vmatpush.bf16.msra.mxu0 %v130
  %157 = vmatpush.bf16.msra.mxu0 %v129
  %158 = vmatpush.bf16.msra.mxu0 %v128
  %159 = vmatpush.bf16.msra.mxu0 %v127
  %160 = vmatpush.bf16.msra.mxu0 %v126
  %161 = vmatpush.bf16.msra.mxu0 %v125
  %162 = vmatpush.bf16.msra.mxu0 %v124
  %163 = vmatpush.bf16.msra.mxu0 %v123
  %164 = vmatmul.bf16.gmra.mxu0 %v71
  %v165 = vpop.f32.mrf.mxu0
  %v166 = vadd.f32 %v45, %v165
  %v167 = vpop.f32.mrf.mxu0
  %v168 = vadd.f32 %v45, %v167
  %169 = vmatmul.bf16.gmra.mxu0 %v73
  %v170 = vpop.f32.mrf.mxu0
  %v171 = vadd.f32 %v45, %v170
  %v172 = vpop.f32.mrf.mxu0
  %v173 = vadd.f32 %v45, %v172
  %174 = vmatmul.bf16.gmra.mxu0 %v75
  %v175 = vpop.f32.mrf.mxu0
  %v176 = vadd.f32 %v45, %v175
  %v177 = vpop.f32.mrf.mxu0
  %v178 = vadd.f32 %v45, %v177
  %179 = vmatmul.bf16.gmra.mxu0 %v77
  %v180 = vpop.f32.mrf.mxu0
  %v181 = vadd.f32 %v45, %v180
  %v182 = vpop.f32.mrf.mxu0
  %v183 = vadd.f32 %v45, %v182
  %184 = vdwg.mxu0
  %185 = vmatpush.bf16.msra.mxu0 0
  %186 = vmatpush.bf16.msra.mxu0 0
  %187 = vmatpush.bf16.msra.mxu0 0
  %188 = vmatpush.bf16.msra.mxu0 0
  %189 = vmatpush.bf16.msra.mxu0 0
  %190 = vmatpush.bf16.msra.mxu0 0
  %191 = vmatpush.bf16.msra.mxu0 %v132
  %192 = vmatpush.bf16.msra.mxu0 %v131
  %193 = vmatmul.bf16.gmra.mxu0 %v145
  %v194 = vpop.f32.mrf.mxu0
  %v195 = vadd.f32 %v166, %v194
  %v196 = vpop.f32.mrf.mxu0
  %v197 = vadd.f32 %v168, %v196
  %198 = vmatmul.bf16.gmra.mxu0 %v148
  %v199 = vpop.f32.mrf.mxu0
  %v200 = vadd.f32 %v171, %v199
  %v201 = vpop.f32.mrf.mxu0
  %v202 = vadd.f32 %v173, %v201
  %203 = vmatmul.bf16.gmra.mxu0 %v151
  %v204 = vpop.f32.mrf.mxu0
  %v205 = vadd.f32 %v176, %v204
  %v206 = vpop.f32.mrf.mxu0
  %v207 = vadd.f32 %v178, %v206
  %208 = vmatmul.bf16.gmra.mxu0 %v154
  %v209 = vpop.f32.mrf.mxu0
  %v210 = vadd.f32 %v181, %v209
  %v211 = vpop.f32.mrf.mxu0
  %v212 = vadd.f32 %v183, %v211
  %213 = vdwg.mxu0
  %vm214 = vcmask 130048
  %215 = vst.msk [vmem:[%s3] sm:$0xff] %vm214, %v195
  %216 = vst.msk [vmem:[%s3 + $0x8] sm:$0xff] %vm214, %v197
  %217 = vst.msk [vmem:[%s3 + $0x10] sm:$0xff] %vm214, %v200
  %218 = vst.msk [vmem:[%s3 + $0x18] sm:$0xff] %vm214, %v202
  %219 = vst.msk [vmem:[%s3 + $0x20] sm:$0xff] %vm214, %v205
  %220 = vst.msk [vmem:[%s3 + $0x28] sm:$0xff] %vm214, %v207
  %221 = vst.msk [vmem:[%s3 + $0x30] sm:$0xff] %vm214, %v210
  %222 = vst.msk [vmem:[%s3 + $0x38] sm:$0xff] %vm214, %v212
  // Predicated region
  $region14: #{forward.66} parent=0 // pred_check
    _
  $region15: #{forward.66} parent=0 // pred_check_branch
    %224 = sbr.rel (0) target = $region17
  $region16: #{forward.66} parent=0 // pred_region
    _
  $region17: #{forward.66} parent=0 // pred_fallthru
    _
  // Predicated region
  $region18: #{forward.66} parent=0 // pred_check
    _
  $region19: #{forward.66} parent=0 // pred_check_branch
    %226 = sbr.rel (0) target = $region21
  $region20: #{forward.66} parent=0 // pred_region
    _
  $region21: #{forward.66} parent=0 // pred_fallthru
    _

// kernel: forward.67
$region0: #{forward.67}
  #allocation0 [shape = 'u32[]', space=smem, size = 0x4, offset = 0x4, fixed_abs, tag = 'smem constant byte address 0x4 - core index']
  #allocation1 [shape = 'u32[72,128]{1,0:T(1,128)}', space=vmem, size = 0x9000, scoped, tag = 'internal scratch']
  %s0 = inlined_call_operand.vmem [shape: bf16[64,96], index: 0, kind: input, shape index: {}]
  %s1 = inlined_call_operand.vmem [shape: bf16[96,16], index: 1, kind: input, shape index: {}]
  %s2 = inlined_call_operand.vmem [shape: f32[1,16], index: 2, kind: input, shape index: {}]
  %s3 = inlined_call_operand.vmem [shape: f32[64,16], index: 3, kind: output, shape index: {}]
  %s4 = sld [smem:[#allocation0]]
  $region22: #{forward.67} parent=0
    _
  %s6 = ssub.s32 1, %s4
  %s7 = scalar_select 0, %s6, %s4
  // Predicated region
  $region2: #{forward.67} parent=0 // pred_check
    _
  $region3: #{forward.67} parent=0 // pred_check_branch
    %9 = sbr.rel (0) target = $region5
  $region4: #{forward.67} parent=0 // pred_region
    _
  $region5: #{forward.67} parent=0 // pred_fallthru
    _
  // Predicated region
  $region6: #{forward.67} parent=0 // pred_check
    _
  $region7: #{forward.67} parent=0 // pred_check_branch
    %11 = sbr.rel (0) target = $region9
  $region8: #{forward.67} parent=0 // pred_region
    _
  $region9: #{forward.67} parent=0 // pred_fallthru
    _
  // Predicated region
  $region10: #{forward.67} parent=0 // pred_check
    _
  $region11: #{forward.67} parent=0 // pred_check_branch
    %13 = sbr.rel (0) target = $region13
  $region12: #{forward.67} parent=0 // pred_region
    _
  $region13: #{forward.67} parent=0 // pred_fallthru
    _
  %v15 = vld [vmem:[%s0] sm:$0xf]
  %v16 = vld [vmem:[%s0 + $0x4] sm:$0xf]
  %v17 = vld [vmem:[%s0 + $0x8] sm:$0xf]
  %v18 = vld [vmem:[%s0 + $0xc] sm:$0xf]
  %v19 = vld [vmem:[%s0 + $0x10] sm:$0xf]
  %v20 = vld [vmem:[%s0 + $0x14] sm:$0xf]
  %v21 = vld [vmem:[%s0 + $0x18] sm:$0xf]
  %v22 = vld [vmem:[%s0 + $0x1c] sm:$0xf]
  %v23 = vld [vmem:[%s1] sm:$0xf]
  %v24 = vld [vmem:[%s1 + $0x4] sm:$0xf]
  %v25 = vld [vmem:[%s1 + $0x8] sm:$0xf]
  %v26 = vld [vmem:[%s1 + $0xc] sm:$0xf]
  %v27 = vld [vmem:[%s1 + $0x10] sm:$0xf]
  %v28 = vld [vmem:[%s1 + $0x14] sm:$0xf]
  %v29 = vld [vmem:[%s1 + $0x18] sm:$0xf]
  %v30 = vld [vmem:[%s1 + $0x1c] sm:$0xf]
  %v31 = vld [vmem:[%s1 + $0x20] sm:$0xf]
  %v32 = vld [vmem:[%s1 + $0x24] sm:$0xf]
  %v33 = vld [vmem:[%s1 + $0x28] sm:$0xf]
  %v34 = vld [vmem:[%s1 + $0x2c] sm:$0xf]
  %v35 = vld [vmem:[%s2] sm:$0x1]
  %v37 = vperm.slane %v35, 0
  %v47 = vunpack.c.l.b16 %v15
  %v48 = vunpack.c.l.b16 %v16
  %v49 = vunpack.c.l.b16 %v17
  %v50 = vunpack.c.l.b16 %v18
  %v51 = vunpack.c.l.b16 %v19
  %v52 = vunpack.c.l.b16 %v20
  %v53 = vunpack.c.l.b16 %v21
  %v54 = vunpack.c.l.b16 %v22
  %v55 = vpack.c.b16 %v48, %v47
  %v56 = vpack.c.b16 %v50, %v49
  %v57 = vpack.c.b16 %v52, %v51
  %v58 = vpack.c.b16 %v54, %v53
  %v71 = vunpack.c.l.b16 %v23
  %v72 = vunpack.c.l.b16 %v24
  %v73 = vunpack.c.l.b16 %v25
  %v74 = vunpack.c.l.b16 %v26
  %v75 = vunpack.c.l.b16 %v27
  %v76 = vunpack.c.l.b16 %v28
  %v77 = vunpack.c.l.b16 %v29
  %v78 = vunpack.c.l.b16 %v30
  %v79 = vunpack.c.l.b16 %v31
  %v80 = vunpack.c.l.b16 %v32
  %v81 = vunpack.c.l.b16 %v33
  %v82 = vunpack.c.l.b16 %v34
  %v83 = vpack.c.b16 %v72, %v71
  %v84 = vpack.c.b16 %v74, %v73
  %v85 = vpack.c.b16 %v76, %v75
  %v86 = vpack.c.b16 %v78, %v77
  %v87 = vpack.c.b16 %v80, %v79
  %v88 = vpack.c.b16 %v82, %v81
  %vm95 = vcmask 785408
  %v97 = vsel %vm95, %v55, 0
  %v100 = vsel %vm95, %v56, 0
  %v103 = vsel %vm95, %v57, 0
  %v106 = vsel %vm95, %v58, 0
  %108 = vmatpush.bf16.msra.mxu0 0
  %109 = vmatpush.bf16.msra.mxu0 0
  %110 = vmatpush.bf16.msra.mxu0 %v88
  %111 = vmatpush.bf16.msra.mxu0 %v87
  %112 = vmatpush.bf16.msra.mxu0 %v86
  %113 = vmatpush.bf16.msra.mxu0 %v85
  %114 = vmatpush.bf16.msra.mxu0 %v84
  %115 = vmatpush.bf16.msra.mxu0 %v83
  %116 = vmatmul.bf16.gmra.mxu0 %v97
  %v117 = vpop.f32.mrf.mxu0
  %v118 = vadd.f32 %v37, %v117
  %v119 = vpop.f32.mrf.mxu0
  %v120 = vadd.f32 %v37, %v119
  %121 = vmatmul.bf16.gmra.mxu0 %v100
  %v122 = vpop.f32.mrf.mxu0
  %v123 = vadd.f32 %v37, %v122
  %v124 = vpop.f32.mrf.mxu0
  %v125 = vadd.f32 %v37, %v124
  %126 = vmatmul.bf16.gmra.mxu0 %v103
  %v127 = vpop.f32.mrf.mxu0
  %v128 = vadd.f32 %v37, %v127
  %v129 = vpop.f32.mrf.mxu0
  %v130 = vadd.f32 %v37, %v129
  %131 = vmatmul.bf16.gmra.mxu0 %v106
  %v132 = vpop.f32.mrf.mxu0
  %v133 = vadd.f32 %v37, %v132
  %v134 = vpop.f32.mrf.mxu0
  %v135 = vadd.f32 %v37, %v134
  %136 = vdwg.mxu0
  %vm137 = vcmask 130048
  %138 = vst.msk [vmem:[%s3] sm:$0xff] %vm137, %v118
  %139 = vst.msk [vmem:[%s3 + $0x8] sm:$0xff] %vm137, %v120
  %140 = vst.msk [vmem:[%s3 + $0x10] sm:$0xff] %vm137, %v123
  %141 = vst.msk [vmem:[%s3 + $0x18] sm:$0xff] %vm137, %v125
  %142 = vst.msk [vmem:[%s3 + $0x20] sm:$0xff] %vm137, %v128
  %143 = vst.msk [vmem:[%s3 + $0x28] sm:$0xff] %vm137, %v130
  %144 = vst.msk [vmem:[%s3 + $0x30] sm:$0xff] %vm137, %v133
  %145 = vst.msk [vmem:[%s3 + $0x38] sm:$0xff] %vm137, %v135
  // Predicated region
  $region14: #{forward.67} parent=0 // pred_check
    _
  $region15: #{forward.67} parent=0 // pred_check_branch
    %147 = sbr.rel (0) target = $region17
  $region16: #{forward.67} parent=0 // pred_region
    _
  $region17: #{forward.67} parent=0 // pred_fallthru
    _
  // Predicated region
  $region18: #{forward.67} parent=0 // pred_check
    _
  $region19: #{forward.67} parent=0 // pred_check_branch
    %149 = sbr.rel (0) target = $region21
  $region20: #{forward.67} parent=0 // pred_region
    _
  $region21: #{forward.67} parent=0 // pred_fallthru
    _

// kernel: forward.68
$region0: #{forward.68}
  #allocation0 [shape = 'u32[]', space=smem, size = 0x4, offset = 0x4, fixed_abs, tag = 'smem constant byte address 0x4 - core index']
  #allocation1 [shape = 'u32[72,128]{1,0:T(1,128)}', space=vmem, size = 0x9000, scoped, tag = 'internal scratch']
  %s0 = inlined_call_operand.vmem [shape: bf16[32,16], index: 0, kind: input, shape index: {}]
  %s1 = inlined_call_operand.vmem [shape: bf16[32,16], index: 1, kind: input, shape index: {}]
  %s2 = inlined_call_operand.vmem [shape: bf16[16,16], index: 2, kind: input, shape index: {}]
  %s3 = inlined_call_operand.vmem [shape: f32[1,16], index: 3, kind: input, shape index: {}]
  %s4 = inlined_call_operand.vmem [shape: f32[32,16], index: 4, kind: output, shape index: {}]
  %s5 = sld [smem:[#allocation0]]
  $region26: #{forward.68} parent=0
    _
  %s7 = ssub.s32 1, %s5
  %s8 = scalar_select 0, %s7, %s5
  // Predicated region
  $region2: #{forward.68} parent=0 // pred_check
    _
  $region3: #{forward.68} parent=0 // pred_check_branch
    %10 = sbr.rel (0) target = $region5
  $region4: #{forward.68} parent=0 // pred_region
    _
  $region5: #{forward.68} parent=0 // pred_fallthru
    _
  // Predicated region
  $region6: #{forward.68} parent=0 // pred_check
    _
  $region7: #{forward.68} parent=0 // pred_check_branch
    %12 = sbr.rel (0) target = $region9
  $region8: #{forward.68} parent=0 // pred_region
    _
  $region9: #{forward.68} parent=0 // pred_fallthru
    _
  // Predicated region
  $region10: #{forward.68} parent=0 // pred_check
    _
  $region11: #{forward.68} parent=0 // pred_check_branch
    %14 = sbr.rel (0) target = $region13
  $region12: #{forward.68} parent=0 // pred_region
    _
  $region13: #{forward.68} parent=0 // pred_fallthru
    _
  // Predicated region
  $region14: #{forward.68} parent=0 // pred_check
    _
  $region15: #{forward.68} parent=0 // pred_check_branch
    %16 = sbr.rel (0) target = $region17
  $region16: #{forward.68} parent=0 // pred_region
    _
  $region17: #{forward.68} parent=0 // pred_fallthru
    _
  %v18 = vld [vmem:[%s0] sm:$0xf]
  %v19 = vld [vmem:[%s0 + $0x4] sm:$0xf]
  %v20 = vld [vmem:[%s0 + $0x8] sm:$0xf]
  %v21 = vld [vmem:[%s0 + $0xc] sm:$0xf]
  %v22 = vld [vmem:[%s2] sm:$0xf]
  %v23 = vld [vmem:[%s2 + $0x4] sm:$0xf]
  %v28 = vunpack.c.l.b16 %v18
  %v29 = vunpack.c.l.b16 %v19
  %v30 = vunpack.c.l.b16 %v20
  %v31 = vunpack.c.l.b16 %v21
  %v32 = vpack.c.b16 %v29, %v28
  %v33 = vpack.c.b16 %v31, %v30
  %v36 = vunpack.c.l.b16 %v22
  %v37 = vunpack.c.l.b16 %v23
  %v38 = vpack.c.b16 %v37, %v36
  %vm40 = vcmask 130048
  %v42 = vsel %vm40, %v32, 0
  %v45 = vsel %vm40, %v33, 0
  %47 = vmatpush.bf16.msra.mxu0 0
  %48 = vmatpush.bf16.msra.mxu0 0
  %49 = vmatpush.bf16.msra.mxu0 0
  %50 = vmatpush.bf16.msra.mxu0 0
  %51 = vmatpush.bf16.msra.mxu0 0
  %52 = vmatpush.bf16.msra.mxu0 0
  %53 = vmatpush.bf16.msra.mxu0 0
  %54 = vmatpush.bf16.msra.mxu0 %v38
  %55 = vmatmul.bf16.gmra.mxu0 %v42
  %v56 = vpop.f32.mrf.mxu0
  %v57 = vadd.f32 0.0, %v56
  %v58 = vpop.f32.mrf.mxu0
  %v59 = vadd.f32 0.0, %v58
  %60 = vmatmul.bf16.gmra.mxu0 %v45
  %v61 = vpop.f32.mrf.mxu0
  %v62 = vadd.f32 0.0, %v61
  %v63 = vpop.f32.mrf.mxu0
  %v64 = vadd.f32 0.0, %v63
  %65 = vdwg.mxu0
  %v66 = vld [vmem:[%s1] sm:$0xf]
  %v67 = vld [vmem:[%s1 + $0x4] sm:$0xf]
  %v68 = vld [vmem:[%s1 + $0x8] sm:$0xf]
  %v69 = vld [vmem:[%s1 + $0xc] sm:$0xf]
  %v74 = vunpack.c.l.b16 %v66
  %v75 = vunpack.c.l.b16 %v67
  %v76 = vunpack.c.l.b16 %v68
  %v77 = vunpack.c.l.b16 %v69
  %v78 = vpack.c.b16 %v75, %v74
  %v79 = vpack.c.b16 %v77, %v76
  %v81 = vsel %vm40, %v78, 0
  %v84 = vsel %vm40, %v79, 0
  %86 = vmatpush.bf16.msra.mxu0 0
  %87 = vmatpush.bf16.msra.mxu0 0
  %88 = vmatpush.bf16.msra.mxu0 0
  %89 = vmatpush.bf16.msra.mxu0 0
  %90 = vmatpush.bf16.msra.mxu0 0
  %91 = vmatpush.bf16.msra.mxu0 0
  %92 = vmatpush.bf16.msra.mxu0 0
  %93 = vmatpush.bf16.msra.mxu0 %v38
  %94 = vmatmul.bf16.gmra.mxu0 %v81
  %v95 = vpop.f32.mrf.mxu0
  %v96 = vadd.f32 0.0, %v95
  %v97 = vpop.f32.mrf.mxu0
  %v98 = vadd.f32 0.0, %v97
  %99 = vmatmul.bf16.gmra.mxu0 %v84
  %v100 = vpop.f32.mrf.mxu0
  %v101 = vadd.f32 0.0, %v100
  %v102 = vpop.f32.mrf.mxu0
  %v103 = vadd.f32 0.0, %v102
  %104 = vdwg.mxu0
  %v105 = vmax.f32 %v57, %v96
  %v106 = vmax.f32 %v59, %v98
  %v107 = vmax.f32 %v62, %v101
  %v108 = vmax.f32 %v64, %v103
  %v109 = vld [vmem:[%s3] sm:$0x1]
  %v111 = vperm.slane %v109, 0
  %v113 = vadd.f32 %v105, %v111
  %v114 = vadd.f32 %v106, %v111
  %v115 = vadd.f32 %v107, %v111
  %v116 = vadd.f32 %v108, %v111
  %117 = vst.msk [vmem:[%s4] sm:$0xff] %vm40, %v113
  %118 = vst.msk [vmem:[%s4 + $0x8] sm:$0xff] %vm40, %v114
  %119 = vst.msk [vmem:[%s4 + $0x10] sm:$0xff] %vm40, %v115
  %120 = vst.msk [vmem:[%s4 + $0x18] sm:$0xff] %vm40, %v116
  // Predicated region
  $region18: #{forward.68} parent=0 // pred_check
    _
  $region19: #{forward.68} parent=0 // pred_check_branch
    %122 = sbr.rel (0) target = $region21
  $region20: #{forward.68} parent=0 // pred_region
    _
  $region21: #{forward.68} parent=0 // pred_fallthru
    _
  // Predicated region
  $region22: #{forward.68} parent=0 // pred_check
    _
  $region23: #{forward.68} parent=0 // pred_check_branch
    %124 = sbr.rel (0) target = $region25
  $region24: #{forward.68} parent=0 // pred_region
    _
  $region25: #{forward.68} parent=0 // pred_fallthru
    _

// kernel: forward.69
$region0: #{forward.69}
  #allocation0 [shape = 'u32[]', space=smem, size = 0x4, offset = 0x4, fixed_abs, tag = 'smem constant byte address 0x4 - core index']
  #allocation1 [shape = 'u32[72,128]{1,0:T(1,128)}', space=vmem, size = 0x9000, scoped, tag = 'internal scratch']
  %s0 = inlined_call_operand.vmem [shape: bf16[32,128], index: 0, kind: input, shape index: {}]
  %s1 = inlined_call_operand.vmem [shape: bf16[128,16], index: 1, kind: input, shape index: {}]
  %s2 = inlined_call_operand.vmem [shape: f32[1,16], index: 2, kind: input, shape index: {}]
  %s3 = inlined_call_operand.vmem [shape: f32[32,16], index: 3, kind: output, shape index: {}]
  %s4 = sld [smem:[#allocation0]]
  $region22: #{forward.69} parent=0
    _
  %s6 = ssub.s32 1, %s4
  %s7 = scalar_select 0, %s6, %s4
  // Predicated region
  $region2: #{forward.69} parent=0 // pred_check
    _
  $region3: #{forward.69} parent=0 // pred_check_branch
    %9 = sbr.rel (0) target = $region5
  $region4: #{forward.69} parent=0 // pred_region
    _
  $region5: #{forward.69} parent=0 // pred_fallthru
    _
  // Predicated region
  $region6: #{forward.69} parent=0 // pred_check
    _
  $region7: #{forward.69} parent=0 // pred_check_branch
    %11 = sbr.rel (0) target = $region9
  $region8: #{forward.69} parent=0 // pred_region
    _
  $region9: #{forward.69} parent=0 // pred_fallthru
    _
  // Predicated region
  $region10: #{forward.69} parent=0 // pred_check
    _
  $region11: #{forward.69} parent=0 // pred_check_branch
    %13 = sbr.rel (0) target = $region13
  $region12: #{forward.69} parent=0 // pred_region
    _
  $region13: #{forward.69} parent=0 // pred_fallthru
    _
  %v14 = vld [vmem:[%s0] sm:$0xf]
  %v15 = vld [vmem:[%s0 + $0x4] sm:$0xf]
  %v16 = vld [vmem:[%s0 + $0x8] sm:$0xf]
  %v17 = vld [vmem:[%s0 + $0xc] sm:$0xf]
  %v18 = vld [vmem:[%s1] sm:$0xf]
  %v19 = vld [vmem:[%s1 + $0x4] sm:$0xf]
  %v20 = vld [vmem:[%s1 + $0x8] sm:$0xf]
  %v21 = vld [vmem:[%s1 + $0xc] sm:$0xf]
  %v22 = vld [vmem:[%s1 + $0x10] sm:$0xf]
  %v23 = vld [vmem:[%s1 + $0x14] sm:$0xf]
  %v24 = vld [vmem:[%s1 + $0x18] sm:$0xf]
  %v25 = vld [vmem:[%s1 + $0x1c] sm:$0xf]
  %v26 = vld [vmem:[%s1 + $0x20] sm:$0xf]
  %v27 = vld [vmem:[%s1 + $0x24] sm:$0xf]
  %v28 = vld [vmem:[%s1 + $0x28] sm:$0xf]
  %v29 = vld [vmem:[%s1 + $0x2c] sm:$0xf]
  %v30 = vld [vmem:[%s1 + $0x30] sm:$0xf]
  %v31 = vld [vmem:[%s1 + $0x34] sm:$0xf]
  %v32 = vld [vmem:[%s1 + $0x38] sm:$0xf]
  %v33 = vld [vmem:[%s1 + $0x3c] sm:$0xf]
  %v34 = vld [vmem:[%s2] sm:$0x1]
  %v36 = vperm.slane %v34, 0
  %v42 = vunpack.c.l.b16 %v14
  %v43 = vunpack.c.l.b16 %v15
  %v44 = vunpack.c.l.b16 %v16
  %v45 = vunpack.c.l.b16 %v17
  %v46 = vpack.c.b16 %v43, %v42
  %v47 = vpack.c.b16 %v45, %v44
  %v66 = vunpack.c.l.b16 %v18
  %v67 = vunpack.c.l.b16 %v19
  %v68 = vunpack.c.l.b16 %v20
  %v69 = vunpack.c.l.b16 %v21
  %v70 = vunpack.c.l.b16 %v22
  %v71 = vunpack.c.l.b16 %v23
  %v72 = vunpack.c.l.b16 %v24
  %v73 = vunpack.c.l.b16 %v25
  %v74 = vunpack.c.l.b16 %v26
  %v75 = vunpack.c.l.b16 %v27
  %v76 = vunpack.c.l.b16 %v28
  %v77 = vunpack.c.l.b16 %v29
  %v78 = vunpack.c.l.b16 %v30
  %v79 = vunpack.c.l.b16 %v31
  %v80 = vunpack.c.l.b16 %v32
  %v81 = vunpack.c.l.b16 %v33
  %v82 = vpack.c.b16 %v67, %v66
  %v83 = vpack.c.b16 %v69, %v68
  %v84 = vpack.c.b16 %v71, %v70
  %v85 = vpack.c.b16 %v73, %v72
  %v86 = vpack.c.b16 %v75, %v74
  %v87 = vpack.c.b16 %v77, %v76
  %v88 = vpack.c.b16 %v79, %v78
  %v89 = vpack.c.b16 %v81, %v80
  %98 = vmatpush.bf16.msra.mxu0 %v89
  %99 = vmatpush.bf16.msra.mxu0 %v88
  %100 = vmatpush.bf16.msra.mxu0 %v87
  %101 = vmatpush.bf16.msra.mxu0 %v86
  %102 = vmatpush.bf16.msra.mxu0 %v85
  %103 = vmatpush.bf16.msra.mxu0 %v84
  %104 = vmatpush.bf16.msra.mxu0 %v83
  %105 = vmatpush.bf16.msra.mxu0 %v82
  %106 = vmatmul.bf16.gmra.mxu0 %v46
  %v107 = vpop.f32.mrf.mxu0
  %v108 = vadd.f32 %v36, %v107
  %v109 = vpop.f32.mrf.mxu0
  %v110 = vadd.f32 %v36, %v109
  %111 = vmatmul.bf16.gmra.mxu0 %v47
  %v112 = vpop.f32.mrf.mxu0
  %v113 = vadd.f32 %v36, %v112
  %v114 = vpop.f32.mrf.mxu0
  %v115 = vadd.f32 %v36, %v114
  %116 = vdwg.mxu0
  %vm117 = vcmask 130048
  %118 = vst.msk [vmem:[%s3] sm:$0xff] %vm117, %v108
  %119 = vst.msk [vmem:[%s3 + $0x8] sm:$0xff] %vm117, %v110
  %120 = vst.msk [vmem:[%s3 + $0x10] sm:$0xff] %vm117, %v113
  %121 = vst.msk [vmem:[%s3 + $0x18] sm:$0xff] %vm117, %v115
  // Predicated region
  $region14: #{forward.69} parent=0 // pred_check
    _
  $region15: #{forward.69} parent=0 // pred_check_branch
    %123 = sbr.rel (0) target = $region17
  $region16: #{forward.69} parent=0 // pred_region
    _
  $region17: #{forward.69} parent=0 // pred_fallthru
    _
  // Predicated region
  $region18: #{forward.69} parent=0 // pred_check
    _
  $region19: #{forward.69} parent=0 // pred_check_branch
    %125 = sbr.rel (0) target = $region21
  $region20: #{forward.69} parent=0 // pred_region
    _
  $region21: #{forward.69} parent=0 // pred_fallthru
    _

// kernel: forward.71
$region0: #{forward.71}
  #allocation0 [shape = 'u32[]', space=smem, size = 0x4, offset = 0x4, fixed_abs, tag = 'smem constant byte address 0x4 - core index']
  #allocation1 [shape = 'u32[72,128]{1,0:T(1,128)}', space=vmem, size = 0x9000, scoped, tag = 'internal scratch']
  %s0 = inlined_call_operand.vmem [shape: bf16[32,160], index: 0, kind: input, shape index: {}]
  %s1 = inlined_call_operand.vmem [shape: bf16[160,16], index: 1, kind: input, shape index: {}]
  %s2 = inlined_call_operand.vmem [shape: f32[1,16], index: 2, kind: input, shape index: {}]
  %s3 = inlined_call_operand.vmem [shape: f32[32,16], index: 3, kind: output, shape index: {}]
  %s4 = sld [smem:[#allocation0]]
  $region22: #{forward.71} parent=0
    _
  %s6 = ssub.s32 1, %s4
  %s7 = scalar_select 0, %s6, %s4
  // Predicated region
  $region2: #{forward.71} parent=0 // pred_check
    _
  $region3: #{forward.71} parent=0 // pred_check_branch
    %9 = sbr.rel (0) target = $region5
  $region4: #{forward.71} parent=0 // pred_region
    _
  $region5: #{forward.71} parent=0 // pred_fallthru
    _
  // Predicated region
  $region6: #{forward.71} parent=0 // pred_check
    _
  $region7: #{forward.71} parent=0 // pred_check_branch
    %11 = sbr.rel (0) target = $region9
  $region8: #{forward.71} parent=0 // pred_region
    _
  $region9: #{forward.71} parent=0 // pred_fallthru
    _
  // Predicated region
  $region10: #{forward.71} parent=0 // pred_check
    _
  $region11: #{forward.71} parent=0 // pred_check_branch
    %13 = sbr.rel (0) target = $region13
  $region12: #{forward.71} parent=0 // pred_region
    _
  $region13: #{forward.71} parent=0 // pred_fallthru
    _
  %v15 = vld [vmem:[%s0] sm:$0xff]
  %v16 = vld [vmem:[%s0 + $0x8] sm:$0xff]
  %v17 = vld [vmem:[%s0 + $0x10] sm:$0xff]
  %v18 = vld [vmem:[%s0 + $0x18] sm:$0xff]
  %v19 = vld [vmem:[%s1] sm:$0xf]
  %v20 = vld [vmem:[%s1 + $0x4] sm:$0xf]
  %v21 = vld [vmem:[%s1 + $0x8] sm:$0xf]
  %v22 = vld [vmem:[%s1 + $0xc] sm:$0xf]
  %v23 = vld [vmem:[%s1 + $0x10] sm:$0xf]
  %v24 = vld [vmem:[%s1 + $0x14] sm:$0xf]
  %v25 = vld [vmem:[%s1 + $0x18] sm:$0xf]
  %v26 = vld [vmem:[%s1 + $0x1c] sm:$0xf]
  %v27 = vld [vmem:[%s1 + $0x20] sm:$0xf]
  %v28 = vld [vmem:[%s1 + $0x24] sm:$0xf]
  %v29 = vld [vmem:[%s1 + $0x28] sm:$0xf]
  %v30 = vld [vmem:[%s1 + $0x2c] sm:$0xf]
  %v31 = vld [vmem:[%s1 + $0x30] sm:$0xf]
  %v32 = vld [vmem:[%s1 + $0x34] sm:$0xf]
  %v33 = vld [vmem:[%s1 + $0x38] sm:$0xf]
  %v34 = vld [vmem:[%s1 + $0x3c] sm:$0xf]
  %v35 = vld [vmem:[%s1 + $0x40] sm:$0xf]
  %v36 = vld [vmem:[%s1 + $0x44] sm:$0xf]
  %v37 = vld [vmem:[%s1 + $0x48] sm:$0xf]
  %v38 = vld [vmem:[%s1 + $0x4c] sm:$0xf]
  %v39 = vld [vmem:[%s2] sm:$0x1]
  %v41 = vperm.slane %v39, 0
  %v47 = vunpack.c.l.b16 %v15
  %v48 = vunpack.c.h.b16 %v15
  %v49 = vunpack.c.l.b16 %v16
  %v50 = vunpack.c.h.b16 %v16
  %v51 = vunpack.c.l.b16 %v17
  %v52 = vunpack.c.h.b16 %v17
  %v53 = vunpack.c.l.b16 %v18
  %v54 = vunpack.c.h.b16 %v18
  %v55 = vpack.c.b16 %v49, %v47
  %v56 = vpack.c.b16 %v50, %v48
  %v57 = vpack.c.b16 %v53, %v51
  %v58 = vpack.c.b16 %v54, %v52
  %v81 = vunpack.c.l.b16 %v19
  %v82 = vunpack.c.l.b16 %v20
  %v83 = vunpack.c.l.b16 %v21
  %v84 = vunpack.c.l.b16 %v22
  %v85 = vunpack.c.l.b16 %v23
  %v86 = vunpack.c.l.b16 %v24
  %v87 = vunpack.c.l.b16 %v25
  %v88 = vunpack.c.l.b16 %v26
  %v89 = vunpack.c.l.b16 %v27
  %v90 = vunpack.c.l.b16 %v28
  %v91 = vunpack.c.l.b16 %v29
  %v92 = vunpack.c.l.b16 %v30
  %v93 = vunpack.c.l.b16 %v31
  %v94 = vunpack.c.l.b16 %v32
  %v95 = vunpack.c.l.b16 %v33
  %v96 = vunpack.c.l.b16 %v34
  %v97 = vunpack.c.l.b16 %v35
  %v98 = vunpack.c.l.b16 %v36
  %v99 = vunpack.c.l.b16 %v37
  %v100 = vunpack.c.l.b16 %v38
  %v101 = vpack.c.b16 %v82, %v81
  %v102 = vpack.c.b16 %v84, %v83
  %v103 = vpack.c.b16 %v86, %v85
  %v104 = vpack.c.b16 %v88, %v87
  %v105 = vpack.c.b16 %v90, %v89
  %v106 = vpack.c.b16 %v92, %v91
  %v107 = vpack.c.b16 %v94, %v93
  %v108 = vpack.c.b16 %v96, %v95
  %v109 = vpack.c.b16 %v98, %v97
  %v110 = vpack.c.b16 %v100, %v99
  %vm121 = vcmask 261120
  %v123 = vsel %vm121, %v56, 0
  %v126 = vsel %vm121, %v58, 0
  %128 = vmatpush.bf16.msra.mxu0 %v108
  %129 = vmatpush.bf16.msra.mxu0 %v107
  %130 = vmatpush.bf16.msra.mxu0 %v106
  %131 = vmatpush.bf16.msra.mxu0 %v105
  %132 = vmatpush.bf16.msra.mxu0 %v104
  %133 = vmatpush.bf16.msra.mxu0 %v103
  %134 = vmatpush.bf16.msra.mxu0 %v102
  %135 = vmatpush.bf16.msra.mxu0 %v101
  %136 = vmatmul.bf16.gmra.mxu0 %v55
  %v137 = vpop.f32.mrf.mxu0
  %v138 = vadd.f32 %v41, %v137
  %v139 = vpop.f32.mrf.mxu0
  %v140 = vadd.f32 %v41, %v139
  %141 = vmatmul.bf16.gmra.mxu0 %v57
  %v142 = vpop.f32.mrf.mxu0
  %v143 = vadd.f32 %v41, %v142
  %v144 = vpop.f32.mrf.mxu0
  %v145 = vadd.f32 %v41, %v144
  %146 = vdwg.mxu0
  %147 = vmatpush.bf16.msra.mxu0 0
  %148 = vmatpush.bf16.msra.mxu0 0
  %149 = vmatpush.bf16.msra.mxu0 0
  %150 = vmatpush.bf16.msra.mxu0 0
  %151 = vmatpush.bf16.msra.mxu0 0
  %152 = vmatpush.bf16.msra.mxu0 0
  %153 = vmatpush.bf16.msra.mxu0 %v110
  %154 = vmatpush.bf16.msra.mxu0 %v109
  %155 = vmatmul.bf16.gmra.mxu0 %v123
  %v156 = vpop.f32.mrf.mxu0
  %v157 = vadd.f32 %v138, %v156
  %v158 = vpop.f32.mrf.mxu0
  %v159 = vadd.f32 %v140, %v158
  %160 = vmatmul.bf16.gmra.mxu0 %v126
  %v161 = vpop.f32.mrf.mxu0
  %v162 = vadd.f32 %v143, %v161
  %v163 = vpop.f32.mrf.mxu0
  %v164 = vadd.f32 %v145, %v163
  %165 = vdwg.mxu0
  %vm166 = vcmask 130048
  %167 = vst.msk [vmem:[%s3] sm:$0xff] %vm166, %v157
  %168 = vst.msk [vmem:[%s3 + $0x8] sm:$0xff] %vm166, %v159
  %169 = vst.msk [vmem:[%s3 + $0x10] sm:$0xff] %vm166, %v162
  %170 = vst.msk [vmem:[%s3 + $0x18] sm:$0xff] %vm166, %v164
  // Predicated region
  $region14: #{forward.71} parent=0 // pred_check
    _
  $region15: #{forward.71} parent=0 // pred_check_branch
    %172 = sbr.rel (0) target = $region17
  $region16: #{forward.71} parent=0 // pred_region
    _
  $region17: #{forward.71} parent=0 // pred_fallthru
    _
  // Predicated region
  $region18: #{forward.71} parent=0 // pred_check
    _
  $region19: #{forward.71} parent=0 // pred_check_branch
    %174 = sbr.rel (0) target = $region21
  $region20: #{forward.71} parent=0 // pred_region
    _
  $region21: #{forward.71} parent=0 // pred_fallthru
    _

// kernel: forward.75
$region0: #{forward.75}
  #allocation0 [shape = 'u32[]', space=smem, size = 0x4, offset = 0x4, fixed_abs, tag = 'smem constant byte address 0x4 - core index']
  #allocation1 [shape = 'u32[72,128]{1,0:T(1,128)}', space=vmem, size = 0x9000, scoped, tag = 'internal scratch']
  %s0 = inlined_call_operand.vmem [shape: bf16[32,64], index: 0, kind: input, shape index: {}]
  %s1 = inlined_call_operand.vmem [shape: bf16[64,16], index: 1, kind: input, shape index: {}]
  %s2 = inlined_call_operand.vmem [shape: f32[1,16], index: 2, kind: input, shape index: {}]
  %s3 = inlined_call_operand.vmem [shape: f32[32,16], index: 3, kind: output, shape index: {}]
  %s4 = sld [smem:[#allocation0]]
  $region22: #{forward.75} parent=0
    _
  %s6 = ssub.s32 1, %s4
  %s7 = scalar_select 0, %s6, %s4
  // Predicated region
  $region2: #{forward.75} parent=0 // pred_check
    _
  $region3: #{forward.75} parent=0 // pred_check_branch
    %9 = sbr.rel (0) target = $region5
  $region4: #{forward.75} parent=0 // pred_region
    _
  $region5: #{forward.75} parent=0 // pred_fallthru
    _
  // Predicated region
  $region6: #{forward.75} parent=0 // pred_check
    _
  $region7: #{forward.75} parent=0 // pred_check_branch
    %11 = sbr.rel (0) target = $region9
  $region8: #{forward.75} parent=0 // pred_region
    _
  $region9: #{forward.75} parent=0 // pred_fallthru
    _
  // Predicated region
  $region10: #{forward.75} parent=0 // pred_check
    _
  $region11: #{forward.75} parent=0 // pred_check_branch
    %13 = sbr.rel (0) target = $region13
  $region12: #{forward.75} parent=0 // pred_region
    _
  $region13: #{forward.75} parent=0 // pred_fallthru
    _
  %v15 = vld [vmem:[%s0] sm:$0xf]
  %v16 = vld [vmem:[%s0 + $0x4] sm:$0xf]
  %v17 = vld [vmem:[%s0 + $0x8] sm:$0xf]
  %v18 = vld [vmem:[%s0 + $0xc] sm:$0xf]
  %v19 = vld [vmem:[%s1] sm:$0xf]
  %v20 = vld [vmem:[%s1 + $0x4] sm:$0xf]
  %v21 = vld [vmem:[%s1 + $0x8] sm:$0xf]
  %v22 = vld [vmem:[%s1 + $0xc] sm:$0xf]
  %v23 = vld [vmem:[%s1 + $0x10] sm:$0xf]
  %v24 = vld [vmem:[%s1 + $0x14] sm:$0xf]
  %v25 = vld [vmem:[%s1 + $0x18] sm:$0xf]
  %v26 = vld [vmem:[%s1 + $0x1c] sm:$0xf]
  %v27 = vld [vmem:[%s2] sm:$0x1]
  %v29 = vperm.slane %v27, 0
  %v35 = vunpack.c.l.b16 %v15
  %v36 = vunpack.c.l.b16 %v16
  %v37 = vunpack.c.l.b16 %v17
  %v38 = vunpack.c.l.b16 %v18
  %v39 = vpack.c.b16 %v36, %v35
  %v40 = vpack.c.b16 %v38, %v37
  %v49 = vunpack.c.l.b16 %v19
  %v50 = vunpack.c.l.b16 %v20
  %v51 = vunpack.c.l.b16 %v21
  %v52 = vunpack.c.l.b16 %v22
  %v53 = vunpack.c.l.b16 %v23
  %v54 = vunpack.c.l.b16 %v24
  %v55 = vunpack.c.l.b16 %v25
  %v56 = vunpack.c.l.b16 %v26
  %v57 = vpack.c.b16 %v50, %v49
  %v58 = vpack.c.b16 %v52, %v51
  %v59 = vpack.c.b16 %v54, %v53
  %v60 = vpack.c.b16 %v56, %v55
  %vm65 = vcmask 523264
  %v67 = vsel %vm65, %v39, 0
  %v70 = vsel %vm65, %v40, 0
  %72 = vmatpush.bf16.msra.mxu0 0
  %73 = vmatpush.bf16.msra.mxu0 0
  %74 = vmatpush.bf16.msra.mxu0 0
  %75 = vmatpush.bf16.msra.mxu0 0
  %76 = vmatpush.bf16.msra.mxu0 %v60
  %77 = vmatpush.bf16.msra.mxu0 %v59
  %78 = vmatpush.bf16.msra.mxu0 %v58
  %79 = vmatpush.bf16.msra.mxu0 %v57
  %80 = vmatmul.bf16.gmra.mxu0 %v67
  %v81 = vpop.f32.mrf.mxu0
  %v82 = vadd.f32 %v29, %v81
  %v83 = vpop.f32.mrf.mxu0
  %v84 = vadd.f32 %v29, %v83
  %85 = vmatmul.bf16.gmra.mxu0 %v70
  %v86 = vpop.f32.mrf.mxu0
  %v87 = vadd.f32 %v29, %v86
  %v88 = vpop.f32.mrf.mxu0
  %v89 = vadd.f32 %v29, %v88
  %90 = vdwg.mxu0
  %vm91 = vcmask 130048
  %92 = vst.msk [vmem:[%s3] sm:$0xff] %vm91, %v82
  %93 = vst.msk [vmem:[%s3 + $0x8] sm:$0xff] %vm91, %v84
  %94 = vst.msk [vmem:[%s3 + $0x10] sm:$0xff] %vm91, %v87
  %95 = vst.msk [vmem:[%s3 + $0x18] sm:$0xff] %vm91, %v89
  // Predicated region
  $region14: #{forward.75} parent=0 // pred_check
    _
  $region15: #{forward.75} parent=0 // pred_check_branch
    %97 = sbr.rel (0) target = $region17
  $region16: #{forward.75} parent=0 // pred_region
    _
  $region17: #{forward.75} parent=0 // pred_fallthru
    _
  // Predicated region
  $region18: #{forward.75} parent=0 // pred_check
    _
  $region19: #{forward.75} parent=0 // pred_check_branch
    %99 = sbr.rel (0) target = $region21
  $region20: #{forward.75} parent=0 // pred_region
    _
  $region21: #{forward.75} parent=0 // pred_fallthru
    _

// kernel: forward.76
$region0: #{forward.76}
  #allocation0 [shape = 'u32[]', space=smem, size = 0x4, offset = 0x4, fixed_abs, tag = 'smem constant byte address 0x4 - core index']
  #allocation1 [shape = 'u32[72,128]{1,0:T(1,128)}', space=vmem, size = 0x9000, scoped, tag = 'internal scratch']
  %s0 = inlined_call_operand.vmem [shape: bf16[16,16], index: 0, kind: input, shape index: {}]
  %s1 = inlined_call_operand.vmem [shape: bf16[16,16], index: 1, kind: input, shape index: {}]
  %s2 = inlined_call_operand.vmem [shape: bf16[16,16], index: 2, kind: input, shape index: {}]
  %s3 = inlined_call_operand.vmem [shape: f32[1,16], index: 3, kind: input, shape index: {}]
  %s4 = inlined_call_operand.vmem [shape: f32[16,16], index: 4, kind: output, shape index: {}]
  %s5 = sld [smem:[#allocation0]]
  $region26: #{forward.76} parent=0
    _
  %s7 = ssub.s32 1, %s5
  %s8 = scalar_select 0, %s7, %s5
  // Predicated region
  $region2: #{forward.76} parent=0 // pred_check
    _
  $region3: #{forward.76} parent=0 // pred_check_branch
    %10 = sbr.rel (0) target = $region5
  $region4: #{forward.76} parent=0 // pred_region
    _
  $region5: #{forward.76} parent=0 // pred_fallthru
    _
  // Predicated region
  $region6: #{forward.76} parent=0 // pred_check
    _
  $region7: #{forward.76} parent=0 // pred_check_branch
    %12 = sbr.rel (0) target = $region9
  $region8: #{forward.76} parent=0 // pred_region
    _
  $region9: #{forward.76} parent=0 // pred_fallthru
    _
  // Predicated region
  $region10: #{forward.76} parent=0 // pred_check
    _
  $region11: #{forward.76} parent=0 // pred_check_branch
    %14 = sbr.rel (0) target = $region13
  $region12: #{forward.76} parent=0 // pred_region
    _
  $region13: #{forward.76} parent=0 // pred_fallthru
    _
  // Predicated region
  $region14: #{forward.76} parent=0 // pred_check
    _
  $region15: #{forward.76} parent=0 // pred_check_branch
    %16 = sbr.rel (0) target = $region17
  $region16: #{forward.76} parent=0 // pred_region
    _
  $region17: #{forward.76} parent=0 // pred_fallthru
    _
  %v18 = vld [vmem:[%s0] sm:$0xf]
  %v19 = vld [vmem:[%s0 + $0x4] sm:$0xf]
  %v20 = vld [vmem:[%s2] sm:$0xf]
  %v21 = vld [vmem:[%s2 + $0x4] sm:$0xf]
  %v24 = vunpack.c.l.b16 %v18
  %v25 = vunpack.c.l.b16 %v19
  %v26 = vpack.c.b16 %v25, %v24
  %v29 = vunpack.c.l.b16 %v20
  %v30 = vunpack.c.l.b16 %v21
  %v31 = vpack.c.b16 %v30, %v29
  %vm33 = vcmask 130048
  %v35 = vsel %vm33, %v26, 0
  %37 = vmatpush.bf16.msra.mxu0 0
  %38 = vmatpush.bf16.msra.mxu0 0
  %39 = vmatpush.bf16.msra.mxu0 0
  %40 = vmatpush.bf16.msra.mxu0 0
  %41 = vmatpush.bf16.msra.mxu0 0
  %42 = vmatpush.bf16.msra.mxu0 0
  %43 = vmatpush.bf16.msra.mxu0 0
  %44 = vmatpush.bf16.msra.mxu0 %v31
  %45 = vmatmul.bf16.gmra.mxu0 %v35
  %v46 = vpop.f32.mrf.mxu0
  %v47 = vadd.f32 0.0, %v46
  %v48 = vpop.f32.mrf.mxu0
  %v49 = vadd.f32 0.0, %v48
  %50 = vdwg.mxu0
  %v51 = vld [vmem:[%s1] sm:$0xf]
  %v52 = vld [vmem:[%s1 + $0x4] sm:$0xf]
  %v55 = vunpack.c.l.b16 %v51
  %v56 = vunpack.c.l.b16 %v52
  %v57 = vpack.c.b16 %v56, %v55
  %v59 = vsel %vm33, %v57, 0
  %61 = vmatpush.bf16.msra.mxu0 0
  %62 = vmatpush.bf16.msra.mxu0 0
  %63 = vmatpush.bf16.msra.mxu0 0
  %64 = vmatpush.bf16.msra.mxu0 0
  %65 = vmatpush.bf16.msra.mxu0 0
  %66 = vmatpush.bf16.msra.mxu0 0
  %67 = vmatpush.bf16.msra.mxu0 0
  %68 = vmatpush.bf16.msra.mxu0 %v31
  %69 = vmatmul.bf16.gmra.mxu0 %v59
  %v70 = vpop.f32.mrf.mxu0
  %v71 = vadd.f32 0.0, %v70
  %v72 = vpop.f32.mrf.mxu0
  %v73 = vadd.f32 0.0, %v72
  %74 = vdwg.mxu0
  %v75 = vmax.f32 %v47, %v71
  %v76 = vmax.f32 %v49, %v73
  %v77 = vld [vmem:[%s3] sm:$0x1]
  %v79 = vperm.slane %v77, 0
  %v81 = vadd.f32 %v75, %v79
  %v82 = vadd.f32 %v76, %v79
  %83 = vst.msk [vmem:[%s4] sm:$0xff] %vm33, %v81
  %84 = vst.msk [vmem:[%s4 + $0x8] sm:$0xff] %vm33, %v82
  // Predicated region
  $region18: #{forward.76} parent=0 // pred_check
    _
  $region19: #{forward.76} parent=0 // pred_check_branch
    %86 = sbr.rel (0) target = $region21
  $region20: #{forward.76} parent=0 // pred_region
    _
  $region21: #{forward.76} parent=0 // pred_fallthru
    _
  // Predicated region
  $region22: #{forward.76} parent=0 // pred_check
    _
  $region23: #{forward.76} parent=0 // pred_check_branch
    %88 = sbr.rel (0) target = $region25
  $region24: #{forward.76} parent=0 // pred_region
    _
  $region25: #{forward.76} parent=0 // pred_fallthru
    _

// kernel: forward.77
$region0: #{forward.77}
  #allocation0 [shape = 'u32[]', space=smem, size = 0x4, offset = 0x4, fixed_abs, tag = 'smem constant byte address 0x4 - core index']
  #allocation1 [shape = 'u32[72,128]{1,0:T(1,128)}', space=vmem, size = 0x9000, scoped, tag = 'internal scratch']
  %s0 = inlined_call_operand.vmem [shape: bf16[16,128], index: 0, kind: input, shape index: {}]
  %s1 = inlined_call_operand.vmem [shape: bf16[128,16], index: 1, kind: input, shape index: {}]
  %s2 = inlined_call_operand.vmem [shape: f32[1,16], index: 2, kind: input, shape index: {}]
  %s3 = inlined_call_operand.vmem [shape: f32[16,16], index: 3, kind: output, shape index: {}]
  %s4 = sld [smem:[#allocation0]]
  $region22: #{forward.77} parent=0
    _
  %s6 = ssub.s32 1, %s4
  %s7 = scalar_select 0, %s6, %s4
  // Predicated region
  $region2: #{forward.77} parent=0 // pred_check
    _
  $region3: #{forward.77} parent=0 // pred_check_branch
    %9 = sbr.rel (0) target = $region5
  $region4: #{forward.77} parent=0 // pred_region
    _
  $region5: #{forward.77} parent=0 // pred_fallthru
    _
  // Predicated region
  $region6: #{forward.77} parent=0 // pred_check
    _
  $region7: #{forward.77} parent=0 // pred_check_branch
    %11 = sbr.rel (0) target = $region9
  $region8: #{forward.77} parent=0 // pred_region
    _
  $region9: #{forward.77} parent=0 // pred_fallthru
    _
  // Predicated region
  $region10: #{forward.77} parent=0 // pred_check
    _
  $region11: #{forward.77} parent=0 // pred_check_branch
    %13 = sbr.rel (0) target = $region13
  $region12: #{forward.77} parent=0 // pred_region
    _
  $region13: #{forward.77} parent=0 // pred_fallthru
    _
  %v14 = vld [vmem:[%s0] sm:$0xf]
  %v15 = vld [vmem:[%s0 + $0x4] sm:$0xf]
  %v16 = vld [vmem:[%s1] sm:$0xf]
  %v17 = vld [vmem:[%s1 + $0x4] sm:$0xf]
  %v18 = vld [vmem:[%s1 + $0x8] sm:$0xf]
  %v19 = vld [vmem:[%s1 + $0xc] sm:$0xf]
  %v20 = vld [vmem:[%s1 + $0x10] sm:$0xf]
  %v21 = vld [vmem:[%s1 + $0x14] sm:$0xf]
  %v22 = vld [vmem:[%s1 + $0x18] sm:$0xf]
  %v23 = vld [vmem:[%s1 + $0x1c] sm:$0xf]
  %v24 = vld [vmem:[%s1 + $0x20] sm:$0xf]
  %v25 = vld [vmem:[%s1 + $0x24] sm:$0xf]
  %v26 = vld [vmem:[%s1 + $0x28] sm:$0xf]
  %v27 = vld [vmem:[%s1 + $0x2c] sm:$0xf]
  %v28 = vld [vmem:[%s1 + $0x30] sm:$0xf]
  %v29 = vld [vmem:[%s1 + $0x34] sm:$0xf]
  %v30 = vld [vmem:[%s1 + $0x38] sm:$0xf]
  %v31 = vld [vmem:[%s1 + $0x3c] sm:$0xf]
  %v32 = vld [vmem:[%s2] sm:$0x1]
  %v34 = vperm.slane %v32, 0
  %v38 = vunpack.c.l.b16 %v14
  %v39 = vunpack.c.l.b16 %v15
  %v40 = vpack.c.b16 %v39, %v38
  %v58 = vunpack.c.l.b16 %v16
  %v59 = vunpack.c.l.b16 %v17
  %v60 = vunpack.c.l.b16 %v18
  %v61 = vunpack.c.l.b16 %v19
  %v62 = vunpack.c.l.b16 %v20
  %v63 = vunpack.c.l.b16 %v21
  %v64 = vunpack.c.l.b16 %v22
  %v65 = vunpack.c.l.b16 %v23
  %v66 = vunpack.c.l.b16 %v24
  %v67 = vunpack.c.l.b16 %v25
  %v68 = vunpack.c.l.b16 %v26
  %v69 = vunpack.c.l.b16 %v27
  %v70 = vunpack.c.l.b16 %v28
  %v71 = vunpack.c.l.b16 %v29
  %v72 = vunpack.c.l.b16 %v30
  %v73 = vunpack.c.l.b16 %v31
  %v74 = vpack.c.b16 %v59, %v58
  %v75 = vpack.c.b16 %v61, %v60
  %v76 = vpack.c.b16 %v63, %v62
  %v77 = vpack.c.b16 %v65, %v64
  %v78 = vpack.c.b16 %v67, %v66
  %v79 = vpack.c.b16 %v69, %v68
  %v80 = vpack.c.b16 %v71, %v70
  %v81 = vpack.c.b16 %v73, %v72
  %90 = vmatpush.bf16.msra.mxu0 %v81
  %91 = vmatpush.bf16.msra.mxu0 %v80
  %92 = vmatpush.bf16.msra.mxu0 %v79
  %93 = vmatpush.bf16.msra.mxu0 %v78
  %94 = vmatpush.bf16.msra.mxu0 %v77
  %95 = vmatpush.bf16.msra.mxu0 %v76
  %96 = vmatpush.bf16.msra.mxu0 %v75
  %97 = vmatpush.bf16.msra.mxu0 %v74
  %98 = vmatmul.bf16.gmra.mxu0 %v40
  %v99 = vpop.f32.mrf.mxu0
  %v100 = vadd.f32 %v34, %v99
  %v101 = vpop.f32.mrf.mxu0
  %v102 = vadd.f32 %v34, %v101
  %103 = vdwg.mxu0
  %vm104 = vcmask 130048
  %105 = vst.msk [vmem:[%s3] sm:$0xff] %vm104, %v100
  %106 = vst.msk [vmem:[%s3 + $0x8] sm:$0xff] %vm104, %v102
  // Predicated region
  $region14: #{forward.77} parent=0 // pred_check
    _
  $region15: #{forward.77} parent=0 // pred_check_branch
    %108 = sbr.rel (0) target = $region17
  $region16: #{forward.77} parent=0 // pred_region
    _
  $region17: #{forward.77} parent=0 // pred_fallthru
    _
  // Predicated region
  $region18: #{forward.77} parent=0 // pred_check
    _
  $region19: #{forward.77} parent=0 // pred_check_branch
    %110 = sbr.rel (0) target = $region21
  $region20: #{forward.77} parent=0 // pred_region
    _
  $region21: #{forward.77} parent=0 // pred_fallthru
    _

// kernel: forward.79
$region0: #{forward.79}
  #allocation0 [shape = 'u32[]', space=smem, size = 0x4, offset = 0x4, fixed_abs, tag = 'smem constant byte address 0x4 - core index']
  #allocation1 [shape = 'u32[72,128]{1,0:T(1,128)}', space=vmem, size = 0x9000, scoped, tag = 'internal scratch']
  %s0 = inlined_call_operand.vmem [shape: bf16[16,160], index: 0, kind: input, shape index: {}]
  %s1 = inlined_call_operand.vmem [shape: bf16[160,16], index: 1, kind: input, shape index: {}]
  %s2 = inlined_call_operand.vmem [shape: f32[1,16], index: 2, kind: input, shape index: {}]
  %s3 = inlined_call_operand.vmem [shape: f32[16,16], index: 3, kind: output, shape index: {}]
  %s4 = sld [smem:[#allocation0]]
  $region22: #{forward.79} parent=0
    _
  %s6 = ssub.s32 1, %s4
  %s7 = scalar_select 0, %s6, %s4
  // Predicated region
  $region2: #{forward.79} parent=0 // pred_check
    _
  $region3: #{forward.79} parent=0 // pred_check_branch
    %9 = sbr.rel (0) target = $region5
  $region4: #{forward.79} parent=0 // pred_region
    _
  $region5: #{forward.79} parent=0 // pred_fallthru
    _
  // Predicated region
  $region6: #{forward.79} parent=0 // pred_check
    _
  $region7: #{forward.79} parent=0 // pred_check_branch
    %11 = sbr.rel (0) target = $region9
  $region8: #{forward.79} parent=0 // pred_region
    _
  $region9: #{forward.79} parent=0 // pred_fallthru
    _
  // Predicated region
  $region10: #{forward.79} parent=0 // pred_check
    _
  $region11: #{forward.79} parent=0 // pred_check_branch
    %13 = sbr.rel (0) target = $region13
  $region12: #{forward.79} parent=0 // pred_region
    _
  $region13: #{forward.79} parent=0 // pred_fallthru
    _
  %v15 = vld [vmem:[%s0] sm:$0xff]
  %v16 = vld [vmem:[%s0 + $0x8] sm:$0xff]
  %v17 = vld [vmem:[%s1] sm:$0xf]
  %v18 = vld [vmem:[%s1 + $0x4] sm:$0xf]
  %v19 = vld [vmem:[%s1 + $0x8] sm:$0xf]
  %v20 = vld [vmem:[%s1 + $0xc] sm:$0xf]
  %v21 = vld [vmem:[%s1 + $0x10] sm:$0xf]
  %v22 = vld [vmem:[%s1 + $0x14] sm:$0xf]
  %v23 = vld [vmem:[%s1 + $0x18] sm:$0xf]
  %v24 = vld [vmem:[%s1 + $0x1c] sm:$0xf]
  %v25 = vld [vmem:[%s1 + $0x20] sm:$0xf]
  %v26 = vld [vmem:[%s1 + $0x24] sm:$0xf]
  %v27 = vld [vmem:[%s1 + $0x28] sm:$0xf]
  %v28 = vld [vmem:[%s1 + $0x2c] sm:$0xf]
  %v29 = vld [vmem:[%s1 + $0x30] sm:$0xf]
  %v30 = vld [vmem:[%s1 + $0x34] sm:$0xf]
  %v31 = vld [vmem:[%s1 + $0x38] sm:$0xf]
  %v32 = vld [vmem:[%s1 + $0x3c] sm:$0xf]
  %v33 = vld [vmem:[%s1 + $0x40] sm:$0xf]
  %v34 = vld [vmem:[%s1 + $0x44] sm:$0xf]
  %v35 = vld [vmem:[%s1 + $0x48] sm:$0xf]
  %v36 = vld [vmem:[%s1 + $0x4c] sm:$0xf]
  %v37 = vld [vmem:[%s2] sm:$0x1]
  %v39 = vperm.slane %v37, 0
  %v43 = vunpack.c.l.b16 %v15
  %v44 = vunpack.c.h.b16 %v15
  %v45 = vunpack.c.l.b16 %v16
  %v46 = vunpack.c.h.b16 %v16
  %v47 = vpack.c.b16 %v45, %v43
  %v48 = vpack.c.b16 %v46, %v44
  %v70 = vunpack.c.l.b16 %v17
  %v71 = vunpack.c.l.b16 %v18
  %v72 = vunpack.c.l.b16 %v19
  %v73 = vunpack.c.l.b16 %v20
  %v74 = vunpack.c.l.b16 %v21
  %v75 = vunpack.c.l.b16 %v22
  %v76 = vunpack.c.l.b16 %v23
  %v77 = vunpack.c.l.b16 %v24
  %v78 = vunpack.c.l.b16 %v25
  %v79 = vunpack.c.l.b16 %v26
  %v80 = vunpack.c.l.b16 %v27
  %v81 = vunpack.c.l.b16 %v28
  %v82 = vunpack.c.l.b16 %v29
  %v83 = vunpack.c.l.b16 %v30
  %v84 = vunpack.c.l.b16 %v31
  %v85 = vunpack.c.l.b16 %v32
  %v86 = vunpack.c.l.b16 %v33
  %v87 = vunpack.c.l.b16 %v34
  %v88 = vunpack.c.l.b16 %v35
  %v89 = vunpack.c.l.b16 %v36
  %v90 = vpack.c.b16 %v71, %v70
  %v91 = vpack.c.b16 %v73, %v72
  %v92 = vpack.c.b16 %v75, %v74
  %v93 = vpack.c.b16 %v77, %v76
  %v94 = vpack.c.b16 %v79, %v78
  %v95 = vpack.c.b16 %v81, %v80
  %v96 = vpack.c.b16 %v83, %v82
  %v97 = vpack.c.b16 %v85, %v84
  %v98 = vpack.c.b16 %v87, %v86
  %v99 = vpack.c.b16 %v89, %v88
  %vm110 = vcmask 261120
  %v112 = vsel %vm110, %v48, 0
  %114 = vmatpush.bf16.msra.mxu0 %v97
  %115 = vmatpush.bf16.msra.mxu0 %v96
  %116 = vmatpush.bf16.msra.mxu0 %v95
  %117 = vmatpush.bf16.msra.mxu0 %v94
  %118 = vmatpush.bf16.msra.mxu0 %v93
  %119 = vmatpush.bf16.msra.mxu0 %v92
  %120 = vmatpush.bf16.msra.mxu0 %v91
  %121 = vmatpush.bf16.msra.mxu0 %v90
  %122 = vmatmul.bf16.gmra.mxu0 %v47
  %v123 = vpop.f32.mrf.mxu0
  %v124 = vadd.f32 %v39, %v123
  %v125 = vpop.f32.mrf.mxu0
  %v126 = vadd.f32 %v39, %v125
  %127 = vdwg.mxu0
  %128 = vmatpush.bf16.msra.mxu0 0
  %129 = vmatpush.bf16.msra.mxu0 0
  %130 = vmatpush.bf16.msra.mxu0 0
  %131 = vmatpush.bf16.msra.mxu0 0
  %132 = vmatpush.bf16.msra.mxu0 0
  %133 = vmatpush.bf16.msra.mxu0 0
  %134 = vmatpush.bf16.msra.mxu0 %v99
  %135 = vmatpush.bf16.msra.mxu0 %v98
  %136 = vmatmul.bf16.gmra.mxu0 %v112
  %v137 = vpop.f32.mrf.mxu0
  %v138 = vadd.f32 %v124, %v137
  %v139 = vpop.f32.mrf.mxu0
  %v140 = vadd.f32 %v126, %v139
  %141 = vdwg.mxu0
  %vm142 = vcmask 130048
  %143 = vst.msk [vmem:[%s3] sm:$0xff] %vm142, %v138
  %144 = vst.msk [vmem:[%s3 + $0x8] sm:$0xff] %vm142, %v140
  // Predicated region
  $region14: #{forward.79} parent=0 // pred_check
    _
  $region15: #{forward.79} parent=0 // pred_check_branch
    %146 = sbr.rel (0) target = $region17
  $region16: #{forward.79} parent=0 // pred_region
    _
  $region17: #{forward.79} parent=0 // pred_fallthru
    _
  // Predicated region
  $region18: #{forward.79} parent=0 // pred_check
    _
  $region19: #{forward.79} parent=0 // pred_check_branch
    %148 = sbr.rel (0) target = $region21
  $region20: #{forward.79} parent=0 // pred_region
    _
  $region21: #{forward.79} parent=0 // pred_fallthru
    _

// kernel: forward.83
$region0: #{forward.83}
  #allocation0 [shape = 'u32[]', space=smem, size = 0x4, offset = 0x4, fixed_abs, tag = 'smem constant byte address 0x4 - core index']
  #allocation1 [shape = 'u32[72,128]{1,0:T(1,128)}', space=vmem, size = 0x9000, scoped, tag = 'internal scratch']
  %s0 = inlined_call_operand.vmem [shape: bf16[16,64], index: 0, kind: input, shape index: {}]
  %s1 = inlined_call_operand.vmem [shape: bf16[64,16], index: 1, kind: input, shape index: {}]
  %s2 = inlined_call_operand.vmem [shape: f32[1,16], index: 2, kind: input, shape index: {}]
  %s3 = inlined_call_operand.vmem [shape: f32[16,16], index: 3, kind: output, shape index: {}]
  %s4 = sld [smem:[#allocation0]]
  $region22: #{forward.83} parent=0
    _
  %s6 = ssub.s32 1, %s4
  %s7 = scalar_select 0, %s6, %s4
  // Predicated region
  $region2: #{forward.83} parent=0 // pred_check
    _
  $region3: #{forward.83} parent=0 // pred_check_branch
    %9 = sbr.rel (0) target = $region5
  $region4: #{forward.83} parent=0 // pred_region
    _
  $region5: #{forward.83} parent=0 // pred_fallthru
    _
  // Predicated region
  $region6: #{forward.83} parent=0 // pred_check
    _
  $region7: #{forward.83} parent=0 // pred_check_branch
    %11 = sbr.rel (0) target = $region9
  $region8: #{forward.83} parent=0 // pred_region
    _
  $region9: #{forward.83} parent=0 // pred_fallthru
    _
  // Predicated region
  $region10: #{forward.83} parent=0 // pred_check
    _
  $region11: #{forward.83} parent=0 // pred_check_branch
    %13 = sbr.rel (0) target = $region13
  $region12: #{forward.83} parent=0 // pred_region
    _
  $region13: #{forward.83} parent=0 // pred_fallthru
    _
  %v15 = vld [vmem:[%s0] sm:$0xf]
  %v16 = vld [vmem:[%s0 + $0x4] sm:$0xf]
  %v17 = vld [vmem:[%s1] sm:$0xf]
  %v18 = vld [vmem:[%s1 + $0x4] sm:$0xf]
  %v19 = vld [vmem:[%s1 + $0x8] sm:$0xf]
  %v20 = vld [vmem:[%s1 + $0xc] sm:$0xf]
  %v21 = vld [vmem:[%s1 + $0x10] sm:$0xf]
  %v22 = vld [vmem:[%s1 + $0x14] sm:$0xf]
  %v23 = vld [vmem:[%s1 + $0x18] sm:$0xf]
  %v24 = vld [vmem:[%s1 + $0x1c] sm:$0xf]
  %v25 = vld [vmem:[%s2] sm:$0x1]
  %v27 = vperm.slane %v25, 0
  %v31 = vunpack.c.l.b16 %v15
  %v32 = vunpack.c.l.b16 %v16
  %v33 = vpack.c.b16 %v32, %v31
  %v42 = vunpack.c.l.b16 %v17
  %v43 = vunpack.c.l.b16 %v18
  %v44 = vunpack.c.l.b16 %v19
  %v45 = vunpack.c.l.b16 %v20
  %v46 = vunpack.c.l.b16 %v21
  %v47 = vunpack.c.l.b16 %v22
  %v48 = vunpack.c.l.b16 %v23
  %v49 = vunpack.c.l.b16 %v24
  %v50 = vpack.c.b16 %v43, %v42
  %v51 = vpack.c.b16 %v45, %v44
  %v52 = vpack.c.b16 %v47, %v46
  %v53 = vpack.c.b16 %v49, %v48
  %vm58 = vcmask 523264
  %v60 = vsel %vm58, %v33, 0
  %62 = vmatpush.bf16.msra.mxu0 0
  %63 = vmatpush.bf16.msra.mxu0 0
  %64 = vmatpush.bf16.msra.mxu0 0
  %65 = vmatpush.bf16.msra.mxu0 0
  %66 = vmatpush.bf16.msra.mxu0 %v53
  %67 = vmatpush.bf16.msra.mxu0 %v52
  %68 = vmatpush.bf16.msra.mxu0 %v51
  %69 = vmatpush.bf16.msra.mxu0 %v50
  %70 = vmatmul.bf16.gmra.mxu0 %v60
  %v71 = vpop.f32.mrf.mxu0
  %v72 = vadd.f32 %v27, %v71
  %v73 = vpop.f32.mrf.mxu0
  %v74 = vadd.f32 %v27, %v73
  %75 = vdwg.mxu0
  %vm76 = vcmask 130048
  %77 = vst.msk [vmem:[%s3] sm:$0xff] %vm76, %v72
  %78 = vst.msk [vmem:[%s3 + $0x8] sm:$0xff] %vm76, %v74
  // Predicated region
  $region14: #{forward.83} parent=0 // pred_check
    _
  $region15: #{forward.83} parent=0 // pred_check_branch
    %80 = sbr.rel (0) target = $region17
  $region16: #{forward.83} parent=0 // pred_region
    _
  $region17: #{forward.83} parent=0 // pred_fallthru
    _
  // Predicated region
  $region18: #{forward.83} parent=0 // pred_check
    _
  $region19: #{forward.83} parent=0 // pred_check_branch
    %82 = sbr.rel (0) target = $region21
  $region20: #{forward.83} parent=0 // pred_region
    _
  $region21: #{forward.83} parent=0 // pred_fallthru
    _

// kernel: forward.84
$region0: #{forward.84}
  #allocation0 [shape = 'u32[]', space=smem, size = 0x4, offset = 0x4, fixed_abs, tag = 'smem constant byte address 0x4 - core index']
  #allocation1 [shape = 'u32[72,128]{1,0:T(1,128)}', space=vmem, size = 0x9000, scoped, tag = 'internal scratch']
  %s0 = inlined_call_operand.vmem [shape: bf16[8,16], index: 0, kind: input, shape index: {}]
  %s1 = inlined_call_operand.vmem [shape: bf16[8,16], index: 1, kind: input, shape index: {}]
  %s2 = inlined_call_operand.vmem [shape: bf16[16,16], index: 2, kind: input, shape index: {}]
  %s3 = inlined_call_operand.vmem [shape: f32[1,16], index: 3, kind: input, shape index: {}]
  %s4 = inlined_call_operand.vmem [shape: f32[8,16], index: 4, kind: output, shape index: {}]
  %s5 = sld [smem:[#allocation0]]
  $region26: #{forward.84} parent=0
    _
  %s7 = ssub.s32 1, %s5
  %s8 = scalar_select 0, %s7, %s5
  // Predicated region
  $region2: #{forward.84} parent=0 // pred_check
    _
  $region3: #{forward.84} parent=0 // pred_check_branch
    %10 = sbr.rel (0) target = $region5
  $region4: #{forward.84} parent=0 // pred_region
    _
  $region5: #{forward.84} parent=0 // pred_fallthru
    _
  // Predicated region
  $region6: #{forward.84} parent=0 // pred_check
    _
  $region7: #{forward.84} parent=0 // pred_check_branch
    %12 = sbr.rel (0) target = $region9
  $region8: #{forward.84} parent=0 // pred_region
    _
  $region9: #{forward.84} parent=0 // pred_fallthru
    _
  // Predicated region
  $region10: #{forward.84} parent=0 // pred_check
    _
  $region11: #{forward.84} parent=0 // pred_check_branch
    %14 = sbr.rel (0) target = $region13
  $region12: #{forward.84} parent=0 // pred_region
    _
  $region13: #{forward.84} parent=0 // pred_fallthru
    _
  // Predicated region
  $region14: #{forward.84} parent=0 // pred_check
    _
  $region15: #{forward.84} parent=0 // pred_check_branch
    %16 = sbr.rel (0) target = $region17
  $region16: #{forward.84} parent=0 // pred_region
    _
  $region17: #{forward.84} parent=0 // pred_fallthru
    _
  %v18 = vld [vmem:[%s0] sm:$0xf]
  %v19 = vld [vmem:[%s2] sm:$0xf]
  %v20 = vld [vmem:[%s2 + $0x4] sm:$0xf]
  %v23 = vunpack.c.l.b16 %v19
  %v24 = vunpack.c.l.b16 %v20
  %v25 = vpack.c.b16 %v24, %v23
  %vm27 = vcmask 130048
  %v29 = vsel %vm27, %v18, 0
  %31 = vmatpush.bf16.msra.mxu0 0
  %32 = vmatpush.bf16.msra.mxu0 0
  %33 = vmatpush.bf16.msra.mxu0 0
  %34 = vmatpush.bf16.msra.mxu0 0
  %35 = vmatpush.bf16.msra.mxu0 0
  %36 = vmatpush.bf16.msra.mxu0 0
  %37 = vmatpush.bf16.msra.mxu0 0
  %38 = vmatpush.bf16.msra.mxu0 %v25
  %39 = vmatmul.bf16.gmra.mxu0 %v29
  %v40 = vpop.f32.mrf.mxu0
  %v41 = vadd.f32 0.0, %v40
  %v42 = vpop.f32.mrf.mxu0
  %43 = vdwg.mxu0
  %v44 = vld [vmem:[%s1] sm:$0xf]
  %v46 = vsel %vm27, %v44, 0
  %48 = vmatpush.bf16.msra.mxu0 0
  %49 = vmatpush.bf16.msra.mxu0 0
  %50 = vmatpush.bf16.msra.mxu0 0
  %51 = vmatpush.bf16.msra.mxu0 0
  %52 = vmatpush.bf16.msra.mxu0 0
  %53 = vmatpush.bf16.msra.mxu0 0
  %54 = vmatpush.bf16.msra.mxu0 0
  %55 = vmatpush.bf16.msra.mxu0 %v25
  %56 = vmatmul.bf16.gmra.mxu0 %v46
  %v57 = vpop.f32.mrf.mxu0
  %v58 = vadd.f32 0.0, %v57
  %v59 = vpop.f32.mrf.mxu0
  %60 = vdwg.mxu0
  %v61 = vmax.f32 %v41, %v58
  %v62 = vld [vmem:[%s3] sm:$0x1]
  %v64 = vperm.slane %v62, 0
  %v66 = vadd.f32 %v61, %v64
  %67 = vst.msk [vmem:[%s4] sm:$0xff] %vm27, %v66
  // Predicated region
  $region18: #{forward.84} parent=0 // pred_check
    _
  $region19: #{forward.84} parent=0 // pred_check_branch
    %69 = sbr.rel (0) target = $region21
  $region20: #{forward.84} parent=0 // pred_region
    _
  $region21: #{forward.84} parent=0 // pred_fallthru
    _
  // Predicated region
  $region22: #{forward.84} parent=0 // pred_check
    _
  $region23: #{forward.84} parent=0 // pred_check_branch
    %71 = sbr.rel (0) target = $region25
  $region24: #{forward.84} parent=0 // pred_region
    _
  $region25: #{forward.84} parent=0 // pred_fallthru
    _

// kernel: forward.85
$region0: #{forward.85}
  #allocation0 [shape = 'u32[]', space=smem, size = 0x4, offset = 0x4, fixed_abs, tag = 'smem constant byte address 0x4 - core index']
  #allocation1 [shape = 'u32[72,128]{1,0:T(1,128)}', space=vmem, size = 0x9000, scoped, tag = 'internal scratch']
  %s0 = inlined_call_operand.vmem [shape: bf16[8,128], index: 0, kind: input, shape index: {}]
  %s1 = inlined_call_operand.vmem [shape: bf16[128,16], index: 1, kind: input, shape index: {}]
  %s2 = inlined_call_operand.vmem [shape: f32[1,16], index: 2, kind: input, shape index: {}]
  %s3 = inlined_call_operand.vmem [shape: f32[8,16], index: 3, kind: output, shape index: {}]
  %s4 = sld [smem:[#allocation0]]
  $region22: #{forward.85} parent=0
    _
  %s6 = ssub.s32 1, %s4
  %s7 = scalar_select 0, %s6, %s4
  // Predicated region
  $region2: #{forward.85} parent=0 // pred_check
    _
  $region3: #{forward.85} parent=0 // pred_check_branch
    %9 = sbr.rel (0) target = $region5
  $region4: #{forward.85} parent=0 // pred_region
    _
  $region5: #{forward.85} parent=0 // pred_fallthru
    _
  // Predicated region
  $region6: #{forward.85} parent=0 // pred_check
    _
  $region7: #{forward.85} parent=0 // pred_check_branch
    %11 = sbr.rel (0) target = $region9
  $region8: #{forward.85} parent=0 // pred_region
    _
  $region9: #{forward.85} parent=0 // pred_fallthru
    _
  // Predicated region
  $region10: #{forward.85} parent=0 // pred_check
    _
  $region11: #{forward.85} parent=0 // pred_check_branch
    %13 = sbr.rel (0) target = $region13
  $region12: #{forward.85} parent=0 // pred_region
    _
  $region13: #{forward.85} parent=0 // pred_fallthru
    _
  %v14 = vld [vmem:[%s0] sm:$0xf]
  %v15 = vld [vmem:[%s1] sm:$0xf]
  %v16 = vld [vmem:[%s1 + $0x4] sm:$0xf]
  %v17 = vld [vmem:[%s1 + $0x8] sm:$0xf]
  %v18 = vld [vmem:[%s1 + $0xc] sm:$0xf]
  %v19 = vld [vmem:[%s1 + $0x10] sm:$0xf]
  %v20 = vld [vmem:[%s1 + $0x14] sm:$0xf]
  %v21 = vld [vmem:[%s1 + $0x18] sm:$0xf]
  %v22 = vld [vmem:[%s1 + $0x1c] sm:$0xf]
  %v23 = vld [vmem:[%s1 + $0x20] sm:$0xf]
  %v24 = vld [vmem:[%s1 + $0x24] sm:$0xf]
  %v25 = vld [vmem:[%s1 + $0x28] sm:$0xf]
  %v26 = vld [vmem:[%s1 + $0x2c] sm:$0xf]
  %v27 = vld [vmem:[%s1 + $0x30] sm:$0xf]
  %v28 = vld [vmem:[%s1 + $0x34] sm:$0xf]
  %v29 = vld [vmem:[%s1 + $0x38] sm:$0xf]
  %v30 = vld [vmem:[%s1 + $0x3c] sm:$0xf]
  %v31 = vld [vmem:[%s2] sm:$0x1]
  %v33 = vperm.slane %v31, 0
  %v51 = vunpack.c.l.b16 %v15
  %v52 = vunpack.c.l.b16 %v16
  %v53 = vunpack.c.l.b16 %v17
  %v54 = vunpack.c.l.b16 %v18
  %v55 = vunpack.c.l.b16 %v19
  %v56 = vunpack.c.l.b16 %v20
  %v57 = vunpack.c.l.b16 %v21
  %v58 = vunpack.c.l.b16 %v22
  %v59 = vunpack.c.l.b16 %v23
  %v60 = vunpack.c.l.b16 %v24
  %v61 = vunpack.c.l.b16 %v25
  %v62 = vunpack.c.l.b16 %v26
  %v63 = vunpack.c.l.b16 %v27
  %v64 = vunpack.c.l.b16 %v28
  %v65 = vunpack.c.l.b16 %v29
  %v66 = vunpack.c.l.b16 %v30
  %v67 = vpack.c.b16 %v52, %v51
  %v68 = vpack.c.b16 %v54, %v53
  %v69 = vpack.c.b16 %v56, %v55
  %v70 = vpack.c.b16 %v58, %v57
  %v71 = vpack.c.b16 %v60, %v59
  %v72 = vpack.c.b16 %v62, %v61
  %v73 = vpack.c.b16 %v64, %v63
  %v74 = vpack.c.b16 %v66, %v65
  %83 = vmatpush.bf16.msra.mxu0 %v74
  %84 = vmatpush.bf16.msra.mxu0 %v73
  %85 = vmatpush.bf16.msra.mxu0 %v72
  %86 = vmatpush.bf16.msra.mxu0 %v71
  %87 = vmatpush.bf16.msra.mxu0 %v70
  %88 = vmatpush.bf16.msra.mxu0 %v69
  %89 = vmatpush.bf16.msra.mxu0 %v68
  %90 = vmatpush.bf16.msra.mxu0 %v67
  %91 = vmatmul.bf16.gmra.mxu0 %v14
  %v92 = vpop.f32.mrf.mxu0
  %v93 = vadd.f32 %v33, %v92
  %v94 = vpop.f32.mrf.mxu0
  %95 = vdwg.mxu0
  %vm96 = vcmask 130048
  %97 = vst.msk [vmem:[%s3] sm:$0xff] %vm96, %v93
  // Predicated region
  $region14: #{forward.85} parent=0 // pred_check
    _
  $region15: #{forward.85} parent=0 // pred_check_branch
    %99 = sbr.rel (0) target = $region17
  $region16: #{forward.85} parent=0 // pred_region
    _
  $region17: #{forward.85} parent=0 // pred_fallthru
    _
  // Predicated region
  $region18: #{forward.85} parent=0 // pred_check
    _
  $region19: #{forward.85} parent=0 // pred_check_branch
    %101 = sbr.rel (0) target = $region21
  $region20: #{forward.85} parent=0 // pred_region
    _
  $region21: #{forward.85} parent=0 // pred_fallthru
    _

// kernel: tile.28
$region0: #{tile.28}
  #allocation0 [shape = 's32[1]{0}', space=sflag, size = 0x4, scoped, tag = 'scoped memory for tile.28']
  %s0 = inlined_call_operand.vmem [shape: f32[16], index: 0, kind: input, shape index: {}]
  %s1 = inlined_call_operand.vmem [shape: f32[2,16], index: 1, kind: output, shape index: {}]
  // Predicated region
  $region2: #{tile.28} parent=0 // pred_check
    _
  $region3: #{tile.28} parent=0 // pred_check_branch
    %3 = sbr.rel (0) target = $region5
  $region4: #{tile.28} parent=0 // pred_region
    _
  $region5: #{tile.28} parent=0 // pred_fallthru
    _
  %v4 = vld [vmem:[%s0] ss:$0 sm:$0xff]
  %5 = vst [vmem:[%s1] sm:$0x3] %v4

// kernel: tile.29
$region0: #{tile.29}
  %s0 = inlined_call_operand.vmem [shape: f32[2,16], index: 0, kind: input, shape index: {}]
  %s1 = inlined_call_operand.vmem [shape: f32[1,32], index: 1, kind: output, shape index: {}]
  $region1: #{tile.29} parent=0
    #allocation0 [shape = 'u8[4096]{0}', space=vmem, size = 0x1000, scoped, tag = 'scoped mem for output reshape']
    #allocation1 [shape = 'u8[4096]{0}', space=vmem, size = 0x1000, scoped, tag = 'scoped mem for input reshape']
    %s3 = ssub.s32 4, 1
    %v4 = vld [vmem:[%s0] sm:%s3]
    %5 = vst [vmem:[#allocation1] sm:%s3] %v4
    %v6 = vld [vmem:[#allocation1] sm:$0x1]
    %vm7 = vcmask 130048
    %8 = vst.msk [vmem:[#allocation0] sm:$0x1] %vm7, %v6
    %s9 = scalar_lea.vmem [#allocation1], 1
    %v10 = vld [vmem:[%s9] sm:$0x1]
    %11 = vrot.lane.b32.xlu0 %v10, 16
    %v12 = vpop.permute.xlu0 %11
    %vm13 = vcmask 261248
    %14 = vst.msk [vmem:[#allocation0] sm:$0x1] %vm13, %v12
    %s16 = ssub.s32 2, 1
    %v17 = vld [vmem:[#allocation0] sm:%s16]
    %s19 = ssub.s32 2, 1
    %20 = vst [vmem:[%s1] sm:%s19] %v17

// kernel: forward.87
$region0: #{forward.87}
  #allocation0 [shape = 'u32[]', space=smem, size = 0x4, offset = 0x4, fixed_abs, tag = 'smem constant byte address 0x4 - core index']
  #allocation1 [shape = 'u32[72,128]{1,0:T(1,128)}', space=vmem, size = 0x9000, scoped, tag = 'internal scratch']
  %s0 = inlined_call_operand.vmem [shape: bf16[8,160], index: 0, kind: input, shape index: {}]
  %s1 = inlined_call_operand.vmem [shape: bf16[160,16], index: 1, kind: input, shape index: {}]
  %s2 = inlined_call_operand.vmem [shape: f32[1,16], index: 2, kind: input, shape index: {}]
  %s3 = inlined_call_operand.vmem [shape: f32[8,16], index: 3, kind: output, shape index: {}]
  %s4 = sld [smem:[#allocation0]]
  $region22: #{forward.87} parent=0
    _
  %s6 = ssub.s32 1, %s4
  %s7 = scalar_select 0, %s6, %s4
  // Predicated region
  $region2: #{forward.87} parent=0 // pred_check
    _
  $region3: #{forward.87} parent=0 // pred_check_branch
    %9 = sbr.rel (0) target = $region5
  $region4: #{forward.87} parent=0 // pred_region
    _
  $region5: #{forward.87} parent=0 // pred_fallthru
    _
  // Predicated region
  $region6: #{forward.87} parent=0 // pred_check
    _
  $region7: #{forward.87} parent=0 // pred_check_branch
    %11 = sbr.rel (0) target = $region9
  $region8: #{forward.87} parent=0 // pred_region
    _
  $region9: #{forward.87} parent=0 // pred_fallthru
    _
  // Predicated region
  $region10: #{forward.87} parent=0 // pred_check
    _
  $region11: #{forward.87} parent=0 // pred_check_branch
    %13 = sbr.rel (0) target = $region13
  $region12: #{forward.87} parent=0 // pred_region
    _
  $region13: #{forward.87} parent=0 // pred_fallthru
    _
  %v15 = vld [vmem:[%s0] sm:$0xff]
  %v16 = vld [vmem:[%s1] sm:$0xf]
  %v17 = vld [vmem:[%s1 + $0x4] sm:$0xf]
  %v18 = vld [vmem:[%s1 + $0x8] sm:$0xf]
  %v19 = vld [vmem:[%s1 + $0xc] sm:$0xf]
  %v20 = vld [vmem:[%s1 + $0x10] sm:$0xf]
  %v21 = vld [vmem:[%s1 + $0x14] sm:$0xf]
  %v22 = vld [vmem:[%s1 + $0x18] sm:$0xf]
  %v23 = vld [vmem:[%s1 + $0x1c] sm:$0xf]
  %v24 = vld [vmem:[%s1 + $0x20] sm:$0xf]
  %v25 = vld [vmem:[%s1 + $0x24] sm:$0xf]
  %v26 = vld [vmem:[%s1 + $0x28] sm:$0xf]
  %v27 = vld [vmem:[%s1 + $0x2c] sm:$0xf]
  %v28 = vld [vmem:[%s1 + $0x30] sm:$0xf]
  %v29 = vld [vmem:[%s1 + $0x34] sm:$0xf]
  %v30 = vld [vmem:[%s1 + $0x38] sm:$0xf]
  %v31 = vld [vmem:[%s1 + $0x3c] sm:$0xf]
  %v32 = vld [vmem:[%s1 + $0x40] sm:$0xf]
  %v33 = vld [vmem:[%s1 + $0x44] sm:$0xf]
  %v34 = vld [vmem:[%s1 + $0x48] sm:$0xf]
  %v35 = vld [vmem:[%s1 + $0x4c] sm:$0xf]
  %v36 = vld [vmem:[%s2] sm:$0x1]
  %v38 = vperm.slane %v36, 0
  %v41 = vunpack.c.l.b16 %v15
  %v42 = vunpack.c.h.b16 %v15
  %v43 = vpack.c.b16 %v41, %v41
  %v44 = vpack.c.b16 %v42, %v42
  %v66 = vunpack.c.l.b16 %v16
  %v67 = vunpack.c.l.b16 %v17
  %v68 = vunpack.c.l.b16 %v18
  %v69 = vunpack.c.l.b16 %v19
  %v70 = vunpack.c.l.b16 %v20
  %v71 = vunpack.c.l.b16 %v21
  %v72 = vunpack.c.l.b16 %v22
  %v73 = vunpack.c.l.b16 %v23
  %v74 = vunpack.c.l.b16 %v24
  %v75 = vunpack.c.l.b16 %v25
  %v76 = vunpack.c.l.b16 %v26
  %v77 = vunpack.c.l.b16 %v27
  %v78 = vunpack.c.l.b16 %v28
  %v79 = vunpack.c.l.b16 %v29
  %v80 = vunpack.c.l.b16 %v30
  %v81 = vunpack.c.l.b16 %v31
  %v82 = vunpack.c.l.b16 %v32
  %v83 = vunpack.c.l.b16 %v33
  %v84 = vunpack.c.l.b16 %v34
  %v85 = vunpack.c.l.b16 %v35
  %v86 = vpack.c.b16 %v67, %v66
  %v87 = vpack.c.b16 %v69, %v68
  %v88 = vpack.c.b16 %v71, %v70
  %v89 = vpack.c.b16 %v73, %v72
  %v90 = vpack.c.b16 %v75, %v74
  %v91 = vpack.c.b16 %v77, %v76
  %v92 = vpack.c.b16 %v79, %v78
  %v93 = vpack.c.b16 %v81, %v80
  %v94 = vpack.c.b16 %v83, %v82
  %v95 = vpack.c.b16 %v85, %v84
  %vm106 = vcmask 261120
  %v108 = vsel %vm106, %v44, 0
  %110 = vmatpush.bf16.msra.mxu0 %v93
  %111 = vmatpush.bf16.msra.mxu0 %v92
  %112 = vmatpush.bf16.msra.mxu0 %v91
  %113 = vmatpush.bf16.msra.mxu0 %v90
  %114 = vmatpush.bf16.msra.mxu0 %v89
  %115 = vmatpush.bf16.msra.mxu0 %v88
  %116 = vmatpush.bf16.msra.mxu0 %v87
  %117 = vmatpush.bf16.msra.mxu0 %v86
  %118 = vmatmul.bf16.gmra.mxu0 %v43
  %v119 = vpop.f32.mrf.mxu0
  %v120 = vadd.f32 %v38, %v119
  %v121 = vpop.f32.mrf.mxu0
  %122 = vdwg.mxu0
  %123 = vmatpush.bf16.msra.mxu0 0
  %124 = vmatpush.bf16.msra.mxu0 0
  %125 = vmatpush.bf16.msra.mxu0 0
  %126 = vmatpush.bf16.msra.mxu0 0
  %127 = vmatpush.bf16.msra.mxu0 0
  %128 = vmatpush.bf16.msra.mxu0 0
  %129 = vmatpush.bf16.msra.mxu0 %v95
  %130 = vmatpush.bf16.msra.mxu0 %v94
  %131 = vmatmul.bf16.gmra.mxu0 %v108
  %v132 = vpop.f32.mrf.mxu0
  %v133 = vadd.f32 %v120, %v132
  %v134 = vpop.f32.mrf.mxu0
  %135 = vdwg.mxu0
  %vm136 = vcmask 130048
  %137 = vst.msk [vmem:[%s3] sm:$0xff] %vm136, %v133
  // Predicated region
  $region14: #{forward.87} parent=0 // pred_check
    _
  $region15: #{forward.87} parent=0 // pred_check_branch
    %139 = sbr.rel (0) target = $region17
  $region16: #{forward.87} parent=0 // pred_region
    _
  $region17: #{forward.87} parent=0 // pred_fallthru
    _
  // Predicated region
  $region18: #{forward.87} parent=0 // pred_check
    _
  $region19: #{forward.87} parent=0 // pred_check_branch
    %141 = sbr.rel (0) target = $region21
  $region20: #{forward.87} parent=0 // pred_region
    _
  $region21: #{forward.87} parent=0 // pred_fallthru
    _

// kernel: forward.92
$region0: #{forward.92}
  #allocation0 [shape = 'u32[]', space=smem, size = 0x4, offset = 0x4, fixed_abs, tag = 'smem constant byte address 0x4 - core index']
  #allocation1 [shape = 'u32[72,128]{1,0:T(1,128)}', space=vmem, size = 0x9000, scoped, tag = 'internal scratch']
  %s0 = inlined_call_operand.vmem [shape: bf16[8,16], index: 0, kind: input, shape index: {}]
  %s1 = inlined_call_operand.vmem [shape: bf16[16,16], index: 1, kind: input, shape index: {}]
  %s2 = inlined_call_operand.vmem [shape: f32[1,16], index: 2, kind: input, shape index: {}]
  %s3 = inlined_call_operand.vmem [shape: f32[8,16], index: 3, kind: output, shape index: {}]
  %s4 = sld [smem:[#allocation0]]
  $region22: #{forward.92} parent=0
    _
  %s6 = ssub.s32 1, %s4
  %s7 = scalar_select 0, %s6, %s4
  // Predicated region
  $region2: #{forward.92} parent=0 // pred_check
    _
  $region3: #{forward.92} parent=0 // pred_check_branch
    %9 = sbr.rel (0) target = $region5
  $region4: #{forward.92} parent=0 // pred_region
    _
  $region5: #{forward.92} parent=0 // pred_fallthru
    _
  // Predicated region
  $region6: #{forward.92} parent=0 // pred_check
    _
  $region7: #{forward.92} parent=0 // pred_check_branch
    %11 = sbr.rel (0) target = $region9
  $region8: #{forward.92} parent=0 // pred_region
    _
  $region9: #{forward.92} parent=0 // pred_fallthru
    _
  // Predicated region
  $region10: #{forward.92} parent=0 // pred_check
    _
  $region11: #{forward.92} parent=0 // pred_check_branch
    %13 = sbr.rel (0) target = $region13
  $region12: #{forward.92} parent=0 // pred_region
    _
  $region13: #{forward.92} parent=0 // pred_fallthru
    _
  %v15 = vld [vmem:[%s0] sm:$0xf]
  %v16 = vld [vmem:[%s1] sm:$0xf]
  %v17 = vld [vmem:[%s1 + $0x4] sm:$0xf]
  %v18 = vld [vmem:[%s2] sm:$0x1]
  %v20 = vperm.slane %v18, 0
  %v24 = vunpack.c.l.b16 %v16
  %v25 = vunpack.c.l.b16 %v17
  %v26 = vpack.c.b16 %v25, %v24
  %vm28 = vcmask 130048
  %v30 = vsel %vm28, %v15, 0
  %32 = vmatpush.bf16.msra.mxu0 0
  %33 = vmatpush.bf16.msra.mxu0 0
  %34 = vmatpush.bf16.msra.mxu0 0
  %35 = vmatpush.bf16.msra.mxu0 0
  %36 = vmatpush.bf16.msra.mxu0 0
  %37 = vmatpush.bf16.msra.mxu0 0
  %38 = vmatpush.bf16.msra.mxu0 0
  %39 = vmatpush.bf16.msra.mxu0 %v26
  %40 = vmatmul.bf16.gmra.mxu0 %v30
  %v41 = vpop.f32.mrf.mxu0
  %v42 = vadd.f32 %v20, %v41
  %v43 = vpop.f32.mrf.mxu0
  %44 = vdwg.mxu0
  %vm45 = vcmp.gt.f32.partialorder %v42, 0.0
  %v46 = vmin.f32 %v42, 0.0
  %v47 = vmul.f32 %v46, 1.442695
  %v48 = vpow.pop %v47
  %v49 = vsub.f32 %v48, 1.0
  %v50 = vmul.f32 %v49, 1.6732632
  %v51 = vsel %vm45, %v42, %v50
  %v52 = vmul.f32 %v51, 1.050701
  %53 = vst.msk [vmem:[%s3] sm:$0xff] %vm28, %v52
  // Predicated region
  $region14: #{forward.92} parent=0 // pred_check
    _
  $region15: #{forward.92} parent=0 // pred_check_branch
    %55 = sbr.rel (0) target = $region17
  $region16: #{forward.92} parent=0 // pred_region
    _
  $region17: #{forward.92} parent=0 // pred_fallthru
    _
  // Predicated region
  $region18: #{forward.92} parent=0 // pred_check
    _
  $region19: #{forward.92} parent=0 // pred_check_branch
    %57 = sbr.rel (0) target = $region21
  $region20: #{forward.92} parent=0 // pred_region
    _
  $region21: #{forward.92} parent=0 // pred_fallthru
    _

// kernel: forward.91
$region0: #{forward.91}
  #allocation0 [shape = 'u32[]', space=smem, size = 0x4, offset = 0x4, fixed_abs, tag = 'smem constant byte address 0x4 - core index']
  #allocation1 [shape = 'u32[72,128]{1,0:T(1,128)}', space=vmem, size = 0x9000, scoped, tag = 'internal scratch']
  %s0 = inlined_call_operand.vmem [shape: bf16[8,64], index: 0, kind: input, shape index: {}]
  %s1 = inlined_call_operand.vmem [shape: bf16[64,16], index: 1, kind: input, shape index: {}]
  %s2 = inlined_call_operand.vmem [shape: f32[1,16], index: 2, kind: input, shape index: {}]
  %s3 = inlined_call_operand.vmem [shape: f32[8,16], index: 3, kind: output, shape index: {}]
  %s4 = sld [smem:[#allocation0]]
  $region22: #{forward.91} parent=0
    _
  %s6 = ssub.s32 1, %s4
  %s7 = scalar_select 0, %s6, %s4
  // Predicated region
  $region2: #{forward.91} parent=0 // pred_check
    _
  $region3: #{forward.91} parent=0 // pred_check_branch
    %9 = sbr.rel (0) target = $region5
  $region4: #{forward.91} parent=0 // pred_region
    _
  $region5: #{forward.91} parent=0 // pred_fallthru
    _
  // Predicated region
  $region6: #{forward.91} parent=0 // pred_check
    _
  $region7: #{forward.91} parent=0 // pred_check_branch
    %11 = sbr.rel (0) target = $region9
  $region8: #{forward.91} parent=0 // pred_region
    _
  $region9: #{forward.91} parent=0 // pred_fallthru
    _
  // Predicated region
  $region10: #{forward.91} parent=0 // pred_check
    _
  $region11: #{forward.91} parent=0 // pred_check_branch
    %13 = sbr.rel (0) target = $region13
  $region12: #{forward.91} parent=0 // pred_region
    _
  $region13: #{forward.91} parent=0 // pred_fallthru
    _
  %v15 = vld [vmem:[%s0] sm:$0xf]
  %v16 = vld [vmem:[%s1] sm:$0xf]
  %v17 = vld [vmem:[%s1 + $0x4] sm:$0xf]
  %v18 = vld [vmem:[%s1 + $0x8] sm:$0xf]
  %v19 = vld [vmem:[%s1 + $0xc] sm:$0xf]
  %v20 = vld [vmem:[%s1 + $0x10] sm:$0xf]
  %v21 = vld [vmem:[%s1 + $0x14] sm:$0xf]
  %v22 = vld [vmem:[%s1 + $0x18] sm:$0xf]
  %v23 = vld [vmem:[%s1 + $0x1c] sm:$0xf]
  %v24 = vld [vmem:[%s2] sm:$0x1]
  %v26 = vperm.slane %v24, 0
  %v36 = vunpack.c.l.b16 %v16
  %v37 = vunpack.c.l.b16 %v17
  %v38 = vunpack.c.l.b16 %v18
  %v39 = vunpack.c.l.b16 %v19
  %v40 = vunpack.c.l.b16 %v20
  %v41 = vunpack.c.l.b16 %v21
  %v42 = vunpack.c.l.b16 %v22
  %v43 = vunpack.c.l.b16 %v23
  %v44 = vpack.c.b16 %v37, %v36
  %v45 = vpack.c.b16 %v39, %v38
  %v46 = vpack.c.b16 %v41, %v40
  %v47 = vpack.c.b16 %v43, %v42
  %vm52 = vcmask 523264
  %v54 = vsel %vm52, %v15, 0
  %56 = vmatpush.bf16.msra.mxu0 0
  %57 = vmatpush.bf16.msra.mxu0 0
  %58 = vmatpush.bf16.msra.mxu0 0
  %59 = vmatpush.bf16.msra.mxu0 0
  %60 = vmatpush.bf16.msra.mxu0 %v47
  %61 = vmatpush.bf16.msra.mxu0 %v46
  %62 = vmatpush.bf16.msra.mxu0 %v45
  %63 = vmatpush.bf16.msra.mxu0 %v44
  %64 = vmatmul.bf16.gmra.mxu0 %v54
  %v65 = vpop.f32.mrf.mxu0
  %v66 = vadd.f32 %v26, %v65
  %v67 = vpop.f32.mrf.mxu0
  %68 = vdwg.mxu0
  %vm69 = vcmask 130048
  %70 = vst.msk [vmem:[%s3] sm:$0xff] %vm69, %v66
  // Predicated region
  $region14: #{forward.91} parent=0 // pred_check
    _
  $region15: #{forward.91} parent=0 // pred_check_branch
    %72 = sbr.rel (0) target = $region17
  $region16: #{forward.91} parent=0 // pred_region
    _
  $region17: #{forward.91} parent=0 // pred_fallthru
    _
  // Predicated region
  $region18: #{forward.91} parent=0 // pred_check
    _
  $region19: #{forward.91} parent=0 // pred_check_branch
    %74 = sbr.rel (0) target = $region21
  $region20: #{forward.91} parent=0 // pred_region
    _
  $region21: #{forward.91} parent=0 // pred_fallthru
    _

// kernel: forward.93
$region0: #{forward.93}
  #allocation0 [shape = 'u32[]', space=smem, size = 0x4, offset = 0x4, fixed_abs, tag = 'smem constant byte address 0x4 - core index']
  #allocation1 [shape = 'u32[72,128]{1,0:T(1,128)}', space=vmem, size = 0x9000, scoped, tag = 'internal scratch']
  %s0 = inlined_call_operand.vmem [shape: bf16[8,16], index: 0, kind: input, shape index: {}]
  %s1 = inlined_call_operand.vmem [shape: bf16[16,32], index: 1, kind: input, shape index: {}]
  %s2 = inlined_call_operand.vmem [shape: f32[1,32], index: 2, kind: input, shape index: {}]
  %s3 = inlined_call_operand.vmem [shape: f32[8,32], index: 3, kind: input, shape index: {}]
  %s4 = inlined_call_operand.vmem [shape: f32[8,32], index: 4, kind: output, shape index: {0}]
  %s5 = inlined_call_operand.vmem [shape: f32[8,32], index: 5, kind: output, shape index: {1}]
  %6 = xla_tuple %s4, %s5
  %s7 = sld [smem:[#allocation0]]
  $region34: #{forward.93} parent=0
    _
  %s9 = ssub.s32 1, %s7
  %s10 = scalar_select 0, %s9, %s7
  // Predicated region
  $region2: #{forward.93} parent=0 // pred_check
    _
  $region3: #{forward.93} parent=0 // pred_check_branch
    %12 = sbr.rel (0) target = $region5
  $region4: #{forward.93} parent=0 // pred_region
    _
  $region5: #{forward.93} parent=0 // pred_fallthru
    _
  // Predicated region
  $region6: #{forward.93} parent=0 // pred_check
    _
  $region7: #{forward.93} parent=0 // pred_check_branch
    %14 = sbr.rel (0) target = $region9
  $region8: #{forward.93} parent=0 // pred_region
    _
  $region9: #{forward.93} parent=0 // pred_fallthru
    _
  // Predicated region
  $region10: #{forward.93} parent=0 // pred_check
    _
  $region11: #{forward.93} parent=0 // pred_check_branch
    %16 = sbr.rel (0) target = $region13
  $region12: #{forward.93} parent=0 // pred_region
    _
  $region13: #{forward.93} parent=0 // pred_fallthru
    _
  // Predicated region
  $region14: #{forward.93} parent=0 // pred_check
    _
  $region15: #{forward.93} parent=0 // pred_check_branch
    %18 = sbr.rel (0) target = $region17
  $region16: #{forward.93} parent=0 // pred_region
    _
  $region17: #{forward.93} parent=0 // pred_fallthru
    _
  %v20 = vld [vmem:[%s0] sm:$0xf]
  %v21 = vld [vmem:[%s1] sm:$0xf]
  %v22 = vld [vmem:[%s1 + $0x4] sm:$0xf]
  %v23 = vld [vmem:[%s2] sm:$0x1]
  %v25 = vperm.slane %v23, 0
  %v29 = vunpack.c.l.b16 %v21
  %v30 = vunpack.c.l.b16 %v22
  %v31 = vpack.c.b16 %v30, %v29
  %vm33 = vcmask 130048
  %v35 = vsel %vm33, %v20, 0
  %37 = vmatpush.bf16.msra.mxu0 0
  %38 = vmatpush.bf16.msra.mxu0 0
  %39 = vmatpush.bf16.msra.mxu0 0
  %40 = vmatpush.bf16.msra.mxu0 0
  %41 = vmatpush.bf16.msra.mxu0 0
  %42 = vmatpush.bf16.msra.mxu0 0
  %43 = vmatpush.bf16.msra.mxu0 0
  %44 = vmatpush.bf16.msra.mxu0 %v31
  %45 = vmatmul.bf16.gmra.mxu0 %v35
  %v46 = vpop.f32.mrf.mxu0
  %v47 = vadd.f32 %v25, %v46
  %v48 = vpop.f32.mrf.mxu0
  %49 = vdwg.mxu0
  %vm50 = vcmask 261120
  %51 = vst.msk [vmem:[%s4] sm:$0xff] %vm50, %v47
  %v52 = vsub.f32 0.0, %v47
  %v53 = vmul.f32 %v52, 1.442695
  %v54 = vpow.pop %v53
  %v55 = vadd.f32 %v54, 1.0
  %v56 = vrcp.pop %v55
  %v57 = vld [vmem:[%s3] sm:$0xff]
  %v58 = vmul.f32 %v56, %v57
  %59 = vst.msk [vmem:[%s5] sm:$0xff] %vm50, %v58
  // Predicated region
  $region18: #{forward.93} parent=0 // pred_check
    _
  $region19: #{forward.93} parent=0 // pred_check_branch
    %61 = sbr.rel (0) target = $region21
  $region20: #{forward.93} parent=0 // pred_region
    _
  $region21: #{forward.93} parent=0 // pred_fallthru
    _
  // Predicated region
  $region22: #{forward.93} parent=0 // pred_check
    _
  $region23: #{forward.93} parent=0 // pred_check_branch
    %63 = sbr.rel (0) target = $region25
  $region24: #{forward.93} parent=0 // pred_region
    _
  $region25: #{forward.93} parent=0 // pred_fallthru
    _
  // Predicated region
  $region26: #{forward.93} parent=0 // pred_check
    _
  $region27: #{forward.93} parent=0 // pred_check_branch
    %65 = sbr.rel (0) target = $region29
  $region28: #{forward.93} parent=0 // pred_region
    _
  $region29: #{forward.93} parent=0 // pred_fallthru
    _
  // Predicated region
  $region30: #{forward.93} parent=0 // pred_check
    _
  $region31: #{forward.93} parent=0 // pred_check_branch
    %67 = sbr.rel (0) target = $region33
  $region32: #{forward.93} parent=0 // pred_region
    _
  $region33: #{forward.93} parent=0 // pred_fallthru
    _

// kernel: forward.94
$region0: #{forward.94}
  #allocation0 [shape = 'u32[]', space=smem, size = 0x4, offset = 0x4, fixed_abs, tag = 'smem constant byte address 0x4 - core index']
  #allocation1 [shape = 'u32[72,128]{1,0:T(1,128)}', space=vmem, size = 0x9000, scoped, tag = 'internal scratch']
  %s0 = inlined_call_operand.vmem [shape: bf16[16,32], index: 0, kind: input, shape index: {}]
  %s1 = inlined_call_operand.vmem [shape: bf16[32,16], index: 1, kind: input, shape index: {}]
  %s2 = inlined_call_operand.vmem [shape: f32[1,16], index: 2, kind: input, shape index: {}]
  %s3 = inlined_call_operand.vmem [shape: f32[16,16], index: 3, kind: output, shape index: {}]
  %s4 = sld [smem:[#allocation0]]
  $region22: #{forward.94} parent=0
    _
  %s6 = ssub.s32 1, %s4
  %s7 = scalar_select 0, %s6, %s4
  // Predicated region
  $region2: #{forward.94} parent=0 // pred_check
    _
  $region3: #{forward.94} parent=0 // pred_check_branch
    %9 = sbr.rel (0) target = $region5
  $region4: #{forward.94} parent=0 // pred_region
    _
  $region5: #{forward.94} parent=0 // pred_fallthru
    _
  // Predicated region
  $region6: #{forward.94} parent=0 // pred_check
    _
  $region7: #{forward.94} parent=0 // pred_check_branch
    %11 = sbr.rel (0) target = $region9
  $region8: #{forward.94} parent=0 // pred_region
    _
  $region9: #{forward.94} parent=0 // pred_fallthru
    _
  // Predicated region
  $region10: #{forward.94} parent=0 // pred_check
    _
  $region11: #{forward.94} parent=0 // pred_check_branch
    %13 = sbr.rel (0) target = $region13
  $region12: #{forward.94} parent=0 // pred_region
    _
  $region13: #{forward.94} parent=0 // pred_fallthru
    _
  %v15 = vld [vmem:[%s0] sm:$0xf]
  %v16 = vld [vmem:[%s0 + $0x4] sm:$0xf]
  %v17 = vld [vmem:[%s1] sm:$0xf]
  %v18 = vld [vmem:[%s1 + $0x4] sm:$0xf]
  %v19 = vld [vmem:[%s1 + $0x8] sm:$0xf]
  %v20 = vld [vmem:[%s1 + $0xc] sm:$0xf]
  %v21 = vld [vmem:[%s2] sm:$0x1]
  %v23 = vperm.slane %v21, 0
  %v27 = vunpack.c.l.b16 %v15
  %v28 = vunpack.c.l.b16 %v16
  %v29 = vpack.c.b16 %v28, %v27
  %v34 = vunpack.c.l.b16 %v17
  %v35 = vunpack.c.l.b16 %v18
  %v36 = vunpack.c.l.b16 %v19
  %v37 = vunpack.c.l.b16 %v20
  %v38 = vpack.c.b16 %v35, %v34
  %v39 = vpack.c.b16 %v37, %v36
  %vm42 = vcmask 261120
  %v44 = vsel %vm42, %v29, 0
  %46 = vmatpush.bf16.msra.mxu0 0
  %47 = vmatpush.bf16.msra.mxu0 0
  %48 = vmatpush.bf16.msra.mxu0 0
  %49 = vmatpush.bf16.msra.mxu0 0
  %50 = vmatpush.bf16.msra.mxu0 0
  %51 = vmatpush.bf16.msra.mxu0 0
  %52 = vmatpush.bf16.msra.mxu0 %v39
  %53 = vmatpush.bf16.msra.mxu0 %v38
  %54 = vmatmul.bf16.gmra.mxu0 %v44
  %v55 = vpop.f32.mrf.mxu0
  %v56 = vadd.f32 %v23, %v55
  %v57 = vpop.f32.mrf.mxu0
  %v58 = vadd.f32 %v23, %v57
  %59 = vdwg.mxu0
  %vm60 = vcmp.gt.f32.partialorder %v56, 0.0
  %vm61 = vcmp.gt.f32.partialorder %v58, 0.0
  %v62 = vmin.f32 %v56, 0.0
  %v63 = vmin.f32 %v58, 0.0
  %v64 = vmul.f32 %v62, 1.442695
  %v65 = vpow.pop %v64
  %v66 = vmul.f32 %v63, 1.442695
  %v67 = vpow.pop %v66
  %v68 = vsub.f32 %v65, 1.0
  %v69 = vsub.f32 %v67, 1.0
  %v70 = vmul.f32 %v68, 1.6732632
  %v71 = vmul.f32 %v69, 1.6732632
  %v72 = vsel %vm60, %v56, %v70
  %v73 = vsel %vm61, %v58, %v71
  %v74 = vmul.f32 %v72, 1.050701
  %v75 = vmul.f32 %v73, 1.050701
  %vm76 = vcmask 130048
  %77 = vst.msk [vmem:[%s3] sm:$0xff] %vm76, %v74
  %78 = vst.msk [vmem:[%s3 + $0x8] sm:$0xff] %vm76, %v75
  // Predicated region
  $region14: #{forward.94} parent=0 // pred_check
    _
  $region15: #{forward.94} parent=0 // pred_check_branch
    %80 = sbr.rel (0) target = $region17
  $region16: #{forward.94} parent=0 // pred_region
    _
  $region17: #{forward.94} parent=0 // pred_fallthru
    _
  // Predicated region
  $region18: #{forward.94} parent=0 // pred_check
    _
  $region19: #{forward.94} parent=0 // pred_check_branch
    %82 = sbr.rel (0) target = $region21
  $region20: #{forward.94} parent=0 // pred_region
    _
  $region21: #{forward.94} parent=0 // pred_fallthru
    _

// kernel: forward.95
$region0: #{forward.95}
  #allocation0 [shape = 'u32[]', space=smem, size = 0x4, offset = 0x4, fixed_abs, tag = 'smem constant byte address 0x4 - core index']
  #allocation1 [shape = 'u32[72,128]{1,0:T(1,128)}', space=vmem, size = 0x9000, scoped, tag = 'internal scratch']
  %s0 = inlined_call_operand.vmem [shape: bf16[16,16], index: 0, kind: input, shape index: {}]
  %s1 = inlined_call_operand.vmem [shape: bf16[16,16], index: 1, kind: input, shape index: {}]
  %s2 = inlined_call_operand.vmem [shape: f32[1,16], index: 2, kind: input, shape index: {}]
  %s3 = inlined_call_operand.vmem [shape: f32[16,16], index: 3, kind: output, shape index: {}]
  %s4 = sld [smem:[#allocation0]]
  $region22: #{forward.95} parent=0
    _
  %s6 = ssub.s32 1, %s4
  %s7 = scalar_select 0, %s6, %s4
  // Predicated region
  $region2: #{forward.95} parent=0 // pred_check
    _
  $region3: #{forward.95} parent=0 // pred_check_branch
    %9 = sbr.rel (0) target = $region5
  $region4: #{forward.95} parent=0 // pred_region
    _
  $region5: #{forward.95} parent=0 // pred_fallthru
    _
  // Predicated region
  $region6: #{forward.95} parent=0 // pred_check
    _
  $region7: #{forward.95} parent=0 // pred_check_branch
    %11 = sbr.rel (0) target = $region9
  $region8: #{forward.95} parent=0 // pred_region
    _
  $region9: #{forward.95} parent=0 // pred_fallthru
    _
  // Predicated region
  $region10: #{forward.95} parent=0 // pred_check
    _
  $region11: #{forward.95} parent=0 // pred_check_branch
    %13 = sbr.rel (0) target = $region13
  $region12: #{forward.95} parent=0 // pred_region
    _
  $region13: #{forward.95} parent=0 // pred_fallthru
    _
  %v15 = vld [vmem:[%s0] sm:$0xf]
  %v16 = vld [vmem:[%s0 + $0x4] sm:$0xf]
  %v17 = vld [vmem:[%s1] sm:$0xf]
  %v18 = vld [vmem:[%s1 + $0x4] sm:$0xf]
  %v19 = vld [vmem:[%s2] sm:$0x1]
  %v21 = vperm.slane %v19, 0
  %v25 = vunpack.c.l.b16 %v15
  %v26 = vunpack.c.l.b16 %v16
  %v27 = vpack.c.b16 %v26, %v25
  %v30 = vunpack.c.l.b16 %v17
  %v31 = vunpack.c.l.b16 %v18
  %v32 = vpack.c.b16 %v31, %v30
  %vm34 = vcmask 130048
  %v36 = vsel %vm34, %v27, 0
  %38 = vmatpush.bf16.msra.mxu0 0
  %39 = vmatpush.bf16.msra.mxu0 0
  %40 = vmatpush.bf16.msra.mxu0 0
  %41 = vmatpush.bf16.msra.mxu0 0
  %42 = vmatpush.bf16.msra.mxu0 0
  %43 = vmatpush.bf16.msra.mxu0 0
  %44 = vmatpush.bf16.msra.mxu0 0
  %45 = vmatpush.bf16.msra.mxu0 %v32
  %46 = vmatmul.bf16.gmra.mxu0 %v36
  %v47 = vpop.f32.mrf.mxu0
  %v48 = vadd.f32 %v21, %v47
  %v49 = vpop.f32.mrf.mxu0
  %v50 = vadd.f32 %v21, %v49
  %51 = vdwg.mxu0
  %vm52 = vcmp.gt.f32.partialorder %v48, 0.0
  %vm53 = vcmp.gt.f32.partialorder %v50, 0.0
  %v54 = vmin.f32 %v48, 0.0
  %v55 = vmin.f32 %v50, 0.0
  %v56 = vmul.f32 %v54, 1.442695
  %v57 = vpow.pop %v56
  %v58 = vmul.f32 %v55, 1.442695
  %v59 = vpow.pop %v58
  %v60 = vsub.f32 %v57, 1.0
  %v61 = vsub.f32 %v59, 1.0
  %v62 = vmul.f32 %v60, 1.6732632
  %v63 = vmul.f32 %v61, 1.6732632
  %v64 = vsel %vm52, %v48, %v62
  %v65 = vsel %vm53, %v50, %v63
  %v66 = vmul.f32 %v64, 1.050701
  %v67 = vmul.f32 %v65, 1.050701
  %68 = vst.msk [vmem:[%s3] sm:$0xff] %vm34, %v66
  %69 = vst.msk [vmem:[%s3 + $0x8] sm:$0xff] %vm34, %v67
  // Predicated region
  $region14: #{forward.95} parent=0 // pred_check
    _
  $region15: #{forward.95} parent=0 // pred_check_branch
    %71 = sbr.rel (0) target = $region17
  $region16: #{forward.95} parent=0 // pred_region
    _
  $region17: #{forward.95} parent=0 // pred_fallthru
    _
  // Predicated region
  $region18: #{forward.95} parent=0 // pred_check
    _
  $region19: #{forward.95} parent=0 // pred_check_branch
    %73 = sbr.rel (0) target = $region21
  $region20: #{forward.95} parent=0 // pred_region
    _
  $region21: #{forward.95} parent=0 // pred_fallthru
    _

// kernel: forward.96
$region0: #{forward.96}
  #allocation0 [shape = 'u32[]', space=smem, size = 0x4, offset = 0x4, fixed_abs, tag = 'smem constant byte address 0x4 - core index']
  #allocation1 [shape = 'u32[72,128]{1,0:T(1,128)}', space=vmem, size = 0x9000, scoped, tag = 'internal scratch']
  %s0 = inlined_call_operand.vmem [shape: bf16[16,16], index: 0, kind: input, shape index: {}]
  %s1 = inlined_call_operand.vmem [shape: bf16[16,32], index: 1, kind: input, shape index: {}]
  %s2 = inlined_call_operand.vmem [shape: f32[1,32], index: 2, kind: input, shape index: {}]
  %s3 = inlined_call_operand.vmem [shape: f32[16,32], index: 3, kind: input, shape index: {}]
  %s4 = inlined_call_operand.vmem [shape: f32[16,32], index: 4, kind: output, shape index: {0}]
  %s5 = inlined_call_operand.vmem [shape: f32[16,32], index: 5, kind: output, shape index: {1}]
  %6 = xla_tuple %s4, %s5
  %s7 = sld [smem:[#allocation0]]
  $region34: #{forward.96} parent=0
    _
  %s9 = ssub.s32 1, %s7
  %s10 = scalar_select 0, %s9, %s7
  // Predicated region
  $region2: #{forward.96} parent=0 // pred_check
    _
  $region3: #{forward.96} parent=0 // pred_check_branch
    %12 = sbr.rel (0) target = $region5
  $region4: #{forward.96} parent=0 // pred_region
    _
  $region5: #{forward.96} parent=0 // pred_fallthru
    _
  // Predicated region
  $region6: #{forward.96} parent=0 // pred_check
    _
  $region7: #{forward.96} parent=0 // pred_check_branch
    %14 = sbr.rel (0) target = $region9
  $region8: #{forward.96} parent=0 // pred_region
    _
  $region9: #{forward.96} parent=0 // pred_fallthru
    _
  // Predicated region
  $region10: #{forward.96} parent=0 // pred_check
    _
  $region11: #{forward.96} parent=0 // pred_check_branch
    %16 = sbr.rel (0) target = $region13
  $region12: #{forward.96} parent=0 // pred_region
    _
  $region13: #{forward.96} parent=0 // pred_fallthru
    _
  // Predicated region
  $region14: #{forward.96} parent=0 // pred_check
    _
  $region15: #{forward.96} parent=0 // pred_check_branch
    %18 = sbr.rel (0) target = $region17
  $region16: #{forward.96} parent=0 // pred_region
    _
  $region17: #{forward.96} parent=0 // pred_fallthru
    _
  %v20 = vld [vmem:[%s0] sm:$0xf]
  %v21 = vld [vmem:[%s0 + $0x4] sm:$0xf]
  %v22 = vld [vmem:[%s1] sm:$0xf]
  %v23 = vld [vmem:[%s1 + $0x4] sm:$0xf]
  %v24 = vld [vmem:[%s2] sm:$0x1]
  %v26 = vperm.slane %v24, 0
  %v30 = vunpack.c.l.b16 %v20
  %v31 = vunpack.c.l.b16 %v21
  %v32 = vpack.c.b16 %v31, %v30
  %v35 = vunpack.c.l.b16 %v22
  %v36 = vunpack.c.l.b16 %v23
  %v37 = vpack.c.b16 %v36, %v35
  %vm39 = vcmask 130048
  %v41 = vsel %vm39, %v32, 0
  %43 = vmatpush.bf16.msra.mxu0 0
  %44 = vmatpush.bf16.msra.mxu0 0
  %45 = vmatpush.bf16.msra.mxu0 0
  %46 = vmatpush.bf16.msra.mxu0 0
  %47 = vmatpush.bf16.msra.mxu0 0
  %48 = vmatpush.bf16.msra.mxu0 0
  %49 = vmatpush.bf16.msra.mxu0 0
  %50 = vmatpush.bf16.msra.mxu0 %v37
  %51 = vmatmul.bf16.gmra.mxu0 %v41
  %v52 = vpop.f32.mrf.mxu0
  %v53 = vadd.f32 %v26, %v52
  %v54 = vpop.f32.mrf.mxu0
  %v55 = vadd.f32 %v26, %v54
  %56 = vdwg.mxu0
  %vm57 = vcmask 261120
  %58 = vst.msk [vmem:[%s4] sm:$0xff] %vm57, %v53
  %59 = vst.msk [vmem:[%s4 + $0x8] sm:$0xff] %vm57, %v55
  %v60 = vsub.f32 0.0, %v53
  %v61 = vsub.f32 0.0, %v55
  %v62 = vmul.f32 %v60, 1.442695
  %v63 = vpow.pop %v62
  %v64 = vmul.f32 %v61, 1.442695
  %v65 = vpow.pop %v64
  %v66 = vadd.f32 %v63, 1.0
  %v67 = vadd.f32 %v65, 1.0
  %v68 = vrcp.pop %v66
  %v69 = vrcp.pop %v67
  %v70 = vld [vmem:[%s3] sm:$0xff]
  %v71 = vld [vmem:[%s3 + $0x8] sm:$0xff]
  %v72 = vmul.f32 %v68, %v70
  %v73 = vmul.f32 %v69, %v71
  %74 = vst.msk [vmem:[%s5] sm:$0xff] %vm57, %v72
  %75 = vst.msk [vmem:[%s5 + $0x8] sm:$0xff] %vm57, %v73
  // Predicated region
  $region18: #{forward.96} parent=0 // pred_check
    _
  $region19: #{forward.96} parent=0 // pred_check_branch
    %77 = sbr.rel (0) target = $region21
  $region20: #{forward.96} parent=0 // pred_region
    _
  $region21: #{forward.96} parent=0 // pred_fallthru
    _
  // Predicated region
  $region22: #{forward.96} parent=0 // pred_check
    _
  $region23: #{forward.96} parent=0 // pred_check_branch
    %79 = sbr.rel (0) target = $region25
  $region24: #{forward.96} parent=0 // pred_region
    _
  $region25: #{forward.96} parent=0 // pred_fallthru
    _
  // Predicated region
  $region26: #{forward.96} parent=0 // pred_check
    _
  $region27: #{forward.96} parent=0 // pred_check_branch
    %81 = sbr.rel (0) target = $region29
  $region28: #{forward.96} parent=0 // pred_region
    _
  $region29: #{forward.96} parent=0 // pred_fallthru
    _
  // Predicated region
  $region30: #{forward.96} parent=0 // pred_check
    _
  $region31: #{forward.96} parent=0 // pred_check_branch
    %83 = sbr.rel (0) target = $region33
  $region32: #{forward.96} parent=0 // pred_region
    _
  $region33: #{forward.96} parent=0 // pred_fallthru
    _

// kernel: forward.98
$region0: #{forward.98}
  #allocation0 [shape = 'u32[]', space=smem, size = 0x4, offset = 0x4, fixed_abs, tag = 'smem constant byte address 0x4 - core index']
  #allocation1 [shape = 'u32[72,128]{1,0:T(1,128)}', space=vmem, size = 0x9000, scoped, tag = 'internal scratch']
  %s0 = inlined_call_operand.vmem [shape: bf16[8,16], index: 0, kind: input, shape index: {}]
  %s1 = inlined_call_operand.vmem [shape: bf16[16,32], index: 1, kind: input, shape index: {}]
  %s2 = inlined_call_operand.vmem [shape: f32[1,32], index: 2, kind: input, shape index: {}]
  %s3 = inlined_call_operand.vmem [shape: f32[8,32], index: 3, kind: output, shape index: {}]
  %s4 = sld [smem:[#allocation0]]
  $region22: #{forward.98} parent=0
    _
  %s6 = ssub.s32 1, %s4
  %s7 = scalar_select 0, %s6, %s4
  // Predicated region
  $region2: #{forward.98} parent=0 // pred_check
    _
  $region3: #{forward.98} parent=0 // pred_check_branch
    %9 = sbr.rel (0) target = $region5
  $region4: #{forward.98} parent=0 // pred_region
    _
  $region5: #{forward.98} parent=0 // pred_fallthru
    _
  // Predicated region
  $region6: #{forward.98} parent=0 // pred_check
    _
  $region7: #{forward.98} parent=0 // pred_check_branch
    %11 = sbr.rel (0) target = $region9
  $region8: #{forward.98} parent=0 // pred_region
    _
  $region9: #{forward.98} parent=0 // pred_fallthru
    _
  // Predicated region
  $region10: #{forward.98} parent=0 // pred_check
    _
  $region11: #{forward.98} parent=0 // pred_check_branch
    %13 = sbr.rel (0) target = $region13
  $region12: #{forward.98} parent=0 // pred_region
    _
  $region13: #{forward.98} parent=0 // pred_fallthru
    _
  %v15 = vld [vmem:[%s0] sm:$0xf]
  %v16 = vld [vmem:[%s1] sm:$0xf]
  %v17 = vld [vmem:[%s1 + $0x4] sm:$0xf]
  %v18 = vld [vmem:[%s2] sm:$0x1]
  %v20 = vperm.slane %v18, 0
  %v24 = vunpack.c.l.b16 %v16
  %v25 = vunpack.c.l.b16 %v17
  %v26 = vpack.c.b16 %v25, %v24
  %vm28 = vcmask 130048
  %v30 = vsel %vm28, %v15, 0
  %32 = vmatpush.bf16.msra.mxu0 0
  %33 = vmatpush.bf16.msra.mxu0 0
  %34 = vmatpush.bf16.msra.mxu0 0
  %35 = vmatpush.bf16.msra.mxu0 0
  %36 = vmatpush.bf16.msra.mxu0 0
  %37 = vmatpush.bf16.msra.mxu0 0
  %38 = vmatpush.bf16.msra.mxu0 0
  %39 = vmatpush.bf16.msra.mxu0 %v26
  %40 = vmatmul.bf16.gmra.mxu0 %v30
  %v41 = vpop.f32.mrf.mxu0
  %v42 = vadd.f32 %v20, %v41
  %v43 = vpop.f32.mrf.mxu0
  %44 = vdwg.mxu0
  %vm45 = vcmask 261120
  %46 = vst.msk [vmem:[%s3] sm:$0xff] %vm45, %v42
  // Predicated region
  $region14: #{forward.98} parent=0 // pred_check
    _
  $region15: #{forward.98} parent=0 // pred_check_branch
    %48 = sbr.rel (0) target = $region17
  $region16: #{forward.98} parent=0 // pred_region
    _
  $region17: #{forward.98} parent=0 // pred_fallthru
    _
  // Predicated region
  $region18: #{forward.98} parent=0 // pred_check
    _
  $region19: #{forward.98} parent=0 // pred_check_branch
    %50 = sbr.rel (0) target = $region21
  $region20: #{forward.98} parent=0 // pred_region
    _
  $region21: #{forward.98} parent=0 // pred_fallthru
    _

// kernel: forward.97
$region0: #{forward.97}
  #allocation0 [shape = 'u32[]', space=smem, size = 0x4, offset = 0x4, fixed_abs, tag = 'smem constant byte address 0x4 - core index']
  #allocation1 [shape = 'u32[72,128]{1,0:T(1,128)}', space=vmem, size = 0x9000, scoped, tag = 'internal scratch']
  %s0 = inlined_call_operand.vmem [shape: bf16[32,32], index: 0, kind: input, shape index: {}]
  %s1 = inlined_call_operand.vmem [shape: bf16[32,16], index: 1, kind: input, shape index: {}]
  %s2 = inlined_call_operand.vmem [shape: f32[1,16], index: 2, kind: input, shape index: {}]
  %s3 = inlined_call_operand.vmem [shape: f32[32,16], index: 3, kind: output, shape index: {}]
  %s4 = sld [smem:[#allocation0]]
  $region22: #{forward.97} parent=0
    _
  %s6 = ssub.s32 1, %s4
  %s7 = scalar_select 0, %s6, %s4
  // Predicated region
  $region2: #{forward.97} parent=0 // pred_check
    _
  $region3: #{forward.97} parent=0 // pred_check_branch
    %9 = sbr.rel (0) target = $region5
  $region4: #{forward.97} parent=0 // pred_region
    _
  $region5: #{forward.97} parent=0 // pred_fallthru
    _
  // Predicated region
  $region6: #{forward.97} parent=0 // pred_check
    _
  $region7: #{forward.97} parent=0 // pred_check_branch
    %11 = sbr.rel (0) target = $region9
  $region8: #{forward.97} parent=0 // pred_region
    _
  $region9: #{forward.97} parent=0 // pred_fallthru
    _
  // Predicated region
  $region10: #{forward.97} parent=0 // pred_check
    _
  $region11: #{forward.97} parent=0 // pred_check_branch
    %13 = sbr.rel (0) target = $region13
  $region12: #{forward.97} parent=0 // pred_region
    _
  $region13: #{forward.97} parent=0 // pred_fallthru
    _
  %v15 = vld [vmem:[%s0] sm:$0xf]
  %v16 = vld [vmem:[%s0 + $0x4] sm:$0xf]
  %v17 = vld [vmem:[%s0 + $0x8] sm:$0xf]
  %v18 = vld [vmem:[%s0 + $0xc] sm:$0xf]
  %v19 = vld [vmem:[%s1] sm:$0xf]
  %v20 = vld [vmem:[%s1 + $0x4] sm:$0xf]
  %v21 = vld [vmem:[%s1 + $0x8] sm:$0xf]
  %v22 = vld [vmem:[%s1 + $0xc] sm:$0xf]
  %v23 = vld [vmem:[%s2] sm:$0x1]
  %v25 = vperm.slane %v23, 0
  %v31 = vunpack.c.l.b16 %v15
  %v32 = vunpack.c.l.b16 %v16
  %v33 = vunpack.c.l.b16 %v17
  %v34 = vunpack.c.l.b16 %v18
  %v35 = vpack.c.b16 %v32, %v31
  %v36 = vpack.c.b16 %v34, %v33
  %v41 = vunpack.c.l.b16 %v19
  %v42 = vunpack.c.l.b16 %v20
  %v43 = vunpack.c.l.b16 %v21
  %v44 = vunpack.c.l.b16 %v22
  %v45 = vpack.c.b16 %v42, %v41
  %v46 = vpack.c.b16 %v44, %v43
  %vm49 = vcmask 261120
  %v51 = vsel %vm49, %v35, 0
  %v54 = vsel %vm49, %v36, 0
  %56 = vmatpush.bf16.msra.mxu0 0
  %57 = vmatpush.bf16.msra.mxu0 0
  %58 = vmatpush.bf16.msra.mxu0 0
  %59 = vmatpush.bf16.msra.mxu0 0
  %60 = vmatpush.bf16.msra.mxu0 0
  %61 = vmatpush.bf16.msra.mxu0 0
  %62 = vmatpush.bf16.msra.mxu0 %v46
  %63 = vmatpush.bf16.msra.mxu0 %v45
  %64 = vmatmul.bf16.gmra.mxu0 %v51
  %v65 = vpop.f32.mrf.mxu0
  %v66 = vadd.f32 %v25, %v65
  %v67 = vpop.f32.mrf.mxu0
  %v68 = vadd.f32 %v25, %v67
  %69 = vmatmul.bf16.gmra.mxu0 %v54
  %v70 = vpop.f32.mrf.mxu0
  %v71 = vadd.f32 %v25, %v70
  %v72 = vpop.f32.mrf.mxu0
  %v73 = vadd.f32 %v25, %v72
  %74 = vdwg.mxu0
  %vm75 = vcmp.gt.f32.partialorder %v66, 0.0
  %vm76 = vcmp.gt.f32.partialorder %v68, 0.0
  %vm77 = vcmp.gt.f32.partialorder %v71, 0.0
  %vm78 = vcmp.gt.f32.partialorder %v73, 0.0
  %v79 = vmin.f32 %v66, 0.0
  %v80 = vmin.f32 %v68, 0.0
  %v81 = vmin.f32 %v71, 0.0
  %v82 = vmin.f32 %v73, 0.0
  %v83 = vmul.f32 %v79, 1.442695
  %v84 = vpow.pop %v83
  %v85 = vmul.f32 %v80, 1.442695
  %v86 = vpow.pop %v85
  %v87 = vmul.f32 %v81, 1.442695
  %v88 = vpow.pop %v87
  %v89 = vmul.f32 %v82, 1.442695
  %v90 = vpow.pop %v89
  %v91 = vsub.f32 %v84, 1.0
  %v92 = vsub.f32 %v86, 1.0
  %v93 = vsub.f32 %v88, 1.0
  %v94 = vsub.f32 %v90, 1.0
  %v95 = vmul.f32 %v91, 1.6732632
  %v96 = vmul.f32 %v92, 1.6732632
  %v97 = vmul.f32 %v93, 1.6732632
  %v98 = vmul.f32 %v94, 1.6732632
  %v99 = vsel %vm75, %v66, %v95
  %v100 = vsel %vm76, %v68, %v96
  %v101 = vsel %vm77, %v71, %v97
  %v102 = vsel %vm78, %v73, %v98
  %v103 = vmul.f32 %v99, 1.050701
  %v104 = vmul.f32 %v100, 1.050701
  %v105 = vmul.f32 %v101, 1.050701
  %v106 = vmul.f32 %v102, 1.050701
  %vm107 = vcmask 130048
  %108 = vst.msk [vmem:[%s3] sm:$0xff] %vm107, %v103
  %109 = vst.msk [vmem:[%s3 + $0x8] sm:$0xff] %vm107, %v104
  %110 = vst.msk [vmem:[%s3 + $0x10] sm:$0xff] %vm107, %v105
  %111 = vst.msk [vmem:[%s3 + $0x18] sm:$0xff] %vm107, %v106
  // Predicated region
  $region14: #{forward.97} parent=0 // pred_check
    _
  $region15: #{forward.97} parent=0 // pred_check_branch
    %113 = sbr.rel (0) target = $region17
  $region16: #{forward.97} parent=0 // pred_region
    _
  $region17: #{forward.97} parent=0 // pred_fallthru
    _
  // Predicated region
  $region18: #{forward.97} parent=0 // pred_check
    _
  $region19: #{forward.97} parent=0 // pred_check_branch
    %115 = sbr.rel (0) target = $region21
  $region20: #{forward.97} parent=0 // pred_region
    _
  $region21: #{forward.97} parent=0 // pred_fallthru
    _

// kernel: forward.106
$region0: #{forward.106}
  #allocation0 [shape = 'u32[]', space=smem, size = 0x4, offset = 0x4, fixed_abs, tag = 'smem constant byte address 0x4 - core index']
  #allocation1 [shape = 'u32[72,128]{1,0:T(1,128)}', space=vmem, size = 0x9000, scoped, tag = 'internal scratch']
  %s0 = inlined_call_operand.vmem [shape: bf16[16,16], index: 0, kind: input, shape index: {}]
  %s1 = inlined_call_operand.vmem [shape: bf16[16,32], index: 1, kind: input, shape index: {}]
  %s2 = inlined_call_operand.vmem [shape: f32[1,32], index: 2, kind: input, shape index: {}]
  %s3 = inlined_call_operand.vmem [shape: f32[16,32], index: 3, kind: output, shape index: {}]
  %s4 = sld [smem:[#allocation0]]
  $region22: #{forward.106} parent=0
    _
  %s6 = ssub.s32 1, %s4
  %s7 = scalar_select 0, %s6, %s4
  // Predicated region
  $region2: #{forward.106} parent=0 // pred_check
    _
  $region3: #{forward.106} parent=0 // pred_check_branch
    %9 = sbr.rel (0) target = $region5
  $region4: #{forward.106} parent=0 // pred_region
    _
  $region5: #{forward.106} parent=0 // pred_fallthru
    _
  // Predicated region
  $region6: #{forward.106} parent=0 // pred_check
    _
  $region7: #{forward.106} parent=0 // pred_check_branch
    %11 = sbr.rel (0) target = $region9
  $region8: #{forward.106} parent=0 // pred_region
    _
  $region9: #{forward.106} parent=0 // pred_fallthru
    _
  // Predicated region
  $region10: #{forward.106} parent=0 // pred_check
    _
  $region11: #{forward.106} parent=0 // pred_check_branch
    %13 = sbr.rel (0) target = $region13
  $region12: #{forward.106} parent=0 // pred_region
    _
  $region13: #{forward.106} parent=0 // pred_fallthru
    _
  %v15 = vld [vmem:[%s0] sm:$0xf]
  %v16 = vld [vmem:[%s0 + $0x4] sm:$0xf]
  %v17 = vld [vmem:[%s1] sm:$0xf]
  %v18 = vld [vmem:[%s1 + $0x4] sm:$0xf]
  %v19 = vld [vmem:[%s2] sm:$0x1]
  %v21 = vperm.slane %v19, 0
  %v25 = vunpack.c.l.b16 %v15
  %v26 = vunpack.c.l.b16 %v16
  %v27 = vpack.c.b16 %v26, %v25
  %v30 = vunpack.c.l.b16 %v17
  %v31 = vunpack.c.l.b16 %v18
  %v32 = vpack.c.b16 %v31, %v30
  %vm34 = vcmask 130048
  %v36 = vsel %vm34, %v27, 0
  %38 = vmatpush.bf16.msra.mxu0 0
  %39 = vmatpush.bf16.msra.mxu0 0
  %40 = vmatpush.bf16.msra.mxu0 0
  %41 = vmatpush.bf16.msra.mxu0 0
  %42 = vmatpush.bf16.msra.mxu0 0
  %43 = vmatpush.bf16.msra.mxu0 0
  %44 = vmatpush.bf16.msra.mxu0 0
  %45 = vmatpush.bf16.msra.mxu0 %v32
  %46 = vmatmul.bf16.gmra.mxu0 %v36
  %v47 = vpop.f32.mrf.mxu0
  %v48 = vadd.f32 %v21, %v47
  %v49 = vpop.f32.mrf.mxu0
  %v50 = vadd.f32 %v21, %v49
  %51 = vdwg.mxu0
  %vm52 = vcmask 261120
  %53 = vst.msk [vmem:[%s3] sm:$0xff] %vm52, %v48
  %54 = vst.msk [vmem:[%s3 + $0x8] sm:$0xff] %vm52, %v50
  // Predicated region
  $region14: #{forward.106} parent=0 // pred_check
    _
  $region15: #{forward.106} parent=0 // pred_check_branch
    %56 = sbr.rel (0) target = $region17
  $region16: #{forward.106} parent=0 // pred_region
    _
  $region17: #{forward.106} parent=0 // pred_fallthru
    _
  // Predicated region
  $region18: #{forward.106} parent=0 // pred_check
    _
  $region19: #{forward.106} parent=0 // pred_check_branch
    %58 = sbr.rel (0) target = $region21
  $region20: #{forward.106} parent=0 // pred_region
    _
  $region21: #{forward.106} parent=0 // pred_fallthru
    _

// kernel: forward.105
$region0: #{forward.105}
  #allocation0 [shape = 'u32[]', space=smem, size = 0x4, offset = 0x4, fixed_abs, tag = 'smem constant byte address 0x4 - core index']
  #allocation1 [shape = 'u32[72,128]{1,0:T(1,128)}', space=vmem, size = 0x9000, scoped, tag = 'internal scratch']
  %s0 = inlined_call_operand.vmem [shape: bf16[16,64], index: 0, kind: input, shape index: {}]
  %s1 = inlined_call_operand.vmem [shape: bf16[64,16], index: 1, kind: input, shape index: {}]
  %s2 = inlined_call_operand.vmem [shape: f32[1,16], index: 2, kind: input, shape index: {}]
  %s3 = inlined_call_operand.vmem [shape: f32[16,16], index: 3, kind: input, shape index: {}]
  %s4 = inlined_call_operand.vmem [shape: f32[16,16], index: 4, kind: output, shape index: {}]
  %s5 = sld [smem:[#allocation0]]
  $region26: #{forward.105} parent=0
    _
  %s7 = ssub.s32 1, %s5
  %s8 = scalar_select 0, %s7, %s5
  // Predicated region
  $region2: #{forward.105} parent=0 // pred_check
    _
  $region3: #{forward.105} parent=0 // pred_check_branch
    %10 = sbr.rel (0) target = $region5
  $region4: #{forward.105} parent=0 // pred_region
    _
  $region5: #{forward.105} parent=0 // pred_fallthru
    _
  // Predicated region
  $region6: #{forward.105} parent=0 // pred_check
    _
  $region7: #{forward.105} parent=0 // pred_check_branch
    %12 = sbr.rel (0) target = $region9
  $region8: #{forward.105} parent=0 // pred_region
    _
  $region9: #{forward.105} parent=0 // pred_fallthru
    _
  // Predicated region
  $region10: #{forward.105} parent=0 // pred_check
    _
  $region11: #{forward.105} parent=0 // pred_check_branch
    %14 = sbr.rel (0) target = $region13
  $region12: #{forward.105} parent=0 // pred_region
    _
  $region13: #{forward.105} parent=0 // pred_fallthru
    _
  // Predicated region
  $region14: #{forward.105} parent=0 // pred_check
    _
  $region15: #{forward.105} parent=0 // pred_check_branch
    %16 = sbr.rel (0) target = $region17
  $region16: #{forward.105} parent=0 // pred_region
    _
  $region17: #{forward.105} parent=0 // pred_fallthru
    _
  %v18 = vld [vmem:[%s0] sm:$0xf]
  %v19 = vld [vmem:[%s0 + $0x4] sm:$0xf]
  %v20 = vld [vmem:[%s1] sm:$0xf]
  %v21 = vld [vmem:[%s1 + $0x4] sm:$0xf]
  %v22 = vld [vmem:[%s1 + $0x8] sm:$0xf]
  %v23 = vld [vmem:[%s1 + $0xc] sm:$0xf]
  %v24 = vld [vmem:[%s1 + $0x10] sm:$0xf]
  %v25 = vld [vmem:[%s1 + $0x14] sm:$0xf]
  %v26 = vld [vmem:[%s1 + $0x18] sm:$0xf]
  %v27 = vld [vmem:[%s1 + $0x1c] sm:$0xf]
  %v28 = vld [vmem:[%s2] sm:$0x1]
  %v30 = vperm.slane %v28, 0
  %v34 = vunpack.c.l.b16 %v18
  %v35 = vunpack.c.l.b16 %v19
  %v36 = vpack.c.b16 %v35, %v34
  %v45 = vunpack.c.l.b16 %v20
  %v46 = vunpack.c.l.b16 %v21
  %v47 = vunpack.c.l.b16 %v22
  %v48 = vunpack.c.l.b16 %v23
  %v49 = vunpack.c.l.b16 %v24
  %v50 = vunpack.c.l.b16 %v25
  %v51 = vunpack.c.l.b16 %v26
  %v52 = vunpack.c.l.b16 %v27
  %v53 = vpack.c.b16 %v46, %v45
  %v54 = vpack.c.b16 %v48, %v47
  %v55 = vpack.c.b16 %v50, %v49
  %v56 = vpack.c.b16 %v52, %v51
  %vm61 = vcmask 523264
  %v63 = vsel %vm61, %v36, 0
  %65 = vmatpush.bf16.msra.mxu0 0
  %66 = vmatpush.bf16.msra.mxu0 0
  %67 = vmatpush.bf16.msra.mxu0 0
  %68 = vmatpush.bf16.msra.mxu0 0
  %69 = vmatpush.bf16.msra.mxu0 %v56
  %70 = vmatpush.bf16.msra.mxu0 %v55
  %71 = vmatpush.bf16.msra.mxu0 %v54
  %72 = vmatpush.bf16.msra.mxu0 %v53
  %73 = vmatmul.bf16.gmra.mxu0 %v63
  %v74 = vpop.f32.mrf.mxu0
  %v75 = vadd.f32 %v30, %v74
  %v76 = vpop.f32.mrf.mxu0
  %v77 = vadd.f32 %v30, %v76
  %78 = vdwg.mxu0
  %v79 = vld [vmem:[%s3] sm:$0xff]
  %v80 = vld [vmem:[%s3 + $0x8] sm:$0xff]
  %v81 = vadd.f32 %v75, %v79
  %v82 = vadd.f32 %v77, %v80
  %vm83 = vcmask 130048
  %84 = vst.msk [vmem:[%s4] sm:$0xff] %vm83, %v81
  %85 = vst.msk [vmem:[%s4 + $0x8] sm:$0xff] %vm83, %v82
  // Predicated region
  $region18: #{forward.105} parent=0 // pred_check
    _
  $region19: #{forward.105} parent=0 // pred_check_branch
    %87 = sbr.rel (0) target = $region21
  $region20: #{forward.105} parent=0 // pred_region
    _
  $region21: #{forward.105} parent=0 // pred_fallthru
    _
  // Predicated region
  $region22: #{forward.105} parent=0 // pred_check
    _
  $region23: #{forward.105} parent=0 // pred_check_branch
    %89 = sbr.rel (0) target = $region25
  $region24: #{forward.105} parent=0 // pred_region
    _
  $region25: #{forward.105} parent=0 // pred_fallthru
    _

// kernel: forward.113
$region0: #{forward.113}
  #allocation0 [shape = 'u32[]', space=smem, size = 0x4, offset = 0x4, fixed_abs, tag = 'smem constant byte address 0x4 - core index']
  #allocation1 [shape = 'u32[72,128]{1,0:T(1,128)}', space=vmem, size = 0x9000, scoped, tag = 'internal scratch']
  %s0 = inlined_call_operand.vmem [shape: bf16[32,64], index: 0, kind: input, shape index: {}]
  %s1 = inlined_call_operand.vmem [shape: bf16[64,16], index: 1, kind: input, shape index: {}]
  %s2 = inlined_call_operand.vmem [shape: f32[1,16], index: 2, kind: input, shape index: {}]
  %s3 = inlined_call_operand.vmem [shape: f32[32,16], index: 3, kind: input, shape index: {}]
  %s4 = inlined_call_operand.vmem [shape: f32[32,16], index: 4, kind: output, shape index: {}]
  %s5 = sld [smem:[#allocation0]]
  $region26: #{forward.113} parent=0
    _
  %s7 = ssub.s32 1, %s5
  %s8 = scalar_select 0, %s7, %s5
  // Predicated region
  $region2: #{forward.113} parent=0 // pred_check
    _
  $region3: #{forward.113} parent=0 // pred_check_branch
    %10 = sbr.rel (0) target = $region5
  $region4: #{forward.113} parent=0 // pred_region
    _
  $region5: #{forward.113} parent=0 // pred_fallthru
    _
  // Predicated region
  $region6: #{forward.113} parent=0 // pred_check
    _
  $region7: #{forward.113} parent=0 // pred_check_branch
    %12 = sbr.rel (0) target = $region9
  $region8: #{forward.113} parent=0 // pred_region
    _
  $region9: #{forward.113} parent=0 // pred_fallthru
    _
  // Predicated region
  $region10: #{forward.113} parent=0 // pred_check
    _
  $region11: #{forward.113} parent=0 // pred_check_branch
    %14 = sbr.rel (0) target = $region13
  $region12: #{forward.113} parent=0 // pred_region
    _
  $region13: #{forward.113} parent=0 // pred_fallthru
    _
  // Predicated region
  $region14: #{forward.113} parent=0 // pred_check
    _
  $region15: #{forward.113} parent=0 // pred_check_branch
    %16 = sbr.rel (0) target = $region17
  $region16: #{forward.113} parent=0 // pred_region
    _
  $region17: #{forward.113} parent=0 // pred_fallthru
    _
  %v18 = vld [vmem:[%s0] sm:$0xf]
  %v19 = vld [vmem:[%s0 + $0x4] sm:$0xf]
  %v20 = vld [vmem:[%s0 + $0x8] sm:$0xf]
  %v21 = vld [vmem:[%s0 + $0xc] sm:$0xf]
  %v22 = vld [vmem:[%s1] sm:$0xf]
  %v23 = vld [vmem:[%s1 + $0x4] sm:$0xf]
  %v24 = vld [vmem:[%s1 + $0x8] sm:$0xf]
  %v25 = vld [vmem:[%s1 + $0xc] sm:$0xf]
  %v26 = vld [vmem:[%s1 + $0x10] sm:$0xf]
  %v27 = vld [vmem:[%s1 + $0x14] sm:$0xf]
  %v28 = vld [vmem:[%s1 + $0x18] sm:$0xf]
  %v29 = vld [vmem:[%s1 + $0x1c] sm:$0xf]
  %v30 = vld [vmem:[%s2] sm:$0x1]
  %v32 = vperm.slane %v30, 0
  %v38 = vunpack.c.l.b16 %v18
  %v39 = vunpack.c.l.b16 %v19
  %v40 = vunpack.c.l.b16 %v20
  %v41 = vunpack.c.l.b16 %v21
  %v42 = vpack.c.b16 %v39, %v38
  %v43 = vpack.c.b16 %v41, %v40
  %v52 = vunpack.c.l.b16 %v22
  %v53 = vunpack.c.l.b16 %v23
  %v54 = vunpack.c.l.b16 %v24
  %v55 = vunpack.c.l.b16 %v25
  %v56 = vunpack.c.l.b16 %v26
  %v57 = vunpack.c.l.b16 %v27
  %v58 = vunpack.c.l.b16 %v28
  %v59 = vunpack.c.l.b16 %v29
  %v60 = vpack.c.b16 %v53, %v52
  %v61 = vpack.c.b16 %v55, %v54
  %v62 = vpack.c.b16 %v57, %v56
  %v63 = vpack.c.b16 %v59, %v58
  %vm68 = vcmask 523264
  %v70 = vsel %vm68, %v42, 0
  %v73 = vsel %vm68, %v43, 0
  %75 = vmatpush.bf16.msra.mxu0 0
  %76 = vmatpush.bf16.msra.mxu0 0
  %77 = vmatpush.bf16.msra.mxu0 0
  %78 = vmatpush.bf16.msra.mxu0 0
  %79 = vmatpush.bf16.msra.mxu0 %v63
  %80 = vmatpush.bf16.msra.mxu0 %v62
  %81 = vmatpush.bf16.msra.mxu0 %v61
  %82 = vmatpush.bf16.msra.mxu0 %v60
  %83 = vmatmul.bf16.gmra.mxu0 %v70
  %v84 = vpop.f32.mrf.mxu0
  %v85 = vadd.f32 %v32, %v84
  %v86 = vpop.f32.mrf.mxu0
  %v87 = vadd.f32 %v32, %v86
  %88 = vmatmul.bf16.gmra.mxu0 %v73
  %v89 = vpop.f32.mrf.mxu0
  %v90 = vadd.f32 %v32, %v89
  %v91 = vpop.f32.mrf.mxu0
  %v92 = vadd.f32 %v32, %v91
  %93 = vdwg.mxu0
  %v94 = vld [vmem:[%s3] sm:$0xff]
  %v95 = vld [vmem:[%s3 + $0x8] sm:$0xff]
  %v96 = vld [vmem:[%s3 + $0x10] sm:$0xff]
  %v97 = vld [vmem:[%s3 + $0x18] sm:$0xff]
  %v98 = vadd.f32 %v85, %v94
  %v99 = vadd.f32 %v87, %v95
  %v100 = vadd.f32 %v90, %v96
  %v101 = vadd.f32 %v92, %v97
  %vm102 = vcmask 130048
  %103 = vst.msk [vmem:[%s4] sm:$0xff] %vm102, %v98
  %104 = vst.msk [vmem:[%s4 + $0x8] sm:$0xff] %vm102, %v99
  %105 = vst.msk [vmem:[%s4 + $0x10] sm:$0xff] %vm102, %v100
  %106 = vst.msk [vmem:[%s4 + $0x18] sm:$0xff] %vm102, %v101
  // Predicated region
  $region18: #{forward.113} parent=0 // pred_check
    _
  $region19: #{forward.113} parent=0 // pred_check_branch
    %108 = sbr.rel (0) target = $region21
  $region20: #{forward.113} parent=0 // pred_region
    _
  $region21: #{forward.113} parent=0 // pred_fallthru
    _
  // Predicated region
  $region22: #{forward.113} parent=0 // pred_check
    _
  $region23: #{forward.113} parent=0 // pred_check_branch
    %110 = sbr.rel (0) target = $region25
  $region24: #{forward.113} parent=0 // pred_region
    _
  $region25: #{forward.113} parent=0 // pred_fallthru
    _

// kernel: forward.114
$region0: #{forward.114}
  #allocation0 [shape = 'u32[]', space=smem, size = 0x4, offset = 0x4, fixed_abs, tag = 'smem constant byte address 0x4 - core index']
  #allocation1 [shape = 'u32[72,128]{1,0:T(1,128)}', space=vmem, size = 0x9000, scoped, tag = 'internal scratch']
  %s0 = inlined_call_operand.vmem [shape: bf16[32,16], index: 0, kind: input, shape index: {}]
  %s1 = inlined_call_operand.vmem [shape: bf16[16,32], index: 1, kind: input, shape index: {}]
  %s2 = inlined_call_operand.vmem [shape: f32[1,32], index: 2, kind: input, shape index: {}]
  %s3 = inlined_call_operand.vmem [shape: f32[32,32], index: 3, kind: output, shape index: {}]
  %s4 = sld [smem:[#allocation0]]
  $region22: #{forward.114} parent=0
    _
  %s6 = ssub.s32 1, %s4
  %s7 = scalar_select 0, %s6, %s4
  // Predicated region
  $region2: #{forward.114} parent=0 // pred_check
    _
  $region3: #{forward.114} parent=0 // pred_check_branch
    %9 = sbr.rel (0) target = $region5
  $region4: #{forward.114} parent=0 // pred_region
    _
  $region5: #{forward.114} parent=0 // pred_fallthru
    _
  // Predicated region
  $region6: #{forward.114} parent=0 // pred_check
    _
  $region7: #{forward.114} parent=0 // pred_check_branch
    %11 = sbr.rel (0) target = $region9
  $region8: #{forward.114} parent=0 // pred_region
    _
  $region9: #{forward.114} parent=0 // pred_fallthru
    _
  // Predicated region
  $region10: #{forward.114} parent=0 // pred_check
    _
  $region11: #{forward.114} parent=0 // pred_check_branch
    %13 = sbr.rel (0) target = $region13
  $region12: #{forward.114} parent=0 // pred_region
    _
  $region13: #{forward.114} parent=0 // pred_fallthru
    _
  %v15 = vld [vmem:[%s0] sm:$0xf]
  %v16 = vld [vmem:[%s0 + $0x4] sm:$0xf]
  %v17 = vld [vmem:[%s0 + $0x8] sm:$0xf]
  %v18 = vld [vmem:[%s0 + $0xc] sm:$0xf]
  %v19 = vld [vmem:[%s1] sm:$0xf]
  %v20 = vld [vmem:[%s1 + $0x4] sm:$0xf]
  %v21 = vld [vmem:[%s2] sm:$0x1]
  %v23 = vperm.slane %v21, 0
  %v29 = vunpack.c.l.b16 %v15
  %v30 = vunpack.c.l.b16 %v16
  %v31 = vunpack.c.l.b16 %v17
  %v32 = vunpack.c.l.b16 %v18
  %v33 = vpack.c.b16 %v30, %v29
  %v34 = vpack.c.b16 %v32, %v31
  %v37 = vunpack.c.l.b16 %v19
  %v38 = vunpack.c.l.b16 %v20
  %v39 = vpack.c.b16 %v38, %v37
  %vm41 = vcmask 130048
  %v43 = vsel %vm41, %v33, 0
  %v46 = vsel %vm41, %v34, 0
  %48 = vmatpush.bf16.msra.mxu0 0
  %49 = vmatpush.bf16.msra.mxu0 0
  %50 = vmatpush.bf16.msra.mxu0 0
  %51 = vmatpush.bf16.msra.mxu0 0
  %52 = vmatpush.bf16.msra.mxu0 0
  %53 = vmatpush.bf16.msra.mxu0 0
  %54 = vmatpush.bf16.msra.mxu0 0
  %55 = vmatpush.bf16.msra.mxu0 %v39
  %56 = vmatmul.bf16.gmra.mxu0 %v43
  %v57 = vpop.f32.mrf.mxu0
  %v58 = vadd.f32 %v23, %v57
  %v59 = vpop.f32.mrf.mxu0
  %v60 = vadd.f32 %v23, %v59
  %61 = vmatmul.bf16.gmra.mxu0 %v46
  %v62 = vpop.f32.mrf.mxu0
  %v63 = vadd.f32 %v23, %v62
  %v64 = vpop.f32.mrf.mxu0
  %v65 = vadd.f32 %v23, %v64
  %66 = vdwg.mxu0
  %vm67 = vcmask 261120
  %68 = vst.msk [vmem:[%s3] sm:$0xff] %vm67, %v58
  %69 = vst.msk [vmem:[%s3 + $0x8] sm:$0xff] %vm67, %v60
  %70 = vst.msk [vmem:[%s3 + $0x10] sm:$0xff] %vm67, %v63
  %71 = vst.msk [vmem:[%s3 + $0x18] sm:$0xff] %vm67, %v65
  // Predicated region
  $region14: #{forward.114} parent=0 // pred_check
    _
  $region15: #{forward.114} parent=0 // pred_check_branch
    %73 = sbr.rel (0) target = $region17
  $region16: #{forward.114} parent=0 // pred_region
    _
  $region17: #{forward.114} parent=0 // pred_fallthru
    _
  // Predicated region
  $region18: #{forward.114} parent=0 // pred_check
    _
  $region19: #{forward.114} parent=0 // pred_check_branch
    %75 = sbr.rel (0) target = $region21
  $region20: #{forward.114} parent=0 // pred_region
    _
  $region21: #{forward.114} parent=0 // pred_fallthru
    _

// kernel: forward.121
$region0: #{forward.121}
  #allocation0 [shape = 'u32[]', space=smem, size = 0x4, offset = 0x4, fixed_abs, tag = 'smem constant byte address 0x4 - core index']
  #allocation1 [shape = 'u32[72,128]{1,0:T(1,128)}', space=vmem, size = 0x9000, scoped, tag = 'internal scratch']
  %s0 = inlined_call_operand.vmem [shape: bf16[64,64], index: 0, kind: input, shape index: {}]
  %s1 = inlined_call_operand.vmem [shape: bf16[64,16], index: 1, kind: input, shape index: {}]
  %s2 = inlined_call_operand.vmem [shape: f32[1,16], index: 2, kind: input, shape index: {}]
  %s3 = inlined_call_operand.hbm [shape: f32[64,16], index: 3, kind: output, shape index: {}]
  %s4 = sld [smem:[#allocation0]]
  $region22: #{forward.121} parent=0
    _
  %s6 = ssub.s32 1, %s4
  %s7 = scalar_select 0, %s6, %s4
  $region1: #{forward.121} parent=0
    #allocation2 [shape = 'u8[32768]{0}', space=vmem, size = 0x8000, scoped, tag = 'output window, operand 0, single buffered']
    #allocation3 [shape = 's32[1]{0}', space=sflag, size = 0x4, scoped, tag = 'scoped memory for forward.121']
    %8 = vsyncpa [#allocation3], 0
    // Predicated region
    $region2: #{forward.121} parent=1 // pred_check
      _
    $region3: #{forward.121} parent=1 // pred_check_branch
      %10 = sbr.rel (0) target = $region5
    $region4: #{forward.121} parent=1 // pred_region
      _
    $region5: #{forward.121} parent=1 // pred_fallthru
      _
    // Predicated region
    $region6: #{forward.121} parent=1 // pred_check
      _
    $region7: #{forward.121} parent=1 // pred_check_branch
      %12 = sbr.rel (0) target = $region9
    $region8: #{forward.121} parent=1 // pred_region
      _
    $region9: #{forward.121} parent=1 // pred_fallthru
      _
    // Predicated region
    $region10: #{forward.121} parent=1 // pred_check
      _
    $region11: #{forward.121} parent=1 // pred_check_branch
      %14 = sbr.rel (0) target = $region13
    $region12: #{forward.121} parent=1 // pred_region
      _
    $region13: #{forward.121} parent=1 // pred_fallthru
      _
    %v16 = vld [vmem:[%s0] sm:$0xf]
    %v17 = vld [vmem:[%s0 + $0x4] sm:$0xf]
    %v18 = vld [vmem:[%s0 + $0x8] sm:$0xf]
    %v19 = vld [vmem:[%s0 + $0xc] sm:$0xf]
    %v20 = vld [vmem:[%s0 + $0x10] sm:$0xf]
    %v21 = vld [vmem:[%s0 + $0x14] sm:$0xf]
    %v22 = vld [vmem:[%s0 + $0x18] sm:$0xf]
    %v23 = vld [vmem:[%s0 + $0x1c] sm:$0xf]
    %v24 = vld [vmem:[%s1] sm:$0xf]
    %v25 = vld [vmem:[%s1 + $0x4] sm:$0xf]
    %v26 = vld [vmem:[%s1 + $0x8] sm:$0xf]
    %v27 = vld [vmem:[%s1 + $0xc] sm:$0xf]
    %v28 = vld [vmem:[%s1 + $0x10] sm:$0xf]
    %v29 = vld [vmem:[%s1 + $0x14] sm:$0xf]
    %v30 = vld [vmem:[%s1 + $0x18] sm:$0xf]
    %v31 = vld [vmem:[%s1 + $0x1c] sm:$0xf]
    %v32 = vld [vmem:[%s2] sm:$0x1]
    %v34 = vperm.slane %v32, 0
    %v44 = vunpack.c.l.b16 %v16
    %v45 = vunpack.c.l.b16 %v17
    %v46 = vunpack.c.l.b16 %v18
    %v47 = vunpack.c.l.b16 %v19
    %v48 = vunpack.c.l.b16 %v20
    %v49 = vunpack.c.l.b16 %v21
    %v50 = vunpack.c.l.b16 %v22
    %v51 = vunpack.c.l.b16 %v23
    %v52 = vpack.c.b16 %v45, %v44
    %v53 = vpack.c.b16 %v47, %v46
    %v54 = vpack.c.b16 %v49, %v48
    %v55 = vpack.c.b16 %v51, %v50
    %v64 = vunpack.c.l.b16 %v24
    %v65 = vunpack.c.l.b16 %v25
    %v66 = vunpack.c.l.b16 %v26
    %v67 = vunpack.c.l.b16 %v27
    %v68 = vunpack.c.l.b16 %v28
    %v69 = vunpack.c.l.b16 %v29
    %v70 = vunpack.c.l.b16 %v30
    %v71 = vunpack.c.l.b16 %v31
    %v72 = vpack.c.b16 %v65, %v64
    %v73 = vpack.c.b16 %v67, %v66
    %v74 = vpack.c.b16 %v69, %v68
    %v75 = vpack.c.b16 %v71, %v70
    %vm80 = vcmask 523264
    %v82 = vsel %vm80, %v52, 0
    %v85 = vsel %vm80, %v53, 0
    %v88 = vsel %vm80, %v54, 0
    %v91 = vsel %vm80, %v55, 0
    %93 = vmatpush.bf16.msra.mxu0 0
    %94 = vmatpush.bf16.msra.mxu0 0
    %95 = vmatpush.bf16.msra.mxu0 0
    %96 = vmatpush.bf16.msra.mxu0 0
    %97 = vmatpush.bf16.msra.mxu0 %v75
    %98 = vmatpush.bf16.msra.mxu0 %v74
    %99 = vmatpush.bf16.msra.mxu0 %v73
    %100 = vmatpush.bf16.msra.mxu0 %v72
    %101 = vmatmul.bf16.gmra.mxu0 %v82
    %v102 = vpop.f32.mrf.mxu0
    %v103 = vadd.f32 %v34, %v102
    %v104 = vpop.f32.mrf.mxu0
    %v105 = vadd.f32 %v34, %v104
    %106 = vmatmul.bf16.gmra.mxu0 %v85
    %v107 = vpop.f32.mrf.mxu0
    %v108 = vadd.f32 %v34, %v107
    %v109 = vpop.f32.mrf.mxu0
    %v110 = vadd.f32 %v34, %v109
    %111 = vmatmul.bf16.gmra.mxu0 %v88
    %v112 = vpop.f32.mrf.mxu0
    %v113 = vadd.f32 %v34, %v112
    %v114 = vpop.f32.mrf.mxu0
    %v115 = vadd.f32 %v34, %v114
    %116 = vmatmul.bf16.gmra.mxu0 %v91
    %v117 = vpop.f32.mrf.mxu0
    %v118 = vadd.f32 %v34, %v117
    %v119 = vpop.f32.mrf.mxu0
    %v120 = vadd.f32 %v34, %v119
    %121 = vdwg.mxu0
    %vm122 = vcmask 130048
    %123 = vst.msk [vmem:[#allocation2] sm:$0xff] %vm122, %v103
    %124 = vst.msk [vmem:[#allocation2 + $0x8] sm:$0xff] %vm122, %v105
    %125 = vst.msk [vmem:[#allocation2 + $0x10] sm:$0xff] %vm122, %v108
    %126 = vst.msk [vmem:[#allocation2 + $0x18] sm:$0xff] %vm122, %v110
    %127 = vst.msk [vmem:[#allocation2 + $0x20] sm:$0xff] %vm122, %v113
    %128 = vst.msk [vmem:[#allocation2 + $0x28] sm:$0xff] %vm122, %v115
    %129 = vst.msk [vmem:[#allocation2 + $0x30] sm:$0xff] %vm122, %v118
    %130 = vst.msk [vmem:[#allocation2 + $0x38] sm:$0xff] %vm122, %v120
    // Predicated region
    $region14: #{forward.121} parent=1 // pred_check
      _
    $region15: #{forward.121} parent=1 // pred_check_branch
      %132 = sbr.rel (0) target = $region17
    $region16: #{forward.121} parent=1 // pred_region
      %134 = vsyncadd [#allocation3], 0
      %s135 = sshll.u32 [#allocation2], 4
      %s136 = int_to_ptr.vmem [resolvable:$true] %s135
      %s137 = sshll.u32 %s3, 4
      %s138 = int_to_ptr.hbm [resolvable:$true] %s137
      %143 = dma.vmem_to_hbm [thread:$0]  %s136, 1024, %s138, [#allocation3], 128, 128, 8
    $region17: #{forward.121} parent=1 // pred_fallthru
      _
    // Predicated region
    $region18: #{forward.121} parent=1 // pred_check
      _
    $region19: #{forward.121} parent=1 // pred_check_branch
      %145 = sbr.rel (0) target = $region21
    $region20: #{forward.121} parent=1 // pred_region
      %147 = dma.done [#allocation3], 1024
    $region21: #{forward.121} parent=1 // pred_fallthru
      _
    %148 = vsyncpa [#allocation3], 1

</llo_original>
